<compile_context>
chip_gen: v7x
topology: tpu7x:2x2x1
jax: 0.10.0
libtpu: 0.0.40
codegen_flags: <defaults>
</compile_context>

<pallas_src>
import functools

import numpy as np

import jax
import jax.numpy as jnp
from jax.experimental import pallas as pl
from jax.experimental.pallas import tpu as pltpu

EPS = 1e-5      # torch.nn.InstanceNorm2d default
LANE = 128      # TPU lane width

_PAD_MODE = {"reflect": "reflect", "zero": "constant", "zeros": "constant",
             "replicate": "edge"}


def _round_up(n, m):
    return ((n + m - 1) // m) * m


def _reflect(j, L):
    """torch-style reflection (edge not repeated) for a single static index."""
    if j < 0:
        j = -j
    if j >= L:
        j = 2 * L - 2 - j
    assert 0 <= j < L
    return j


# ---------------------------------------------------------------------------
# Device / pipeline capability helpers
# ---------------------------------------------------------------------------
@functools.lru_cache(maxsize=None)
def _vmem_limit_bytes():
    """Scoped VMEM limit: ~75% of physical (96 MiB on v5e/v6e, 48 MiB on v7x)."""
    phys = 128 * 1024 * 1024
    try:
        info = pltpu.get_tpu_info()
        for attr in ("vmem_capacity_bytes", "vmem_bytes", "vmem_size_bytes"):
            v = getattr(info, attr, None)
            if v:
                phys = int(v)
                break
    except Exception:
        pass
    return max(int(phys * 3 // 4), 32 * 1024 * 1024)


_BUFFERED1_OK = None


def _buffered1_supported():
    """Probe once whether single-buffered BlockSpecs lower on this backend."""
    global _BUFFERED1_OK
    if _BUFFERED1_OK is None:
        try:
            def _copy(x_ref, o_ref):
                o_ref[...] = x_ref[...]

            spec = pl.BlockSpec((8, 128), lambda i: (0, 0),
                                pipeline_mode=pl.Buffered(buffer_count=1))
            out = pl.pallas_call(
                _copy,
                out_shape=jax.ShapeDtypeStruct((8, 128), jnp.float32),
                grid=(1,),
                in_specs=[spec],
                out_specs=pl.BlockSpec((8, 128), lambda i: (0, 0)),
            )(jnp.zeros((8, 128), jnp.float32))
            jax.block_until_ready(out)
            _BUFFERED1_OK = True
        except Exception:
            _BUFFERED1_OK = False
    return _BUFFERED1_OK


def _const_spec(block_shape, index_map):
    """BlockSpec for grid-invariant operands (weights / bias): single-buffered
    when supported so they don't burn a second pipeline buffer of VMEM."""
    if _buffered1_supported():
        return pl.BlockSpec(block_shape, index_map,
                            pipeline_mode=pl.Buffered(buffer_count=1))
    return pl.BlockSpec(block_shape, index_map)


def _pick_tile_rows(ho, wo, crow, cout_p, k_eff):
    """Largest row-tile (divisor of ho) whose per-step buffers fit the budget."""
    budget = _vmem_limit_bytes() // 2                 # headroom for pipeline/sems
    wbuf = 1 if _buffered1_supported() else 2
    fixed = wbuf * k_eff * crow * cout_p * 2 + 2 * (k_eff - 1) * wo * crow * 2
    per_row = wo * (2 * 2 * crow        # x tile (bf16, double-buffered)
                    + 2 * 2 * cout_p    # out tile (bf16, double-buffered)
                    + 2 * 4 * cout_p)   # f32 accumulator / temporaries
    budget_rows = max((budget - fixed) // per_row, 1)
    cap = int(min(budget_rows, max(ho // 2, 8)))      # >=2 tiles for larger maps
    trh = 1
    for d in range(1, ho + 1):
        if ho % d == 0 and d <= cap:
            trh = d
    # TODO(synk): ragged last tile instead of divisor-only tiling for prime ho.
    return trh, ho // trh


# ---------------------------------------------------------------------------
# Pallas kernels
# ---------------------------------------------------------------------------
def _conv_pass_kernel(x_ref, w_ref, *rest, k_eff, wo, p, use_norm, act):
    """Per (sample, row-tile) grid step:
         y(p, Cout) = sum_dy  X[dy*wo : dy*wo + p, :] @ W[dy]
       The tap sum stays in registers / the MXU result buffer (no VMEM scratch).
       use_norm:  store raw conv tile (bf16) + per-tile [sum, sum_sq] partials.
       else:      fuse bias + activation and store the final tile."""
    if use_norm:
        out_ref, stats_ref = rest
        b_ref = None
    else:
        b_ref, out_ref = rest

    y = jnp.dot(x_ref[pl.ds(0, p), :], w_ref[0],
                preferred_element_type=jnp.float32)
    for dy in range(1, k_eff):
        # dy*wo is static and a multiple of 8 (wo % 8 == 0): aligned row window.
        y = y + jnp.dot(x_ref[pl.ds(dy * wo, p), :], w_ref[dy],
                        preferred_element_type=jnp.float32)

    if use_norm:
        out_ref[...] = y.astype(out_ref.dtype)
        s1 = jnp.sum(y, axis=0, keepdims=True)
        s2 = jnp.sum(y * y, axis=0, keepdims=True)
        stats_ref[...] = jnp.concatenate([s1, s2], axis=0)
    else:
        y = y + b_ref[...]
        if act == "relu":
            y = jnp.maximum(y, 0.0)
        elif act == "tanh":
            y = jnp.tanh(y)
        out_ref[...] = y.astype(out_ref.dtype)


def _norm_act_kernel(y_ref, sc_ref, sh_ref, *rest, act, has_skip):
    """Apply per-sample InstanceNorm scale+shift (+ residual) + nonlinearity."""
    if has_skip:
        skip_ref, out_ref = rest
    else:
        (out_ref,) = rest
        skip_ref = None

    y = y_ref[...].astype(jnp.float32) * sc_ref[...] + sh_ref[...]
    if has_skip:
        y = y + skip_ref[...].astype(jnp.float32)
    if act == "relu":
        y = jnp.maximum(y, 0.0)
    elif act == "tanh":
        y = jnp.tanh(y)
    out_ref[...] = y.astype(out_ref.dtype)


# ---------------------------------------------------------------------------
# Host glue (pure index plumbing)
# ---------------------------------------------------------------------------
def _spatial_pad(x, pad, mode):
    if pad == 0:
        return x
    return jnp.pad(x, ((0, 0), (pad, pad), (pad, pad), (0, 0)),
                   mode=_PAD_MODE[mode])


def _nearest_upsample2(x):
    # Only used by the pure-JAX reference and the non-reflect fallback path;
    # the main path fuses the upsample into the conv input gather.
    return jnp.repeat(jnp.repeat(x, 2, axis=1), 2, axis=2)


# ---------------------------------------------------------------------------
# One Conv2dBlock (conv + instance-norm + nonlinearity) via pallas_call
# ---------------------------------------------------------------------------
def conv_block(x, layer, *, padding_mode, use_norm=True, act="relu",
               skip=None, upsample=False):
    """x: (N, H, W, C >= cin) activation (extra lane-pad channels ignored).
    skip: optional (N, Ho, Wo, cout_p) residual added after the norm.
    upsample: fuse a nearest x2 upsample into the conv input gather.
    Returns (N, Ho, Wo, cout_p) bf16; real channels are layer['cout']."""
    n, h, w = x.shape[:3]
    k, stride, pad, cin = layer["k"], layer["stride"], layer["pad"], layer["cin"]
    k_eff = layer["k_eff"]
    crow, cout_p = layer["w"].shape[1], layer["w"].shape[2]

    xr = x[..., :cin].astype(jnp.bfloat16)

    # ---- source tensor + static (row, col) maps (pad / upsample / s2d fused) --
    if stride == 2:
        assert not upsample and h % 2 == 0 and w % 2 == 0
        xp = _spatial_pad(xr, pad, padding_mode)
        # space-to-depth: 4 phases on channels -> stride-1 2x2 conv.
        src = jnp.concatenate([xp[:, py::2, px::2, :]
                               for py in (0, 1) for px in (0, 1)], axis=-1)
        ho, wo, cb = h // 2, w // 2, 4 * cin
        row_map = col_map = (lambda i: i)
    elif padding_mode == "reflect":
        up = 2 if upsample else 1
        src, cb = xr, cin
        ho, wo = up * h, up * w
        row_map = lambda i: _reflect(i - pad, up * h) // up
        col_map = lambda j: _reflect(j - pad, up * w) // up
    else:
        if upsample:
            xr = _nearest_upsample2(xr)
        src = _spatial_pad(xr, pad, padding_mode)
        ho, wo = src.shape[1] - k + 1, src.shape[2] - k + 1
        cb = cin
        row_map = col_map = (lambda i: i)

    # TODO(synk): pad W on the host when wo % 8 != 0 (odd resolutions) so the
    # in-kernel shifted row windows stay sublane aligned.
    assert wo % 8 == 0, f"wo={wo} must be a multiple of 8"

    trh, n_tiles = _pick_tile_rows(ho, wo, crow, cout_p, k_eff)
    rows_in = trh + k_eff - 1
    p_tile = trh * wo
    hs, ws = src.shape[1], src.shape[2]

    # ---- one fused gather: pad + (upsample) + dx unroll + halo'd row tiles ----
    h_idx = np.array([[row_map(t * trh + r) for r in range(rows_in)]
                      for t in range(n_tiles)], dtype=np.int64)
    w_idx = np.array([[col_map(xo + dx) for dx in range(k_eff)]
                      for xo in range(wo)], dtype=np.int64)
    flat_idx = (h_idx[:, :, None, None] * ws + w_idx[None, None, :, :]).reshape(-1)
    slab = jnp.take(src.reshape(n, hs * ws, cb),
                    jnp.asarray(flat_idx, jnp.int32), axis=1)
    slab = slab.reshape(n, n_tiles, rows_in * wo, k_eff * cb)
    if crow > k_eff * cb:
        slab = jnp.pad(slab, ((0, 0), (0, 0), (0, 0), (0, crow - k_eff * cb)))

    # ---- block specs (lane-dense, both grid axes parallel) --------------------
    x_spec = pl.BlockSpec((pl.Squeezed(), pl.Squeezed(), rows_in * wo, crow),
                          lambda i, j: (i, j, 0, 0))
    w_spec = _const_spec((k_eff, crow, cout_p), lambda i, j: (0, 0, 0))
    y_spec = pl.BlockSpec((pl.Squeezed(), pl.Squeezed(), p_tile, cout_p),
                          lambda i, j: (i, j, 0, 0))
    cparams = pltpu.CompilerParams(
        dimension_semantics=("parallel", "parallel"),
        vmem_limit_bytes=_vmem_limit_bytes())

    kern = functools.partial(_conv_pass_kernel, k_eff=k_eff, wo=wo, p=p_tile,
                             use_norm=use_norm, act=act)

    if use_norm:
        # ---- pass 1: conv taps on the MXU + per-tile IN partial sums ---------
        y_tiles, stats = pl.pallas_call(
            kern,
            out_shape=(jax.ShapeDtypeStruct((n, n_tiles, p_tile, cout_p),
                                            jnp.bfloat16),
                       jax.ShapeDtypeStruct((n, n_tiles, 2, cout_p),
                                            jnp.float32)),
            grid=(n, n_tiles),
            in_specs=[x_spec, w_spec],
            out_specs=(y_spec,
                       pl.BlockSpec((pl.Squeezed(), pl.Squeezed(), 2, cout_p),
                                    lambda i, j: (i, j, 0, 0))),
            compiler_params=cparams,
        )(slab, layer["w"])

        # ---- tiny host reduction: exact full-extent InstanceNorm statistics --
        # TODO(synk): Welford / mean-subtracted second pass at production scale
        # to avoid E[y^2]-mean^2 cancellation in f32.
        tot = jnp.sum(stats, axis=1)                       # (n, 2, cout_p)
        cnt = float(ho * wo)
        mean = tot[:, 0] / cnt
        var = jnp.maximum(tot[:, 1] / cnt - mean * mean, 0.0)
        scale = layer["g"] * jax.lax.rsqrt(var + EPS)      # (n, cout_p)
        shift = layer["be"] - mean * scale
        scale = scale[:, None, :].astype(jnp.float32)      # (n, 1, cout_p)
        shift = shift[:, None, :].astype(jnp.float32)

        # ---- pass 2: scale+shift (+ residual) + activation, same tiling ------
        ss_spec = pl.BlockSpec((pl.Squeezed(), 1, cout_p), lambda i, j: (i, 0, 0))
        in2 = [y_tiles, scale, shift]
        specs2 = [y_spec, ss_spec, ss_spec]
        has_skip = skip is not None
        if has_skip:
            in2.append(skip.astype(jnp.bfloat16)
                       .reshape(n, n_tiles, p_tile, cout_p))
            specs2.append(y_spec)
        out = pl.pallas_call(
            functools.partial(_norm_act_kernel, act=act, has_skip=has_skip),
            out_shape=jax.ShapeDtypeStruct((n, n_tiles, p_tile, cout_p),
                                           jnp.bfloat16),
            grid=(n, n_tiles),
            in_specs=specs2,
            out_specs=y_spec,
            compiler_params=cparams,
        )(*in2)
    else:
        assert skip is None
        out = pl.pallas_call(
            kern,
            out_shape=jax.ShapeDtypeStruct((n, n_tiles, p_tile, cout_p),
                                           jnp.bfloat16),
            grid=(n, n_tiles),
            in_specs=[x_spec, w_spec,
                      _const_spec((1, cout_p), lambda i, j: (0, 0))],
            out_specs=y_spec,
            compiler_params=cparams,
        )(slab, layer["w"], layer["b"])

    return out.reshape(n, ho, wo, cout_p)


# ---------------------------------------------------------------------------
# Parameters (deterministic synthetic init, kernel-ready padded layout)
# ---------------------------------------------------------------------------
def _init_layer(key, k, cin, cout, *, stride=1, scale=0.05):
    pad = (k - 1) // 2
    kw, kb = jax.random.split(key)
    w_raw = jax.random.normal(kw, (k, k, cin, cout), jnp.float32) * scale
    b = jax.random.normal(kb, (cout,), jnp.float32) * 0.01
    g = jnp.ones((cout,), jnp.float32)
    be = jnp.zeros((cout,), jnp.float32)
    cout_p = _round_up(cout, LANE)

    if stride == 2:
        # Rewrite the 3x3/stride-2 conv as a 2x2/stride-1 conv over the
        # 4-phase space-to-depth repack of the (reflect-padded) input.
        assert k == 3
        k_eff, cin_base = 2, 4 * cin
        we = jnp.zeros((2, 2, 4, cin, cout), jnp.float32)
        for bdy in range(2):
            for bdx in range(2):
                for py in range(2):
                    for px in range(2):
                        dy, dx = 2 * bdy + py, 2 * bdx + px
                        if dy < k and dx < k:
                            we = we.at[bdy, bdx, 2 * py + px].set(w_raw[dy, dx])
        we = we.reshape(k_eff, k_eff * cin_base, cout)
    else:
        k_eff, cin_base = k, cin
        we = w_raw.reshape(k, k * cin, cout)      # rows ordered (dx, cin) per dy

    crow = _round_up(k_eff * cin_base, LANE)
    we = jnp.pad(we, ((0, 0), (0, crow - k_eff * cin_base), (0, cout_p - cout)))
    return dict(
        k=k, k_eff=k_eff, stride=stride, pad=pad, cin=cin, cout=cout,
        w=we.astype(jnp.bfloat16),
        w_raw=w_raw,                               # kept only for the unit check
        b=jnp.pad(b, (0, cout_p - cout)).reshape(1, cout_p),
        g=jnp.pad(g, (0, cout_p - cout), constant_values=1.0).reshape(1, cout_p),
        be=jnp.pad(be, (0, cout_p - cout)).reshape(1, cout_p),
    )


def init_global_generator_params(key, *, num_input_channels, num_img_channels,
                                 num_filters, num_downsamples, num_res_blocks):
    n_keys = 1 + num_downsamples + 2 * num_res_blocks + num_downsamples + 1
    keys = list(jax.random.split(key, n_keys))
    params = {}
    params["head"] = _init_layer(keys.pop(0), 7, num_input_channels, num_filters)
    params["down"] = []
    for i in range(num_downsamples):
        ch = num_filters * 2 ** i
        params["down"].append(_init_layer(keys.pop(0), 3, ch, ch * 2, stride=2))
    ch = num_filters * 2 ** num_downsamples
    params["res"] = []
    for _ in range(num_res_blocks):
        params["res"].append((_init_layer(keys.pop(0), 3, ch, ch),
                              _init_layer(keys.pop(0), 3, ch, ch)))
    params["up"] = []
    for i in reversed(range(num_downsamples)):
        ch = num_filters * 2 ** i
        params["up"].append(_init_layer(keys.pop(0), 3, ch * 2, ch))
    params["tail"] = _init_layer(keys.pop(0), 7, num_filters, num_img_channels)
    return params


# ---------------------------------------------------------------------------
# Full forward (mirrors GlobalGenerator.forward)
# ---------------------------------------------------------------------------
def global_generator_forward(x_nchw, params, cfg):
    pm = cfg["padding_mode"]
    x = jnp.transpose(x_nchw, (0, 2, 3, 1)).astype(jnp.bfloat16)   # NCHW -> NHWC

    # initial 7x7 conv block
    x = conv_block(x, params["head"], padding_mode=pm)
    # downsampling conv blocks (stride 2, phase-decomposed)
    for layer in params["down"]:
        x = conv_block(x, layer, padding_mode=pm)
    # residual blocks: conv-IN-relu -> conv-IN -> + skip
    for p1, p2 in params["res"]:
        hcur = conv_block(x, p1, padding_mode=pm)
        x = conv_block(hcur, p2, padding_mode=pm, act="none", skip=x)
    # upsampling: nearest x2 fused into the conv input gather
    for layer in params["up"]:
        x = conv_block(x, layer, padding_mode=pm, upsample=True)
    # final 7x7 conv, no norm, tanh
    x = conv_block(x, params["tail"], padding_mode=pm, use_norm=False, act="tanh")

    x = x[..., :params["tail"]["cout"]].astype(jnp.float32)
    return jnp.transpose(x, (0, 3, 1, 2))                          # NHWC -> NCHW


# ---------------------------------------------------------------------------
# Pure-JAX reference for a single Conv2dBlock (unit checks only)
# ---------------------------------------------------------------------------
def _ref_conv_block(x, layer, *, padding_mode, use_norm, act, skip=None):
    x = x[..., :layer["cin"]].astype(jnp.float32)
    xp = _spatial_pad(x, layer["pad"], padding_mode)
    y = jax.lax.conv_general_dilated(
        xp, layer["w_raw"], (layer["stride"], layer["stride"]), "VALID",
        dimension_numbers=("NHWC", "HWIO", "NHWC"))
    cout = layer["cout"]
    if use_norm:
        mean = jnp.mean(y, axis=(1, 2), keepdims=True)
        var = jnp.mean(jnp.square(y - mean), axis=(1, 2), keepdims=True)
        y = (y - mean) * jax.lax.rsqrt(var + EPS)
        y = y * layer["g"][0, :cout] + layer["be"][0, :cout]
    else:
        y = y + layer["b"][0, :cout]
    if skip is not None:
        y = y + skip
    if act == "relu":
        y = jnp.maximum(y, 0.0)
    elif act == "tanh":
        y = jnp.tanh(y)
    return y


# ---------------------------------------------------------------------------
if __name__ == "__main__":
    cfg = dict(
        num_input_channels=4,    # segmentation labels
        num_img_channels=3,      # RGB output
        num_filters=8,
        num_downsamples=2,
        num_res_blocks=2,
        padding_mode="reflect",
    )

    key = jax.random.PRNGKey(0)
    k_x, k_p, k_s2, k_up, k_res = jax.random.split(key, 5)

    # 32x32 keeps every feature map's width a multiple of 8 (sublane aligned).
    H = W = 32
    x = jax.random.normal(k_x, (2, cfg["num_input_channels"], H, W), jnp.float32)
    params = init_global_generator_params(
        k_p,
        num_input_channels=cfg["num_input_channels"],
        num_img_channels=cfg["num_img_channels"],
        num_filters=cfg["num_filters"],
        num_downsamples=cfg["num_downsamples"],
        num_res_blocks=cfg["num_res_blocks"],
    )
    pm = cfg["padding_mode"]

    def _close(a, b):
        return jnp.allclose(a.astype(jnp.float32), b, atol=5e-2, rtol=5e-2)

    # --- unit check 1: head 7x7 block (fused reflect pad, tiled two-pass IN) ---
    x_nhwc = jnp.transpose(x, (0, 2, 3, 1))
    got = conv_block(x_nhwc, params["head"], padding_mode=pm)
    want = _ref_conv_block(x_nhwc, params["head"], padding_mode=pm,
                           use_norm=True, act="relu")
    assert _close(got[..., :params["head"]["cout"]], want), "head block mismatch"

    # --- unit check 2: stride-2 block (space-to-depth 2x2 rewrite) -------------
    lay = params["down"][0]
    x_s2 = jax.random.normal(k_s2, (2, H, W, lay["cin"]), jnp.float32)
    got = conv_block(x_s2, lay, padding_mode=pm)
    want = _ref_conv_block(x_s2, lay, padding_mode=pm, use_norm=True, act="relu")
    assert _close(got[..., :lay["cout"]], want), "stride-2 block mismatch"

    # --- unit check 3: up block with the nearest x2 upsample fused -------------
    lay = params["up"][0]
    x_up = jax.random.normal(k_up, (2, 8, 8, lay["cin"]), jnp.float32)
    got = conv_block(x_up, lay, padding_mode=pm, upsample=True)
    want = _ref_conv_block(_nearest_upsample2(x_up), lay, padding_mode=pm,
                           use_norm=True, act="relu")
    assert _close(got[..., :lay["cout"]], want), "fused-upsample block mismatch"

    # --- unit check 4: residual second conv (IN, no act, skip add) -------------
    lay = params["res"][0][1]
    cp = lay["w"].shape[2]
    x_res = jax.random.normal(k_res, (2, 8, 8, cp), jnp.float32)
    got = conv_block(x_res, lay, padding_mode=pm, act="none", skip=x_res)
    want = _ref_conv_block(x_res, lay, padding_mode=pm, use_norm=True,
                           act="none", skip=x_res[..., :lay["cout"]])
    assert _close(got[..., :lay["cout"]], want), "residual block mismatch"

    # --- full forward ----------------------------------------------------------
    out = global_generator_forward(x, params, cfg)
    out = jax.block_until_ready(out)

    assert out.shape == (2, cfg["num_img_channels"], H, W), out.shape
    assert bool(jnp.all(jnp.isfinite(out)))
    assert bool(jnp.all(jnp.abs(out) <= 1.0 + 1e-6))   # tanh output range
    print("KERNEL_OK")
</pallas_src>

<mosaic_0001>
module attributes {stable_mosaic.version = 11 : i64} {
  func.func @_copy(%arg0: i32, %arg1: memref<8x128xf32, #tpu.memory_space<vmem>>, %arg2: memref<8x128xf32, #tpu.memory_space<vmem>>) attributes {dimension_semantics = [#tpu.dimension_semantics<arbitrary>], iteration_bounds = array<i64: 1>, scalar_prefetch = 0 : i64, scratch_operands = 0 : i64, tpu.core_type = #tpu.core_type<tc>, window_params = [{pipeline_mode = #tpu.pipeline_mode<synchronous>, transform_indices = @transform_0, window_bounds = array<i64: 8, 128>}, {pipeline_mode = #tpu.pipeline_mode<synchronous>, transform_indices = @transform_1, window_bounds = array<i64: 8, 128>}]} {
    %c0 = arith.constant 0 : index
    %c0_0 = arith.constant 0 : index
    %0 = vector.load %arg1[%c0, %c0_0] : memref<8x128xf32, #tpu.memory_space<vmem>>, vector<8x128xf32>
    %c0_1 = arith.constant 0 : index
    %c0_2 = arith.constant 0 : index
    %1 = vector.load %arg2[%c0_1, %c0_2] : memref<8x128xf32, #tpu.memory_space<vmem>>, vector<8x128xf32>
    tpu.vector_store %arg2[%c0_1, %c0_2], %0 {strides = array<i32>} : memref<8x128xf32, #tpu.memory_space<vmem>>, vector<8x128xf32>,
    return
  }
  func.func @transform_0(%arg0: i32) -> (i32, i32) {
    %c0_i32 = arith.constant 0 : i32
    %c0_i32_0 = arith.constant 0 : i32
    %c0_i32_1 = arith.constant 0 : i32
    return %c0_i32, %c0_i32_0 : i32, i32
  }
  func.func @transform_1(%arg0: i32) -> (i32, i32) {
    %c0_i32 = arith.constant 0 : i32
    %c0_i32_0 = arith.constant 0 : i32
    %c0_i32_1 = arith.constant 0 : i32
    return %c0_i32, %c0_i32_0 : i32, i32
  }
}

module attributes {stable_mosaic.version = 11 : i64} {
  func.func @_conv_pass_kernel(%arg0: i32, %arg1: i32, %arg2: memref<1x1x704x128xbf16, #tpu.memory_space<vmem>>, %arg3: memref<7x128x128xbf16, #tpu.memory_space<vmem>>, %arg4: memref<1x1x512x128xbf16, #tpu.memory_space<vmem>>, %arg5: memref<1x1x2x128xf32, #tpu.memory_space<vmem>>) attributes {dimension_semantics = [#tpu.dimension_semantics<parallel>, #tpu.dimension_semantics<parallel>], iteration_bounds = array<i64: 2, 2>, scalar_prefetch = 0 : i64, scratch_operands = 0 : i64, tpu.core_type = #tpu.core_type<tc>, window_params = [{transform_indices = @transform_0, window_bounds = array<i64: 1, 1, 704, 128>}, {pipeline_mode = #tpu.pipeline_mode<synchronous>, transform_indices = @transform_1, window_bounds = array<i64: 7, 128, 128>}, {transform_indices = @transform_2, window_bounds = array<i64: 1, 1, 512, 128>}, {transform_indices = @transform_3, window_bounds = array<i64: 1, 1, 2, 128>}]} {
    %c0 = arith.constant 0 : index
    %c0_0 = arith.constant 0 : index
    %c0_1 = arith.constant 0 : index
    %c0_2 = arith.constant 0 : index
    %0 = vector.load %arg2[%c0, %c0_0, %c0_1, %c0_2] : memref<1x1x704x128xbf16, #tpu.memory_space<vmem>>, vector<1x1x512x128xbf16>
    %1 = vector.shape_cast %0 : vector<1x1x512x128xbf16> to vector<512x128xbf16>
    %c0_3 = arith.constant 0 : index
    %c0_4 = arith.constant 0 : index
    %c0_5 = arith.constant 0 : index
    %2 = vector.load %arg3[%c0_3, %c0_4, %c0_5] : memref<7x128x128xbf16, #tpu.memory_space<vmem>>, vector<1x128x128xbf16>
    %3 = vector.shape_cast %2 : vector<1x128x128xbf16> to vector<128x128xbf16>
    %cst = arith.constant dense<0.000000e+00> : vector<512x128xf32>
    %4 = tpu.matmul %1, %3, %cst {dimension_numbers = #tpu.dot_dimension_numbers<[1], [0], [0], [1], [0, 0, 1, 1], [], []>} : vector<512x128xbf16>, vector<128x128xbf16>, vector<512x128xf32> -> vector<512x128xf32>
    %c0_6 = arith.constant 0 : index
    %c0_7 = arith.constant 0 : index
    %c32 = arith.constant 32 : index
    %c0_8 = arith.constant 0 : index
    %5 = vector.load %arg2[%c0_6, %c0_7, %c32, %c0_8] : memref<1x1x704x128xbf16, #tpu.memory_space<vmem>>, vector<1x1x512x128xbf16>
    %6 = vector.shape_cast %5 : vector<1x1x512x128xbf16> to vector<512x128xbf16>
    %c1 = arith.constant 1 : index
    %c0_9 = arith.constant 0 : index
    %c0_10 = arith.constant 0 : index
    %7 = vector.load %arg3[%c1, %c0_9, %c0_10] : memref<7x128x128xbf16, #tpu.memory_space<vmem>>, vector<1x128x128xbf16>
    %8 = vector.shape_cast %7 : vector<1x128x128xbf16> to vector<128x128xbf16>
    %cst_11 = arith.constant dense<0.000000e+00> : vector<512x128xf32>
    %9 = tpu.matmul %6, %8, %cst_11 {dimension_numbers = #tpu.dot_dimension_numbers<[1], [0], [0], [1], [0, 0, 1, 1], [], []>} : vector<512x128xbf16>, vector<128x128xbf16>, vector<512x128xf32> -> vector<512x128xf32>
    %10 = arith.addf %4, %9 : vector<512x128xf32>
    %c0_12 = arith.constant 0 : index
    %c0_13 = arith.constant 0 : index
    %c64 = arith.constant 64 : index
    %c0_14 = arith.constant 0 : index
    %11 = vector.load %arg2[%c0_12, %c0_13, %c64, %c0_14] : memref<1x1x704x128xbf16, #tpu.memory_space<vmem>>, vector<1x1x512x128xbf16>
    %12 = vector.shape_cast %11 : vector<1x1x512x128xbf16> to vector<512x128xbf16>
    %c2 = arith.constant 2 : index
    %c0_15 = arith.constant 0 : index
    %c0_16 = arith.constant 0 : index
    %13 = vector.load %arg3[%c2, %c0_15, %c0_16] : memref<7x128x128xbf16, #tpu.memory_space<vmem>>, vector<1x128x128xbf16>
    %14 = vector.shape_cast %13 : vector<1x128x128xbf16> to vector<128x128xbf16>
    %cst_17 = arith.constant dense<0.000000e+00> : vector<512x128xf32>
    %15 = tpu.matmul %12, %14, %cst_17 {dimension_numbers = #tpu.dot_dimension_numbers<[1], [0], [0], [1], [0, 0, 1, 1], [], []>} : vector<512x128xbf16>, vector<128x128xbf16>, vector<512x128xf32> -> vector<512x128xf32>
    %16 = arith.addf %10, %15 : vector<512x128xf32>
    %c0_18 = arith.constant 0 : index
    %c0_19 = arith.constant 0 : index
    %c96 = arith.constant 96 : index
    %c0_20 = arith.constant 0 : index
    %17 = vector.load %arg2[%c0_18, %c0_19, %c96, %c0_20] : memref<1x1x704x128xbf16, #tpu.memory_space<vmem>>, vector<1x1x512x128xbf16>
    %18 = vector.shape_cast %17 : vector<1x1x512x128xbf16> to vector<512x128xbf16>
    %c3 = arith.constant 3 : index
    %c0_21 = arith.constant 0 : index
    %c0_22 = arith.constant 0 : index
    %19 = vector.load %arg3[%c3, %c0_21, %c0_22] : memref<7x128x128xbf16, #tpu.memory_space<vmem>>, vector<1x128x128xbf16>
    %20 = vector.shape_cast %19 : vector<1x128x128xbf16> to vector<128x128xbf16>
    %cst_23 = arith.constant dense<0.000000e+00> : vector<512x128xf32>
    %21 = tpu.matmul %18, %20, %cst_23 {dimension_numbers = #tpu.dot_dimension_numbers<[1], [0], [0], [1], [0, 0, 1, 1], [], []>} : vector<512x128xbf16>, vector<128x128xbf16>, vector<512x128xf32> -> vector<512x128xf32>
    %22 = arith.addf %16, %21 : vector<512x128xf32>
    %c0_24 = arith.constant 0 : index
    %c0_25 = arith.constant 0 : index
    %c128 = arith.constant 128 : index
    %c0_26 = arith.constant 0 : index
    %23 = vector.load %arg2[%c0_24, %c0_25, %c128, %c0_26] : memref<1x1x704x128xbf16, #tpu.memory_space<vmem>>, vector<1x1x512x128xbf16>
    %24 = vector.shape_cast %23 : vector<1x1x512x128xbf16> to vector<512x128xbf16>
    %c4 = arith.constant 4 : index
    %c0_27 = arith.constant 0 : index
    %c0_28 = arith.constant 0 : index
    %25 = vector.load %arg3[%c4, %c0_27, %c0_28] : memref<7x128x128xbf16, #tpu.memory_space<vmem>>, vector<1x128x128xbf16>
    %26 = vector.shape_cast %25 : vector<1x128x128xbf16> to vector<128x128xbf16>
    %cst_29 = arith.constant dense<0.000000e+00> : vector<512x128xf32>
    %27 = tpu.matmul %24, %26, %cst_29 {dimension_numbers = #tpu.dot_dimension_numbers<[1], [0], [0], [1], [0, 0, 1, 1], [], []>} : vector<512x128xbf16>, vector<128x128xbf16>, vector<512x128xf32> -> vector<512x128xf32>
    %28 = arith.addf %22, %27 : vector<512x128xf32>
    %c0_30 = arith.constant 0 : index
    %c0_31 = arith.constant 0 : index
    %c160 = arith.constant 160 : index
    %c0_32 = arith.constant 0 : index
    %29 = vector.load %arg2[%c0_30, %c0_31, %c160, %c0_32] : memref<1x1x704x128xbf16, #tpu.memory_space<vmem>>, vector<1x1x512x128xbf16>
    %30 = vector.shape_cast %29 : vector<1x1x512x128xbf16> to vector<512x128xbf16>
    %c5 = arith.constant 5 : index
    %c0_33 = arith.constant 0 : index
    %c0_34 = arith.constant 0 : index
    %31 = vector.load %arg3[%c5, %c0_33, %c0_34] : memref<7x128x128xbf16, #tpu.memory_space<vmem>>, vector<1x128x128xbf16>
    %32 = vector.shape_cast %31 : vector<1x128x128xbf16> to vector<128x128xbf16>
    %cst_35 = arith.constant dense<0.000000e+00> : vector<512x128xf32>
    %33 = tpu.matmul %30, %32, %cst_35 {dimension_numbers = #tpu.dot_dimension_numbers<[1], [0], [0], [1], [0, 0, 1, 1], [], []>} : vector<512x128xbf16>, vector<128x128xbf16>, vector<512x128xf32> -> vector<512x128xf32>
    %34 = arith.addf %28, %33 : vector<512x128xf32>
    %c0_36 = arith.constant 0 : index
    %c0_37 = arith.constant 0 : index
    %c192 = arith.constant 192 : index
    %c0_38 = arith.constant 0 : index
    %35 = vector.load %arg2[%c0_36, %c0_37, %c192, %c0_38] : memref<1x1x704x128xbf16, #tpu.memory_space<vmem>>, vector<1x1x512x128xbf16>
    %36 = vector.shape_cast %35 : vector<1x1x512x128xbf16> to vector<512x128xbf16>
    %c6 = arith.constant 6 : index
    %c0_39 = arith.constant 0 : index
    %c0_40 = arith.constant 0 : index
    %37 = vector.load %arg3[%c6, %c0_39, %c0_40] : memref<7x128x128xbf16, #tpu.memory_space<vmem>>, vector<1x128x128xbf16>
    %38 = vector.shape_cast %37 : vector<1x128x128xbf16> to vector<128x128xbf16>
    %cst_41 = arith.constant dense<0.000000e+00> : vector<512x128xf32>
    %39 = tpu.matmul %36, %38, %cst_41 {dimension_numbers = #tpu.dot_dimension_numbers<[1], [0], [0], [1], [0, 0, 1, 1], [], []>} : vector<512x128xbf16>, vector<128x128xbf16>, vector<512x128xf32> -> vector<512x128xf32>
    %40 = arith.addf %34, %39 : vector<512x128xf32>
    %41 = arith.truncf %40 : vector<512x128xf32> to vector<512x128xbf16>
    %c0_42 = arith.constant 0 : index
    %c0_43 = arith.constant 0 : index
    %c0_44 = arith.constant 0 : index
    %c0_45 = arith.constant 0 : index
    %42 = vector.load %arg4[%c0_42, %c0_43, %c0_44, %c0_45] : memref<1x1x512x128xbf16, #tpu.memory_space<vmem>>, vector<1x1x512x128xbf16>
    %43 = vector.shape_cast %42 : vector<1x1x512x128xbf16> to vector<512x128xbf16>
    %44 = vector.shape_cast %41 : vector<512x128xbf16> to vector<1x1x512x128xbf16>
    tpu.vector_store %arg4[%c0_42, %c0_43, %c0_44, %c0_45], %44 {strides = array<i32>} : memref<1x1x512x128xbf16, #tpu.memory_space<vmem>>, vector<1x1x512x128xbf16>,
    %cst_46 = arith.constant dense<0.000000e+00> : vector<128xf32>
    %45 = vector.multi_reduction <add>, %40, %cst_46 [0] : vector<512x128xf32> to vector<128xf32>
    %46 = vector.shape_cast %45 : vector<128xf32> to vector<1x128xf32>
    %47 = arith.mulf %40, %40 : vector<512x128xf32>
    %cst_47 = arith.constant dense<0.000000e+00> : vector<128xf32>
    %48 = vector.multi_reduction <add>, %47, %cst_47 [0] : vector<512x128xf32> to vector<128xf32>
    %49 = vector.shape_cast %48 : vector<128xf32> to vector<1x128xf32>
    %50 = tpu.concatenate %46, %49 in 0 : vector<1x128xf32>, vector<1x128xf32> -> vector<2x128xf32>
    %c0_48 = arith.constant 0 : index
    %c0_49 = arith.constant 0 : index
    %c0_50 = arith.constant 0 : index
    %c0_51 = arith.constant 0 : index
    %51 = vector.load %arg5[%c0_48, %c0_49, %c0_50, %c0_51] : memref<1x1x2x128xf32, #tpu.memory_space<vmem>>, vector<1x1x2x128xf32>
    %52 = vector.shape_cast %51 : vector<1x1x2x128xf32> to vector<2x128xf32>
    %53 = vector.shape_cast %50 : vector<2x128xf32> to vector<1x1x2x128xf32>
    tpu.vector_store %arg5[%c0_48, %c0_49, %c0_50, %c0_51], %53 {strides = array<i32>} : memref<1x1x2x128xf32, #tpu.memory_space<vmem>>, vector<1x1x2x128xf32>,
    return
  }
  func.func @transform_0(%arg0: i32, %arg1: i32) -> (i32, i32, i32, i32) {
    %c0_i32 = arith.constant 0 : i32
    %c0_i32_0 = arith.constant 0 : i32
    %c0_i32_1 = arith.constant 0 : i32
    return %arg0, %arg1, %c0_i32, %c0_i32_0 : i32, i32, i32, i32
  }
  func.func @transform_1(%arg0: i32, %arg1: i32) -> (i32, i32, i32) {
    %c0_i32 = arith.constant 0 : i32
    %c0_i32_0 = arith.constant 0 : i32
    %c0_i32_1 = arith.constant 0 : i32
    %c0_i32_2 = arith.constant 0 : i32
    return %c0_i32, %c0_i32_0, %c0_i32_1 : i32, i32, i32
  }
  func.func @transform_2(%arg0: i32, %arg1: i32) -> (i32, i32, i32, i32) {
    %c0_i32 = arith.constant 0 : i32
    %c0_i32_0 = arith.constant 0 : i32
    %c0_i32_1 = arith.constant 0 : i32
    return %arg0, %arg1, %c0_i32, %c0_i32_0 : i32, i32, i32, i32
  }
  func.func @transform_3(%arg0: i32, %arg1: i32) -> (i32, i32, i32, i32) {
    %c0_i32 = arith.constant 0 : i32
    %c0_i32_0 = arith.constant 0 : i32
    %c0_i32_1 = arith.constant 0 : i32
    return %arg0, %arg1, %c0_i32, %c0_i32_0 : i32, i32, i32, i32
  }
}

</mosaic_0001>

<llo_original>
// kernel: tpu_custom_call.1
$region0: #{tpu_custom_call.1}
  #allocation0 [shape = 'u32[]', space=smem, size = 0x4, offset = 0x4, fixed_abs, tag = 'smem constant byte address 0x4 - core index']
  #allocation1 [shape = 'u32[144,128]{1,0:T(1,128)}', space=vmem, size = 0x12000, scoped, tag = 'internal scratch']
  %s0 = inlined_call_operand.hbm [shape: f32[8,128], index: 0, kind: input, shape index: {}]
  %s1 = inlined_call_operand.hbm [shape: f32[8,128], index: 1, kind: output, shape index: {}]
  %s2 = sld [smem:[#allocation0]]
  $region18: #{tpu_custom_call.1} parent=0
    _
  %s4 = ssub.s32 1, %s2
  %s5 = scalar_select 0, %s4, %s2
  $region1: #{tpu_custom_call.1} parent=0
    #allocation2 [shape = 'u8[4096]{0}', space=vmem, size = 0x1000, scoped, tag = 'input window, operand 0, single buffered']
    #allocation3 [shape = 's32[1]{0}', space=sflag, size = 0x4, scoped, tag = 'scoped memory for tpu_custom_call.1']
    #allocation4 [shape = 's32[1]{0}', space=sflag, size = 0x4, scoped, tag = 'scoped memory for tpu_custom_call.1']
    #allocation5 [shape = 'u8[4096]{0}', space=vmem, size = 0x1000, scoped, tag = 'output window, operand 0, single buffered']
    %6 = vsyncpa [#allocation3], 0
    %7 = vsyncpa [#allocation4], 0
    // Predicated region
    $region2: #{tpu_custom_call.1} parent=1 // pred_check
      _
    $region3: #{tpu_custom_call.1} parent=1 // pred_check_branch
      %9 = sbr.rel (0) target = $region5
    $region4: #{tpu_custom_call.1} parent=1 // pred_region
      %s11 = ssub.s32 128, 128
      %12 = vsyncadd [#allocation3], %s11
      %s14 = sshll.u32 [#allocation2], 4
      %s15 = int_to_ptr.vmem [resolvable:$true] %s14
      %17 = dma.hbm_to_vmem [thread:$0]  %s0, 128, %s15, [#allocation3]
    $region5: #{tpu_custom_call.1} parent=1 // pred_fallthru
      _
    // Predicated region
    $region6: #{tpu_custom_call.1} parent=1 // pred_check
      _
    $region7: #{tpu_custom_call.1} parent=1 // pred_check_branch
      %19 = sbr.rel (0) target = $region9
    $region8: #{tpu_custom_call.1} parent=1 // pred_region
      %20 = dma.done [#allocation3], 128
    $region9: #{tpu_custom_call.1} parent=1 // pred_fallthru
      _
    %v21 = vld [vmem:[#allocation2] sm:$0xff]
    %22 = vst [vmem:[#allocation5] sm:$0xff] %v21
    // Predicated region
    $region10: #{tpu_custom_call.1} parent=1 // pred_check
      _
    $region11: #{tpu_custom_call.1} parent=1 // pred_check_branch
      %24 = sbr.rel (0) target = $region13
    $region12: #{tpu_custom_call.1} parent=1 // pred_region
      %s26 = ssub.s32 128, 128
      %27 = vsyncadd [#allocation4], %s26
      %s29 = sshll.u32 [#allocation5], 4
      %s30 = int_to_ptr.vmem [resolvable:$true] %s29
      %32 = dma.vmem_to_hbm [thread:$0]  %s30, 128, %s1, [#allocation4]
    $region13: #{tpu_custom_call.1} parent=1 // pred_fallthru
      _
    // Predicated region
    $region14: #{tpu_custom_call.1} parent=1 // pred_check
      _
    $region15: #{tpu_custom_call.1} parent=1 // pred_check_branch
      %34 = sbr.rel (0) target = $region17
    $region16: #{tpu_custom_call.1} parent=1 // pred_region
      %35 = dma.done [#allocation4], 128
    $region17: #{tpu_custom_call.1} parent=1 // pred_fallthru
      _
    %36 = vsyncpa [#allocation3], 1
    %37 = vsyncpa [#allocation4], 1

// kernel: tpu_custom_call.1
$region0: #{tpu_custom_call.1}
  #allocation0 [shape = 'u32[]', space=smem, size = 0x4, offset = 0x4, fixed_abs, tag = 'smem constant byte address 0x4 - core index']
  #allocation1 [shape = 'u32[144,128]{1,0:T(1,128)}', space=vmem, size = 0x12000, scoped, tag = 'internal scratch']
  %s0 = inlined_call_operand.hbm [shape: bf16[2,2,704,128], index: 0, kind: input, shape index: {}]
  %s1 = inlined_call_operand.hbm [shape: bf16[7,128,128], index: 1, kind: input, shape index: {}]
  %s2 = inlined_call_operand.hbm [shape: bf16[2,2,512,128], index: 2, kind: output, shape index: {0}]
  %s3 = inlined_call_operand.hbm [shape: f32[2,2,2,128], index: 3, kind: output, shape index: {1}]
  %4 = xla_tuple %s2, %s3
  %s5 = sld [smem:[#allocation0]]
  $region57: #{tpu_custom_call.1} parent=0
    _
  %s7 = ssub.s32 1, %s5
  %s8 = scalar_select 0, %s7, %s5
  $region1: #{tpu_custom_call.1} parent=0
    #allocation2 [shape = 'u8[360448]{0}', space=vmem, size = 0x58000, scoped, tag = 'input window, operand 0']
    #allocation3 [shape = 's32[2]{0}', space=sflag, size = 0x8, scoped, tag = 'scoped memory for tpu_custom_call.1']
    #allocation4 [shape = 's32[2]{0}', space=sflag, size = 0x8, scoped, tag = 'scoped memory for tpu_custom_call.1']
    #allocation5 [shape = 'u8[229376]{0}', space=vmem, size = 0x38000, scoped, tag = 'input window, operand 1, single buffered']
    #allocation6 [shape = 's32[1]{0}', space=sflag, size = 0x4, scoped, tag = 'scoped memory for tpu_custom_call.1']
    #allocation7 [shape = 'u8[262144]{0}', space=vmem, size = 0x40000, scoped, tag = 'output window, operand 0']
    #allocation8 [shape = 'u8[2048]{0}', space=vmem, size = 0x800, scoped, tag = 'output window, operand 1']
    #allocation9 [shape = 's32[2]{0}', space=sflag, size = 0x8, scoped, tag = 'scoped memory for tpu_custom_call.1']
    %9 = vsyncpa [#allocation3], 0
    %s10 = scalar_lea.sflag [#allocation3], 1
    %11 = vsyncpa %s10, 0
    %12 = vsyncpa [#allocation6], 0
    %13 = vsyncpa [#allocation4], 0
    %s14 = scalar_lea.sflag [#allocation4], 1
    %15 = vsyncpa %s14, 0
    %16 = vsyncpa [#allocation9], 0
    %s17 = scalar_lea.sflag [#allocation9], 1
    %18 = vsyncpa %s17, 0
    loop: start=0, step=1, limit=6
    $region2: #{tpu_custom_call.1} parent=1 // loop_pre_header
      _
    $region3: #{tpu_custom_call.1} parent=1 // loop_header
      %s20 = sphi 0, %s24
      %p21 = scmp.ge.s32.totalorder %s20, 6
      %s27 = sphi 0, %s39
      %s28 = sphi 0, %s35
      %s29 = sphi 0, %s27
      %s30 = sphi 0, %s28
      %s31 = sphi 0, %s29
      %s32 = sphi 0, %s30
      %s44 = sphi 0, %s46
      %s47 = sphi 0, %s44
      %s48 = sphi 0, %s47
      %s64 = sphi 0, %s48
      %s68 = sphi 0, %s68
      %s70 = sphi 0, %s68
      %s71 = sphi 0, %s70
      %s85 = sphi 0, %s71
      %s93 = sphi 0, %s95
      %s96 = sphi 0, %s93
      %s97 = sphi 0, %s96
      %s113 = sphi 0, %s97
      %s121 = sphi 0, %s123
      %s124 = sphi 0, %s121
      %s125 = sphi 0, %s124
      %s141 = sphi 0, %s125
    $region4: #{tpu_custom_call.1} parent=1 // loop_header_branch
      %23 = sbr.rel (%p21) target = $region8
    $region5: #{tpu_custom_call.1} parent=1 // loop_body
      %s25 = ssub.s32 %s20, 1
      %s26 = ssub.s32 %s20, 2
      %s33 = sadd.s32 1, %s28
      %p34 = scmp.ge.s32.totalorder %s33, 2
      %s35 = scalar_select %p34, 0, %s33
      %s36 = sadd.s32 1, %s27
      %s37 = scalar_select %p34, %s36, %s27
      %p38 = scmp.ge.s32.totalorder %s37, 2
      %s39 = scalar_select %p38, 0, %s37
      %s40 = ssub.s32 %s27, %s39
      %s41 = ssub.s32 %s28, %s35
      %s42 = sor.u32 %s40, %s41
      %p43 = scmp.eq.s32.totalorder %s42, 0
      %s45 = sadd.s32 %s44, 1
      %s46 = scalar_select %p43, %s44, %s45
      %p49 = pneg %p43
      %p50 = scmp.eq.s32.totalorder %s20, 3
      %p51 = por %p49, %p50
      %p52 = scmp.ne.s32.totalorder %s44, %s47
      %p53 = scmp.eq.s32.totalorder %s20, 0
      %p54 = por %p52, %p53
      %p55 = scmp.ne.s32.totalorder %s44, %s47
      %p56 = scmp.eq.s32.totalorder %s25, 3
      %p57 = por %p55, %p56
      %p58 = scmp.ne.s32.totalorder %s47, %s48
      %p59 = scmp.eq.s32.totalorder %s25, 0
      %p60 = por %p58, %p59
      %p61 = scmp.ne.s32.totalorder %s47, %s48
      %p62 = scmp.eq.s32.totalorder %s26, 3
      %p63 = por %p61, %p62
      %p65 = scmp.ne.s32.totalorder %s48, %s64
      %p66 = scmp.eq.s32.totalorder %s26, 0
      %p67 = por %p65, %p66
      %s69 = sadd.s32 %s68, 1
      %p72 = scmp.eq.s32.totalorder %s20, 3
      %p73 = scmp.ne.s32.totalorder %s68, %s70
      %p74 = scmp.eq.s32.totalorder %s20, 0
      %p75 = por %p73, %p74
      %p76 = scmp.ne.s32.totalorder %s68, %s70
      %p77 = scmp.eq.s32.totalorder %s25, 3
      %p78 = por %p76, %p77
      %p79 = scmp.ne.s32.totalorder %s70, %s71
      %p80 = scmp.eq.s32.totalorder %s25, 0
      %p81 = por %p79, %p80
      %p82 = scmp.ne.s32.totalorder %s70, %s71
      %p83 = scmp.eq.s32.totalorder %s26, 3
      %p84 = por %p82, %p83
      %p86 = scmp.ne.s32.totalorder %s71, %s85
      %p87 = scmp.eq.s32.totalorder %s26, 0
      %p88 = por %p86, %p87
      %s89 = ssub.s32 %s27, %s39
      %s90 = ssub.s32 %s28, %s35
      %s91 = sor.u32 %s89, %s90
      %p92 = scmp.eq.s32.totalorder %s91, 0
      %s94 = sadd.s32 %s93, 1
      %s95 = scalar_select %p92, %s93, %s94
      %p98 = pneg %p92
      %p99 = scmp.eq.s32.totalorder %s20, 3
      %p100 = por %p98, %p99
      %p101 = scmp.ne.s32.totalorder %s93, %s96
      %p102 = scmp.eq.s32.totalorder %s20, 0
      %p103 = por %p101, %p102
      %p104 = scmp.ne.s32.totalorder %s93, %s96
      %p105 = scmp.eq.s32.totalorder %s25, 3
      %p106 = por %p104, %p105
      %p107 = scmp.ne.s32.totalorder %s96, %s97
      %p108 = scmp.eq.s32.totalorder %s25, 0
      %p109 = por %p107, %p108
      %p110 = scmp.ne.s32.totalorder %s96, %s97
      %p111 = scmp.eq.s32.totalorder %s26, 3
      %p112 = por %p110, %p111
      %p114 = scmp.ne.s32.totalorder %s97, %s113
      %p115 = scmp.eq.s32.totalorder %s26, 0
      %p116 = por %p114, %p115
      %s117 = ssub.s32 %s27, %s39
      %s118 = ssub.s32 %s28, %s35
      %s119 = sor.u32 %s117, %s118
      %p120 = scmp.eq.s32.totalorder %s119, 0
      %s122 = sadd.s32 %s121, 1
      %s123 = scalar_select %p120, %s121, %s122
      %p126 = pneg %p120
      %p127 = scmp.eq.s32.totalorder %s20, 3
      %p128 = por %p126, %p127
      %p129 = scmp.ne.s32.totalorder %s121, %s124
      %p130 = scmp.eq.s32.totalorder %s20, 0
      %p131 = por %p129, %p130
      %p132 = scmp.ne.s32.totalorder %s121, %s124
      %p133 = scmp.eq.s32.totalorder %s25, 3
      %p134 = por %p132, %p133
      %p135 = scmp.ne.s32.totalorder %s124, %s125
      %p136 = scmp.eq.s32.totalorder %s25, 0
      %p137 = por %p135, %p136
      %p138 = scmp.ne.s32.totalorder %s124, %s125
      %p139 = scmp.eq.s32.totalorder %s26, 3
      %p140 = por %p138, %p139
      %p142 = scmp.ne.s32.totalorder %s125, %s141
      %p143 = scmp.eq.s32.totalorder %s26, 0
      %p144 = por %p142, %p143
      %p145 = scmp.le.s32.totalorder 1, %s20
      %p146 = scmp.lt.s32.totalorder %s20, 5
      %p147 = pnand %p145, %p146
      %p148 = pneg %p147
      // Predicated region
      $region9: #{tpu_custom_call.1} parent=5 // pred_check
        _
      $region10: #{tpu_custom_call.1} parent=5 // pred_check_branch
        %150 = sbr.rel (%p147) target = $region12
      $region11: #{tpu_custom_call.1} parent=5 // pred_region
        %s151 = ssub.s32 %s20, 1
        // Predicated region
        $region13: #{tpu_custom_call.1} parent=11 // pred_check
          %p152 = pneg %p81
        $region14: #{tpu_custom_call.1} parent=11 // pred_check_branch
          %154 = sbr.rel (%p152) target = $region16
        $region15: #{tpu_custom_call.1} parent=11 // pred_region
          %s156 = ssub.s32 7168, 7168
          %157 = vsyncadd [#allocation6], %s156
          %s158 = sshll.u32 [#allocation5], 4
          %s159 = int_to_ptr.vmem [resolvable:$true] %s158
          %164 = dma.hbm_to_vmem [thread:$0]  %s1, 7168, %s159, [#allocation6], 64, 64, 4
        $region16: #{tpu_custom_call.1} parent=11 // pred_fallthru
          _
      $region12: #{tpu_custom_call.1} parent=5 // pred_fallthru
        _
      %p165 = scmp.lt.s32.totalorder %s20, 4
      // Predicated region
      $region17: #{tpu_custom_call.1} parent=5 // pred_check
        %p166 = pneg %p165
      $region18: #{tpu_custom_call.1} parent=5 // pred_check_branch
        %168 = sbr.rel (%p166) target = $region20
      $region19: #{tpu_custom_call.1} parent=5 // pred_region
        // Predicated region
        $region21: #{tpu_custom_call.1} parent=19 // pred_check
          %p169 = pneg %p54
        $region22: #{tpu_custom_call.1} parent=19 // pred_check_branch
          %171 = sbr.rel (%p169) target = $region24
        $region23: #{tpu_custom_call.1} parent=19 // pred_region
          %s172 = sand.u32 %s44, 1
          %s173 = scalar_lea.sflag [#allocation3], %s172
          %s174 = sand.u32 %s44, 1
          %s175 = smul.addr %s174, 352
          %s176 = scalar_lea.vmem [#allocation2], %s175
          %s178 = ssub.s32 5632, 5632
          %179 = vsyncadd %s173, %s178
          %s180 = smul.addr %s28, 88
          %s181 = smul.addr %s27, 176
          %s182 = sadd.s32 %s180, %s181
          %s183 = smul.addr %s182, 64
          %s184 = scalar_lea.hbm %s0, %s183
          %s185 = sshll.u32 %s176, 4
          %s186 = int_to_ptr.vmem [resolvable:$true] %s185
          %191 = dma.hbm_to_vmem [thread:$0]  %s184, 5632, %s186, %s173, 64, 64, 4
        $region24: #{tpu_custom_call.1} parent=19 // pred_fallthru
          _
      $region20: #{tpu_custom_call.1} parent=5 // pred_fallthru
        _
      %p192 = scmp.le.s32.totalorder 1, %s20
      %p193 = scmp.lt.s32.totalorder %s20, 5
      %p194 = pnand %p192, %p193
      %p195 = pneg %p194
      // Predicated region
      $region25: #{tpu_custom_call.1} parent=5 // pred_check
        _
      $region26: #{tpu_custom_call.1} parent=5 // pred_check_branch
        %197 = sbr.rel (%p194) target = $region28
      $region27: #{tpu_custom_call.1} parent=5 // pred_region
        %s198 = ssub.s32 %s20, 1
        %s199 = sand.u32 %s47, 1
        %s200 = scalar_lea.sflag [#allocation3], %s199
        %s201 = sand.u32 %s47, 1
        %s202 = smul.addr %s201, 352
        %s203 = scalar_lea.vmem [#allocation2], %s202
        // Predicated region
        $region29: #{tpu_custom_call.1} parent=27 // pred_check
          %p204 = pneg %p60
        $region30: #{tpu_custom_call.1} parent=27 // pred_check_branch
          %206 = sbr.rel (%p204) target = $region32
        $region31: #{tpu_custom_call.1} parent=27 // pred_region
          %207 = dma.done %s200, 5632
        $region32: #{tpu_custom_call.1} parent=27 // pred_fallthru
          _
        // Predicated region
        $region33: #{tpu_custom_call.1} parent=27 // pred_check
          %p208 = pneg %p81
        $region34: #{tpu_custom_call.1} parent=27 // pred_check_branch
          %210 = sbr.rel (%p208) target = $region36
        $region35: #{tpu_custom_call.1} parent=27 // pred_region
          %211 = dma.done [#allocation6], 7168
        $region36: #{tpu_custom_call.1} parent=27 // pred_fallthru
          _
        %s212 = sand.u32 %s47, 1
        %s213 = scalar_lea.sflag [#allocation3], %s212
        %s214 = sand.u32 %s47, 1
        %s215 = smul.addr %s214, 352
        %s216 = scalar_lea.vmem [#allocation2], %s215
        %p217 = pneg %p60
        %p218 = pneg %p57
        %p219 = pneg %p81
        %p220 = pneg %p78
        %p221 = pneg %p109
        %p222 = pneg %p106
        %s223 = sand.u32 %s96, 1
        %s224 = scalar_lea.sflag [#allocation4], %s223
        %s225 = sand.u32 %s96, 1
        %s226 = smul.addr %s225, 256
        %s227 = scalar_lea.vmem [#allocation7], %s226
        %p228 = pneg %p137
        %p229 = pneg %p134
        %s230 = sand.u32 %s124, 1
        %s231 = scalar_lea.sflag [#allocation9], %s230
        %s232 = sand.u32 %s124, 1
        %s233 = smul.addr %s232, 2
        %s234 = scalar_lea.vmem [#allocation8], %s233
        %v236 = vld [vmem:[%s203] sm:$0xf]
        %v237 = vld [vmem:[%s203 + $0x4] sm:$0xf]
        %v238 = vld [vmem:[%s203 + $0x8] sm:$0xf]
        %v239 = vld [vmem:[%s203 + $0xc] sm:$0xf]
        %v240 = vld [vmem:[%s203 + $0x10] sm:$0xf]
        %v241 = vld [vmem:[%s203 + $0x14] sm:$0xf]
        %v242 = vld [vmem:[%s203 + $0x18] sm:$0xf]
        %v243 = vld [vmem:[%s203 + $0x1c] sm:$0xf]
        %v244 = vld [vmem:[%s203 + $0x20] sm:$0xf]
        %v245 = vld [vmem:[%s203 + $0x24] sm:$0xf]
        %v246 = vld [vmem:[%s203 + $0x28] sm:$0xf]
        %v247 = vld [vmem:[%s203 + $0x2c] sm:$0xf]
        %v248 = vld [vmem:[%s203 + $0x30] sm:$0xf]
        %v249 = vld [vmem:[%s203 + $0x34] sm:$0xf]
        %v250 = vld [vmem:[%s203 + $0x38] sm:$0xf]
        %v251 = vld [vmem:[%s203 + $0x3c] sm:$0xf]
        %v252 = vld [vmem:[%s203 + $0x40] sm:$0xf]
        %v253 = vld [vmem:[%s203 + $0x44] sm:$0xf]
        %v254 = vld [vmem:[%s203 + $0x48] sm:$0xf]
        %v255 = vld [vmem:[%s203 + $0x4c] sm:$0xf]
        %v256 = vld [vmem:[%s203 + $0x50] sm:$0xf]
        %v257 = vld [vmem:[%s203 + $0x54] sm:$0xf]
        %v258 = vld [vmem:[%s203 + $0x58] sm:$0xf]
        %v259 = vld [vmem:[%s203 + $0x5c] sm:$0xf]
        %v260 = vld [vmem:[%s203 + $0x60] sm:$0xf]
        %v261 = vld [vmem:[%s203 + $0x64] sm:$0xf]
        %v262 = vld [vmem:[%s203 + $0x68] sm:$0xf]
        %v263 = vld [vmem:[%s203 + $0x6c] sm:$0xf]
        %v264 = vld [vmem:[%s203 + $0x70] sm:$0xf]
        %v265 = vld [vmem:[%s203 + $0x74] sm:$0xf]
        %v266 = vld [vmem:[%s203 + $0x78] sm:$0xf]
        %v267 = vld [vmem:[%s203 + $0x7c] sm:$0xf]
        %v268 = vld [vmem:[%s203 + $0x80] sm:$0xf]
        %v269 = vld [vmem:[%s203 + $0x84] sm:$0xf]
        %v270 = vld [vmem:[%s203 + $0x88] sm:$0xf]
        %v271 = vld [vmem:[%s203 + $0x8c] sm:$0xf]
        %v272 = vld [vmem:[%s203 + $0x90] sm:$0xf]
        %v273 = vld [vmem:[%s203 + $0x94] sm:$0xf]
        %v274 = vld [vmem:[%s203 + $0x98] sm:$0xf]
        %v275 = vld [vmem:[%s203 + $0x9c] sm:$0xf]
        %v276 = vld [vmem:[%s203 + $0xa0] sm:$0xf]
        %v277 = vld [vmem:[%s203 + $0xa4] sm:$0xf]
        %v278 = vld [vmem:[%s203 + $0xa8] sm:$0xf]
        %v279 = vld [vmem:[%s203 + $0xac] sm:$0xf]
        %v280 = vld [vmem:[%s203 + $0xb0] sm:$0xf]
        %v281 = vld [vmem:[%s203 + $0xb4] sm:$0xf]
        %v282 = vld [vmem:[%s203 + $0xb8] sm:$0xf]
        %v283 = vld [vmem:[%s203 + $0xbc] sm:$0xf]
        %v284 = vld [vmem:[%s203 + $0xc0] sm:$0xf]
        %v285 = vld [vmem:[%s203 + $0xc4] sm:$0xf]
        %v286 = vld [vmem:[%s203 + $0xc8] sm:$0xf]
        %v287 = vld [vmem:[%s203 + $0xcc] sm:$0xf]
        %v288 = vld [vmem:[%s203 + $0xd0] sm:$0xf]
        %v289 = vld [vmem:[%s203 + $0xd4] sm:$0xf]
        %v290 = vld [vmem:[%s203 + $0xd8] sm:$0xf]
        %v291 = vld [vmem:[%s203 + $0xdc] sm:$0xf]
        %v292 = vld [vmem:[%s203 + $0xe0] sm:$0xf]
        %v293 = vld [vmem:[%s203 + $0xe4] sm:$0xf]
        %v294 = vld [vmem:[%s203 + $0xe8] sm:$0xf]
        %v295 = vld [vmem:[%s203 + $0xec] sm:$0xf]
        %v296 = vld [vmem:[%s203 + $0xf0] sm:$0xf]
        %v297 = vld [vmem:[%s203 + $0xf4] sm:$0xf]
        %v298 = vld [vmem:[%s203 + $0xf8] sm:$0xf]
        %v299 = vld [vmem:[%s203 + $0xfc] sm:$0xf]
        %v300 = vld [vmem:[#allocation5] sm:$0xf]
        %v301 = vld [vmem:[#allocation5 + $0x4] sm:$0xf]
        %v302 = vld [vmem:[#allocation5 + $0x8] sm:$0xf]
        %v303 = vld [vmem:[#allocation5 + $0xc] sm:$0xf]
        %v304 = vld [vmem:[#allocation5 + $0x10] sm:$0xf]
        %v305 = vld [vmem:[#allocation5 + $0x14] sm:$0xf]
        %v306 = vld [vmem:[#allocation5 + $0x18] sm:$0xf]
        %v307 = vld [vmem:[#allocation5 + $0x1c] sm:$0xf]
        %v308 = vld [vmem:[#allocation5 + $0x20] sm:$0xf]
        %v309 = vld [vmem:[#allocation5 + $0x24] sm:$0xf]
        %v310 = vld [vmem:[#allocation5 + $0x28] sm:$0xf]
        %v311 = vld [vmem:[#allocation5 + $0x2c] sm:$0xf]
        %v312 = vld [vmem:[#allocation5 + $0x30] sm:$0xf]
        %v313 = vld [vmem:[#allocation5 + $0x34] sm:$0xf]
        %v314 = vld [vmem:[#allocation5 + $0x38] sm:$0xf]
        %v315 = vld [vmem:[#allocation5 + $0x3c] sm:$0xf]
        %v316 = vld [vmem:[%s203 + $0x100] sm:$0xf]
        %v317 = vld [vmem:[%s203 + $0x104] sm:$0xf]
        %v318 = vld [vmem:[%s203 + $0x108] sm:$0xf]
        %v319 = vld [vmem:[%s203 + $0x10c] sm:$0xf]
        %s320 = scalar_lea.vmem [#allocation5], 64
        %v321 = vld [vmem:[%s320] sm:$0xf]
        %v322 = vld [vmem:[%s320 + $0x4] sm:$0xf]
        %v323 = vld [vmem:[%s320 + $0x8] sm:$0xf]
        %v324 = vld [vmem:[%s320 + $0xc] sm:$0xf]
        %v325 = vld [vmem:[%s320 + $0x10] sm:$0xf]
        %v326 = vld [vmem:[%s320 + $0x14] sm:$0xf]
        %v327 = vld [vmem:[%s320 + $0x18] sm:$0xf]
        %v328 = vld [vmem:[%s320 + $0x1c] sm:$0xf]
        %v329 = vld [vmem:[%s320 + $0x20] sm:$0xf]
        %v330 = vld [vmem:[%s320 + $0x24] sm:$0xf]
        %v331 = vld [vmem:[%s320 + $0x28] sm:$0xf]
        %v332 = vld [vmem:[%s320 + $0x2c] sm:$0xf]
        %v333 = vld [vmem:[%s320 + $0x30] sm:$0xf]
        %v334 = vld [vmem:[%s320 + $0x34] sm:$0xf]
        %v335 = vld [vmem:[%s320 + $0x38] sm:$0xf]
        %v336 = vld [vmem:[%s320 + $0x3c] sm:$0xf]
        %v401 = vunpack.c.l.b16 %v240
        %v402 = vunpack.c.l.b16 %v241
        %v403 = vunpack.c.l.b16 %v242
        %v404 = vunpack.c.l.b16 %v243
        %v405 = vunpack.c.l.b16 %v244
        %v406 = vunpack.c.l.b16 %v245
        %v407 = vunpack.c.l.b16 %v246
        %v408 = vunpack.c.l.b16 %v247
        %v409 = vunpack.c.l.b16 %v248
        %v410 = vunpack.c.l.b16 %v249
        %v411 = vunpack.c.l.b16 %v250
        %v412 = vunpack.c.l.b16 %v251
        %v413 = vunpack.c.l.b16 %v252
        %v414 = vunpack.c.l.b16 %v253
        %v415 = vunpack.c.l.b16 %v254
        %v416 = vunpack.c.l.b16 %v255
        %v417 = vunpack.c.l.b16 %v256
        %v418 = vunpack.c.l.b16 %v257
        %v419 = vunpack.c.l.b16 %v258
        %v420 = vunpack.c.l.b16 %v259
        %v421 = vunpack.c.l.b16 %v260
        %v422 = vunpack.c.l.b16 %v261
        %v423 = vunpack.c.l.b16 %v262
        %v424 = vunpack.c.l.b16 %v263
        %v425 = vunpack.c.l.b16 %v264
        %v426 = vunpack.c.l.b16 %v265
        %v427 = vunpack.c.l.b16 %v266
        %v428 = vunpack.c.l.b16 %v267
        %v429 = vunpack.c.l.b16 %v268
        %v430 = vunpack.c.l.b16 %v269
        %v431 = vunpack.c.l.b16 %v270
        %v432 = vunpack.c.l.b16 %v271
        %v433 = vunpack.c.l.b16 %v272
        %v434 = vunpack.c.l.b16 %v273
        %v435 = vunpack.c.l.b16 %v274
        %v436 = vunpack.c.l.b16 %v275
        %v437 = vunpack.c.l.b16 %v276
        %v438 = vunpack.c.l.b16 %v277
        %v439 = vunpack.c.l.b16 %v278
        %v440 = vunpack.c.l.b16 %v279
        %v441 = vunpack.c.l.b16 %v280
        %v442 = vunpack.c.l.b16 %v281
        %v443 = vunpack.c.l.b16 %v282
        %v444 = vunpack.c.l.b16 %v283
        %v445 = vunpack.c.l.b16 %v284
        %v446 = vunpack.c.l.b16 %v285
        %v447 = vunpack.c.l.b16 %v286
        %v448 = vunpack.c.l.b16 %v287
        %v449 = vunpack.c.l.b16 %v288
        %v450 = vunpack.c.l.b16 %v289
        %v451 = vunpack.c.l.b16 %v290
        %v452 = vunpack.c.l.b16 %v291
        %v453 = vunpack.c.l.b16 %v292
        %v454 = vunpack.c.l.b16 %v293
        %v455 = vunpack.c.l.b16 %v294
        %v456 = vunpack.c.l.b16 %v295
        %v457 = vunpack.c.l.b16 %v296
        %v458 = vunpack.c.l.b16 %v297
        %v459 = vunpack.c.l.b16 %v298
        %v460 = vunpack.c.l.b16 %v299
        %v461 = vunpack.c.l.b16 %v316
        %v462 = vunpack.c.l.b16 %v317
        %v463 = vunpack.c.l.b16 %v318
        %v464 = vunpack.c.l.b16 %v319
        %v465 = vpack.c.b16 %v402, %v401
        %v466 = vpack.c.b16 %v404, %v403
        %v467 = vpack.c.b16 %v406, %v405
        %v468 = vpack.c.b16 %v408, %v407
        %v469 = vpack.c.b16 %v410, %v409
        %v470 = vpack.c.b16 %v412, %v411
        %v471 = vpack.c.b16 %v414, %v413
        %v472 = vpack.c.b16 %v416, %v415
        %v473 = vpack.c.b16 %v418, %v417
        %v474 = vpack.c.b16 %v420, %v419
        %v475 = vpack.c.b16 %v422, %v421
        %v476 = vpack.c.b16 %v424, %v423
        %v477 = vpack.c.b16 %v426, %v425
        %v478 = vpack.c.b16 %v428, %v427
        %v479 = vpack.c.b16 %v430, %v429
        %v480 = vpack.c.b16 %v432, %v431
        %v481 = vpack.c.b16 %v434, %v433
        %v482 = vpack.c.b16 %v436, %v435
        %v483 = vpack.c.b16 %v438, %v437
        %v484 = vpack.c.b16 %v440, %v439
        %v485 = vpack.c.b16 %v442, %v441
        %v486 = vpack.c.b16 %v444, %v443
        %v487 = vpack.c.b16 %v446, %v445
        %v488 = vpack.c.b16 %v448, %v447
        %v489 = vpack.c.b16 %v450, %v449
        %v490 = vpack.c.b16 %v452, %v451
        %v491 = vpack.c.b16 %v454, %v453
        %v492 = vpack.c.b16 %v456, %v455
        %v493 = vpack.c.b16 %v458, %v457
        %v494 = vpack.c.b16 %v460, %v459
        %v495 = vpack.c.b16 %v462, %v461
        %v496 = vpack.c.b16 %v464, %v463
        %v545 = vunpack.c.l.b16 %v321
        %v546 = vunpack.c.l.b16 %v322
        %v547 = vunpack.c.l.b16 %v323
        %v548 = vunpack.c.l.b16 %v324
        %v549 = vunpack.c.l.b16 %v325
        %v550 = vunpack.c.l.b16 %v326
        %v551 = vunpack.c.l.b16 %v327
        %v552 = vunpack.c.l.b16 %v328
        %v553 = vunpack.c.l.b16 %v329
        %v554 = vunpack.c.l.b16 %v330
        %v555 = vunpack.c.l.b16 %v331
        %v556 = vunpack.c.l.b16 %v332
        %v557 = vunpack.c.l.b16 %v333
        %v558 = vunpack.c.l.b16 %v334
        %v559 = vunpack.c.l.b16 %v335
        %v560 = vunpack.c.l.b16 %v336
        %v561 = vpack.c.b16 %v546, %v545
        %v562 = vpack.c.b16 %v548, %v547
        %v563 = vpack.c.b16 %v550, %v549
        %v564 = vpack.c.b16 %v552, %v551
        %v565 = vpack.c.b16 %v554, %v553
        %v566 = vpack.c.b16 %v556, %v555
        %v567 = vpack.c.b16 %v558, %v557
        %v568 = vpack.c.b16 %v560, %v559
        %577 = vmatprep.subr.bf16.mxu0 0
        %578 = vmatpush1.bf16.msra.mxu0 %v561
        %579 = vmatprep.subr.bf16.mxu0 0
        %580 = vmatpush1.bf16.msra.mxu0 %v562
        %581 = vmatprep.subr.bf16.mxu0 0
        %582 = vmatpush1.bf16.msra.mxu0 %v563
        %583 = vmatprep.subr.bf16.mxu0 0
        %584 = vmatpush1.bf16.msra.mxu0 %v564
        %585 = vmatprep.subr.bf16.mxu0 0
        %586 = vmatpush1.bf16.msra.mxu0 %v565
        %587 = vmatprep.subr.bf16.mxu0 0
        %588 = vmatpush1.bf16.msra.mxu0 %v566
        %589 = vmatprep.subr.bf16.mxu0 0
        %590 = vmatpush1.bf16.msra.mxu0 %v567
        %591 = vmatprep.subr.bf16.mxu0 0
        %592 = vmatpush1.bf16.msra.mxu0 %v568
        %593 = vmatprep.subr.bf16.mxu0 0
        %594 = vmatpush1.bf16.msra.mxu0 0
        %595 = vmatprep.subr.bf16.mxu0 0
        %596 = vmatpush1.bf16.msra.mxu0 0
        %597 = vmatprep.subr.bf16.mxu0 0
        %598 = vmatpush1.bf16.msra.mxu0 0
        %599 = vmatprep.subr.bf16.mxu0 0
        %600 = vmatpush1.bf16.msra.mxu0 0
        %601 = vmatprep.subr.bf16.mxu0 0
        %602 = vmatpush1.bf16.msra.mxu0 0
        %603 = vmatprep.subr.bf16.mxu0 0
        %604 = vmatpush1.bf16.msra.mxu0 0
        %605 = vmatprep.subr.bf16.mxu0 0
        %606 = vmatpush1.bf16.msra.mxu0 0
        %607 = vmatprep.subr.bf16.mxu0 0
        %608 = vmatpush1.bf16.msra.mxu0 0
        %609 = vmatprep.mubr.bf16.mxu0 0
        %610 = vmatmul.mubr.bf16.gmra.mrb[0].mxu0 %v465
        %v611 = vpop.f32.mrb[0].mxu0
        %v612 = vadd.f32 0.0, %v611
        %v613 = vpop.f32.mrb[0].mxu0
        %v614 = vpop.f32.mrb[0].mxu0
        %v615 = vadd.f32 0.0, %v614
        %v616 = vpop.f32.mrb[0].mxu0
        %617 = vmatprep.mubr.bf16.mxu0 0
        %618 = vmatmul.mubr.bf16.gmra.mrb[0].mxu0 %v466
        %v619 = vpop.f32.mrb[0].mxu0
        %v620 = vadd.f32 0.0, %v619
        %v621 = vpop.f32.mrb[0].mxu0
        %v622 = vpop.f32.mrb[0].mxu0
        %v623 = vadd.f32 0.0, %v622
        %v624 = vpop.f32.mrb[0].mxu0
        %625 = vmatprep.mubr.bf16.mxu0 0
        %626 = vmatmul.mubr.bf16.gmra.mrb[0].mxu0 %v467
        %v627 = vpop.f32.mrb[0].mxu0
        %v628 = vadd.f32 0.0, %v627
        %v629 = vpop.f32.mrb[0].mxu0
        %v630 = vpop.f32.mrb[0].mxu0
        %v631 = vadd.f32 0.0, %v630
        %v632 = vpop.f32.mrb[0].mxu0
        %633 = vmatprep.mubr.bf16.mxu0 0
        %634 = vmatmul.mubr.bf16.gmra.mrb[0].mxu0 %v468
        %v635 = vpop.f32.mrb[0].mxu0
        %v636 = vadd.f32 0.0, %v635
        %v637 = vpop.f32.mrb[0].mxu0
        %v638 = vpop.f32.mrb[0].mxu0
        %v639 = vadd.f32 0.0, %v638
        %v640 = vpop.f32.mrb[0].mxu0
        %641 = vmatprep.mubr.bf16.mxu0 0
        %642 = vmatmul.mubr.bf16.gmra.mrb[0].mxu0 %v469
        %v643 = vpop.f32.mrb[0].mxu0
        %v644 = vadd.f32 0.0, %v643
        %v645 = vpop.f32.mrb[0].mxu0
        %v646 = vpop.f32.mrb[0].mxu0
        %v647 = vadd.f32 0.0, %v646
        %v648 = vpop.f32.mrb[0].mxu0
        %649 = vmatprep.mubr.bf16.mxu0 0
        %650 = vmatmul.mubr.bf16.gmra.mrb[0].mxu0 %v470
        %v651 = vpop.f32.mrb[0].mxu0
        %v652 = vadd.f32 0.0, %v651
        %v653 = vpop.f32.mrb[0].mxu0
        %v654 = vpop.f32.mrb[0].mxu0
        %v655 = vadd.f32 0.0, %v654
        %v656 = vpop.f32.mrb[0].mxu0
        %657 = vmatprep.mubr.bf16.mxu0 0
        %658 = vmatmul.mubr.bf16.gmra.mrb[0].mxu0 %v471
        %v659 = vpop.f32.mrb[0].mxu0
        %v660 = vadd.f32 0.0, %v659
        %v661 = vpop.f32.mrb[0].mxu0
        %v662 = vpop.f32.mrb[0].mxu0
        %v663 = vadd.f32 0.0, %v662
        %v664 = vpop.f32.mrb[0].mxu0
        %665 = vmatprep.mubr.bf16.mxu0 0
        %666 = vmatmul.mubr.bf16.gmra.mrb[0].mxu0 %v472
        %v667 = vpop.f32.mrb[0].mxu0
        %v668 = vadd.f32 0.0, %v667
        %v669 = vpop.f32.mrb[0].mxu0
        %v670 = vpop.f32.mrb[0].mxu0
        %v671 = vadd.f32 0.0, %v670
        %v672 = vpop.f32.mrb[0].mxu0
        %673 = vmatprep.mubr.bf16.mxu0 0
        %674 = vmatmul.mubr.bf16.gmra.mrb[0].mxu0 %v473
        %v675 = vpop.f32.mrb[0].mxu0
        %v676 = vadd.f32 0.0, %v675
        %v677 = vpop.f32.mrb[0].mxu0
        %v678 = vpop.f32.mrb[0].mxu0
        %v679 = vadd.f32 0.0, %v678
        %v680 = vpop.f32.mrb[0].mxu0
        %681 = vmatprep.mubr.bf16.mxu0 0
        %682 = vmatmul.mubr.bf16.gmra.mrb[0].mxu0 %v474
        %v683 = vpop.f32.mrb[0].mxu0
        %v684 = vadd.f32 0.0, %v683
        %v685 = vpop.f32.mrb[0].mxu0
        %v686 = vpop.f32.mrb[0].mxu0
        %v687 = vadd.f32 0.0, %v686
        %v688 = vpop.f32.mrb[0].mxu0
        %689 = vmatprep.mubr.bf16.mxu0 0
        %690 = vmatmul.mubr.bf16.gmra.mrb[0].mxu0 %v475
        %v691 = vpop.f32.mrb[0].mxu0
        %v692 = vadd.f32 0.0, %v691
        %v693 = vpop.f32.mrb[0].mxu0
        %v694 = vpop.f32.mrb[0].mxu0
        %v695 = vadd.f32 0.0, %v694
        %v696 = vpop.f32.mrb[0].mxu0
        %697 = vmatprep.mubr.bf16.mxu0 0
        %698 = vmatmul.mubr.bf16.gmra.mrb[0].mxu0 %v476
        %v699 = vpop.f32.mrb[0].mxu0
        %v700 = vadd.f32 0.0, %v699
        %v701 = vpop.f32.mrb[0].mxu0
        %v702 = vpop.f32.mrb[0].mxu0
        %v703 = vadd.f32 0.0, %v702
        %v704 = vpop.f32.mrb[0].mxu0
        %705 = vmatprep.mubr.bf16.mxu0 0
        %706 = vmatmul.mubr.bf16.gmra.mrb[0].mxu0 %v477
        %v707 = vpop.f32.mrb[0].mxu0
        %v708 = vadd.f32 0.0, %v707
        %v709 = vpop.f32.mrb[0].mxu0
        %v710 = vpop.f32.mrb[0].mxu0
        %v711 = vadd.f32 0.0, %v710
        %v712 = vpop.f32.mrb[0].mxu0
        %713 = vmatprep.mubr.bf16.mxu0 0
        %714 = vmatmul.mubr.bf16.gmra.mrb[0].mxu0 %v478
        %v715 = vpop.f32.mrb[0].mxu0
        %v716 = vadd.f32 0.0, %v715
        %v717 = vpop.f32.mrb[0].mxu0
        %v718 = vpop.f32.mrb[0].mxu0
        %v719 = vadd.f32 0.0, %v718
        %v720 = vpop.f32.mrb[0].mxu0
        %721 = vmatprep.mubr.bf16.mxu0 0
        %722 = vmatmul.mubr.bf16.gmra.mrb[0].mxu0 %v479
        %v723 = vpop.f32.mrb[0].mxu0
        %v724 = vadd.f32 0.0, %v723
        %v725 = vpop.f32.mrb[0].mxu0
        %v726 = vpop.f32.mrb[0].mxu0
        %v727 = vadd.f32 0.0, %v726
        %v728 = vpop.f32.mrb[0].mxu0
        %729 = vmatprep.mubr.bf16.mxu0 0
        %730 = vmatmul.mubr.bf16.gmra.mrb[0].mxu0 %v480
        %v731 = vpop.f32.mrb[0].mxu0
        %v732 = vadd.f32 0.0, %v731
        %v733 = vpop.f32.mrb[0].mxu0
        %v734 = vpop.f32.mrb[0].mxu0
        %v735 = vadd.f32 0.0, %v734
        %v736 = vpop.f32.mrb[0].mxu0
        %737 = vmatprep.mubr.bf16.mxu0 0
        %738 = vmatmul.mubr.bf16.gmra.mrb[0].mxu0 %v481
        %v739 = vpop.f32.mrb[0].mxu0
        %v740 = vadd.f32 0.0, %v739
        %v741 = vpop.f32.mrb[0].mxu0
        %v742 = vpop.f32.mrb[0].mxu0
        %v743 = vadd.f32 0.0, %v742
        %v744 = vpop.f32.mrb[0].mxu0
        %745 = vmatprep.mubr.bf16.mxu0 0
        %746 = vmatmul.mubr.bf16.gmra.mrb[0].mxu0 %v482
        %v747 = vpop.f32.mrb[0].mxu0
        %v748 = vadd.f32 0.0, %v747
        %v749 = vpop.f32.mrb[0].mxu0
        %v750 = vpop.f32.mrb[0].mxu0
        %v751 = vadd.f32 0.0, %v750
        %v752 = vpop.f32.mrb[0].mxu0
        %753 = vmatprep.mubr.bf16.mxu0 0
        %754 = vmatmul.mubr.bf16.gmra.mrb[0].mxu0 %v483
        %v755 = vpop.f32.mrb[0].mxu0
        %v756 = vadd.f32 0.0, %v755
        %v757 = vpop.f32.mrb[0].mxu0
        %v758 = vpop.f32.mrb[0].mxu0
        %v759 = vadd.f32 0.0, %v758
        %v760 = vpop.f32.mrb[0].mxu0
        %761 = vmatprep.mubr.bf16.mxu0 0
        %762 = vmatmul.mubr.bf16.gmra.mrb[0].mxu0 %v484
        %v763 = vpop.f32.mrb[0].mxu0
        %v764 = vadd.f32 0.0, %v763
        %v765 = vpop.f32.mrb[0].mxu0
        %v766 = vpop.f32.mrb[0].mxu0
        %v767 = vadd.f32 0.0, %v766
        %v768 = vpop.f32.mrb[0].mxu0
        %769 = vmatprep.mubr.bf16.mxu0 0
        %770 = vmatmul.mubr.bf16.gmra.mrb[0].mxu0 %v485
        %v771 = vpop.f32.mrb[0].mxu0
        %v772 = vadd.f32 0.0, %v771
        %v773 = vpop.f32.mrb[0].mxu0
        %v774 = vpop.f32.mrb[0].mxu0
        %v775 = vadd.f32 0.0, %v774
        %v776 = vpop.f32.mrb[0].mxu0
        %777 = vmatprep.mubr.bf16.mxu0 0
        %778 = vmatmul.mubr.bf16.gmra.mrb[0].mxu0 %v486
        %v779 = vpop.f32.mrb[0].mxu0
        %v780 = vadd.f32 0.0, %v779
        %v781 = vpop.f32.mrb[0].mxu0
        %v782 = vpop.f32.mrb[0].mxu0
        %v783 = vadd.f32 0.0, %v782
        %v784 = vpop.f32.mrb[0].mxu0
        %785 = vmatprep.mubr.bf16.mxu0 0
        %786 = vmatmul.mubr.bf16.gmra.mrb[0].mxu0 %v487
        %v787 = vpop.f32.mrb[0].mxu0
        %v788 = vadd.f32 0.0, %v787
        %v789 = vpop.f32.mrb[0].mxu0
        %v790 = vpop.f32.mrb[0].mxu0
        %v791 = vadd.f32 0.0, %v790
        %v792 = vpop.f32.mrb[0].mxu0
        %793 = vmatprep.mubr.bf16.mxu0 0
        %794 = vmatmul.mubr.bf16.gmra.mrb[0].mxu0 %v488
        %v795 = vpop.f32.mrb[0].mxu0
        %v796 = vadd.f32 0.0, %v795
        %v797 = vpop.f32.mrb[0].mxu0
        %v798 = vpop.f32.mrb[0].mxu0
        %v799 = vadd.f32 0.0, %v798
        %v800 = vpop.f32.mrb[0].mxu0
        %801 = vmatprep.mubr.bf16.mxu0 0
        %802 = vmatmul.mubr.bf16.gmra.mrb[0].mxu0 %v489
        %v803 = vpop.f32.mrb[0].mxu0
        %v804 = vadd.f32 0.0, %v803
        %v805 = vpop.f32.mrb[0].mxu0
        %v806 = vpop.f32.mrb[0].mxu0
        %v807 = vadd.f32 0.0, %v806
        %v808 = vpop.f32.mrb[0].mxu0
        %809 = vmatprep.mubr.bf16.mxu0 0
        %810 = vmatmul.mubr.bf16.gmra.mrb[0].mxu0 %v490
        %v811 = vpop.f32.mrb[0].mxu0
        %v812 = vadd.f32 0.0, %v811
        %v813 = vpop.f32.mrb[0].mxu0
        %v814 = vpop.f32.mrb[0].mxu0
        %v815 = vadd.f32 0.0, %v814
        %v816 = vpop.f32.mrb[0].mxu0
        %817 = vmatprep.mubr.bf16.mxu0 0
        %818 = vmatmul.mubr.bf16.gmra.mrb[0].mxu0 %v491
        %v819 = vpop.f32.mrb[0].mxu0
        %v820 = vadd.f32 0.0, %v819
        %v821 = vpop.f32.mrb[0].mxu0
        %v822 = vpop.f32.mrb[0].mxu0
        %v823 = vadd.f32 0.0, %v822
        %v824 = vpop.f32.mrb[0].mxu0
        %825 = vmatprep.mubr.bf16.mxu0 0
        %826 = vmatmul.mubr.bf16.gmra.mrb[0].mxu0 %v492
        %v827 = vpop.f32.mrb[0].mxu0
        %v828 = vadd.f32 0.0, %v827
        %v829 = vpop.f32.mrb[0].mxu0
        %v830 = vpop.f32.mrb[0].mxu0
        %v831 = vadd.f32 0.0, %v830
        %v832 = vpop.f32.mrb[0].mxu0
        %833 = vmatprep.mubr.bf16.mxu0 0
        %834 = vmatmul.mubr.bf16.gmra.mrb[0].mxu0 %v493
        %v835 = vpop.f32.mrb[0].mxu0
        %v836 = vadd.f32 0.0, %v835
        %v837 = vpop.f32.mrb[0].mxu0
        %v838 = vpop.f32.mrb[0].mxu0
        %v839 = vadd.f32 0.0, %v838
        %v840 = vpop.f32.mrb[0].mxu0
        %841 = vmatprep.mubr.bf16.mxu0 0
        %842 = vmatmul.mubr.bf16.gmra.mrb[0].mxu0 %v494
        %v843 = vpop.f32.mrb[0].mxu0
        %v844 = vadd.f32 0.0, %v843
        %v845 = vpop.f32.mrb[0].mxu0
        %v846 = vpop.f32.mrb[0].mxu0
        %v847 = vadd.f32 0.0, %v846
        %v848 = vpop.f32.mrb[0].mxu0
        %849 = vmatprep.mubr.bf16.mxu0 0
        %850 = vmatmul.mubr.bf16.gmra.mrb[0].mxu0 %v495
        %v851 = vpop.f32.mrb[0].mxu0
        %v852 = vadd.f32 0.0, %v851
        %v853 = vpop.f32.mrb[0].mxu0
        %v854 = vpop.f32.mrb[0].mxu0
        %v855 = vadd.f32 0.0, %v854
        %v856 = vpop.f32.mrb[0].mxu0
        %857 = vmatprep.mubr.bf16.mxu0 0
        %858 = vmatmul.mubr.bf16.gmra.mrb[0].mxu0 %v496
        %v859 = vpop.f32.mrb[0].mxu0
        %v860 = vadd.f32 0.0, %v859
        %v861 = vpop.f32.mrb[0].mxu0
        %v862 = vpop.f32.mrb[0].mxu0
        %v863 = vadd.f32 0.0, %v862
        %v864 = vpop.f32.mrb[0].mxu0
        %865 = vdwg.mxu0
        %v870 = vunpack.c.l.b16 %v236
        %v871 = vunpack.c.l.b16 %v237
        %v872 = vunpack.c.l.b16 %v238
        %v873 = vunpack.c.l.b16 %v239
        %v874 = vpack.c.b16 %v871, %v870
        %v875 = vpack.c.b16 %v873, %v872
        %v894 = vunpack.c.l.b16 %v300
        %v895 = vunpack.c.l.b16 %v301
        %v896 = vunpack.c.l.b16 %v302
        %v897 = vunpack.c.l.b16 %v303
        %v898 = vunpack.c.l.b16 %v304
        %v899 = vunpack.c.l.b16 %v305
        %v900 = vunpack.c.l.b16 %v306
        %v901 = vunpack.c.l.b16 %v307
        %v902 = vunpack.c.l.b16 %v308
        %v903 = vunpack.c.l.b16 %v309
        %v904 = vunpack.c.l.b16 %v310
        %v905 = vunpack.c.l.b16 %v311
        %v906 = vunpack.c.l.b16 %v312
        %v907 = vunpack.c.l.b16 %v313
        %v908 = vunpack.c.l.b16 %v314
        %v909 = vunpack.c.l.b16 %v315
        %v910 = vpack.c.b16 %v895, %v894
        %v911 = vpack.c.b16 %v897, %v896
        %v912 = vpack.c.b16 %v899, %v898
        %v913 = vpack.c.b16 %v901, %v900
        %v914 = vpack.c.b16 %v903, %v902
        %v915 = vpack.c.b16 %v905, %v904
        %v916 = vpack.c.b16 %v907, %v906
        %v917 = vpack.c.b16 %v909, %v908
        %926 = vmatprep.subr.bf16.mxu0 0
        %927 = vmatpush1.bf16.msra.mxu0 %v910
        %928 = vmatprep.subr.bf16.mxu0 0
        %929 = vmatpush1.bf16.msra.mxu0 %v911
        %930 = vmatprep.subr.bf16.mxu0 0
        %931 = vmatpush1.bf16.msra.mxu0 %v912
        %932 = vmatprep.subr.bf16.mxu0 0
        %933 = vmatpush1.bf16.msra.mxu0 %v913
        %934 = vmatprep.subr.bf16.mxu0 0
        %935 = vmatpush1.bf16.msra.mxu0 %v914
        %936 = vmatprep.subr.bf16.mxu0 0
        %937 = vmatpush1.bf16.msra.mxu0 %v915
        %938 = vmatprep.subr.bf16.mxu0 0
        %939 = vmatpush1.bf16.msra.mxu0 %v916
        %940 = vmatprep.subr.bf16.mxu0 0
        %941 = vmatpush1.bf16.msra.mxu0 %v917
        %942 = vmatprep.subr.bf16.mxu0 0
        %943 = vmatpush1.bf16.msra.mxu0 0
        %944 = vmatprep.subr.bf16.mxu0 0
        %945 = vmatpush1.bf16.msra.mxu0 0
        %946 = vmatprep.subr.bf16.mxu0 0
        %947 = vmatpush1.bf16.msra.mxu0 0
        %948 = vmatprep.subr.bf16.mxu0 0
        %949 = vmatpush1.bf16.msra.mxu0 0
        %950 = vmatprep.subr.bf16.mxu0 0
        %951 = vmatpush1.bf16.msra.mxu0 0
        %952 = vmatprep.subr.bf16.mxu0 0
        %953 = vmatpush1.bf16.msra.mxu0 0
        %954 = vmatprep.subr.bf16.mxu0 0
        %955 = vmatpush1.bf16.msra.mxu0 0
        %956 = vmatprep.subr.bf16.mxu0 0
        %957 = vmatpush1.bf16.msra.mxu0 0
        %958 = vmatprep.mubr.bf16.mxu0 0
        %959 = vmatmul.mubr.bf16.gmra.mrb[0].mxu0 %v874
        %v960 = vpop.f32.mrb[0].mxu0
        %v961 = vadd.f32 %v612, %v960
        %v962 = vpop.f32.mrb[0].mxu0
        %v963 = vpop.f32.mrb[0].mxu0
        %v964 = vadd.f32 %v615, %v963
        %v965 = vpop.f32.mrb[0].mxu0
        %966 = vmatprep.mubr.bf16.mxu0 0
        %967 = vmatmul.mubr.bf16.gmra.mrb[0].mxu0 %v875
        %v968 = vpop.f32.mrb[0].mxu0
        %v969 = vadd.f32 %v620, %v968
        %v970 = vpop.f32.mrb[0].mxu0
        %v971 = vpop.f32.mrb[0].mxu0
        %v972 = vadd.f32 %v623, %v971
        %v973 = vpop.f32.mrb[0].mxu0
        %974 = vmatprep.mubr.bf16.mxu0 0
        %975 = vmatmul.mubr.bf16.gmra.mrb[0].mxu0 %v465
        %v976 = vpop.f32.mrb[0].mxu0
        %v977 = vadd.f32 %v628, %v976
        %v978 = vpop.f32.mrb[0].mxu0
        %v979 = vpop.f32.mrb[0].mxu0
        %v980 = vadd.f32 %v631, %v979
        %v981 = vpop.f32.mrb[0].mxu0
        %982 = vmatprep.mubr.bf16.mxu0 0
        %983 = vmatmul.mubr.bf16.gmra.mrb[0].mxu0 %v466
        %v984 = vpop.f32.mrb[0].mxu0
        %v985 = vadd.f32 %v636, %v984
        %v986 = vpop.f32.mrb[0].mxu0
        %v987 = vpop.f32.mrb[0].mxu0
        %v988 = vadd.f32 %v639, %v987
        %v989 = vpop.f32.mrb[0].mxu0
        %990 = vmatprep.mubr.bf16.mxu0 0
        %991 = vmatmul.mubr.bf16.gmra.mrb[0].mxu0 %v467
        %v992 = vpop.f32.mrb[0].mxu0
        %v993 = vadd.f32 %v644, %v992
        %v994 = vpop.f32.mrb[0].mxu0
        %v995 = vpop.f32.mrb[0].mxu0
        %v996 = vadd.f32 %v647, %v995
        %v997 = vpop.f32.mrb[0].mxu0
        %998 = vmatprep.mubr.bf16.mxu0 0
        %999 = vmatmul.mubr.bf16.gmra.mrb[0].mxu0 %v468
        %v1000 = vpop.f32.mrb[0].mxu0
        %v1001 = vadd.f32 %v652, %v1000
        %v1002 = vpop.f32.mrb[0].mxu0
        %v1003 = vpop.f32.mrb[0].mxu0
        %v1004 = vadd.f32 %v655, %v1003
        %v1005 = vpop.f32.mrb[0].mxu0
        %1006 = vmatprep.mubr.bf16.mxu0 0
        %1007 = vmatmul.mubr.bf16.gmra.mrb[0].mxu0 %v469
        %v1008 = vpop.f32.mrb[0].mxu0
        %v1009 = vadd.f32 %v660, %v1008
        %v1010 = vpop.f32.mrb[0].mxu0
        %v1011 = vpop.f32.mrb[0].mxu0
        %v1012 = vadd.f32 %v663, %v1011
        %v1013 = vpop.f32.mrb[0].mxu0
        %1014 = vmatprep.mubr.bf16.mxu0 0
        %1015 = vmatmul.mubr.bf16.gmra.mrb[0].mxu0 %v470
        %v1016 = vpop.f32.mrb[0].mxu0
        %v1017 = vadd.f32 %v668, %v1016
        %v1018 = vpop.f32.mrb[0].mxu0
        %v1019 = vpop.f32.mrb[0].mxu0
        %v1020 = vadd.f32 %v671, %v1019
        %v1021 = vpop.f32.mrb[0].mxu0
        %1022 = vmatprep.mubr.bf16.mxu0 0
        %1023 = vmatmul.mubr.bf16.gmra.mrb[0].mxu0 %v471
        %v1024 = vpop.f32.mrb[0].mxu0
        %v1025 = vadd.f32 %v676, %v1024
        %v1026 = vpop.f32.mrb[0].mxu0
        %v1027 = vpop.f32.mrb[0].mxu0
        %v1028 = vadd.f32 %v679, %v1027
        %v1029 = vpop.f32.mrb[0].mxu0
        %1030 = vmatprep.mubr.bf16.mxu0 0
        %1031 = vmatmul.mubr.bf16.gmra.mrb[0].mxu0 %v472
        %v1032 = vpop.f32.mrb[0].mxu0
        %v1033 = vadd.f32 %v684, %v1032
        %v1034 = vpop.f32.mrb[0].mxu0
        %v1035 = vpop.f32.mrb[0].mxu0
        %v1036 = vadd.f32 %v687, %v1035
        %v1037 = vpop.f32.mrb[0].mxu0
        %1038 = vmatprep.mubr.bf16.mxu0 0
        %1039 = vmatmul.mubr.bf16.gmra.mrb[0].mxu0 %v473
        %v1040 = vpop.f32.mrb[0].mxu0
        %v1041 = vadd.f32 %v692, %v1040
        %v1042 = vpop.f32.mrb[0].mxu0
        %v1043 = vpop.f32.mrb[0].mxu0
        %v1044 = vadd.f32 %v695, %v1043
        %v1045 = vpop.f32.mrb[0].mxu0
        %1046 = vmatprep.mubr.bf16.mxu0 0
        %1047 = vmatmul.mubr.bf16.gmra.mrb[0].mxu0 %v474
        %v1048 = vpop.f32.mrb[0].mxu0
        %v1049 = vadd.f32 %v700, %v1048
        %v1050 = vpop.f32.mrb[0].mxu0
        %v1051 = vpop.f32.mrb[0].mxu0
        %v1052 = vadd.f32 %v703, %v1051
        %v1053 = vpop.f32.mrb[0].mxu0
        %1054 = vmatprep.mubr.bf16.mxu0 0
        %1055 = vmatmul.mubr.bf16.gmra.mrb[0].mxu0 %v475
        %v1056 = vpop.f32.mrb[0].mxu0
        %v1057 = vadd.f32 %v708, %v1056
        %v1058 = vpop.f32.mrb[0].mxu0
        %v1059 = vpop.f32.mrb[0].mxu0
        %v1060 = vadd.f32 %v711, %v1059
        %v1061 = vpop.f32.mrb[0].mxu0
        %1062 = vmatprep.mubr.bf16.mxu0 0
        %1063 = vmatmul.mubr.bf16.gmra.mrb[0].mxu0 %v476
        %v1064 = vpop.f32.mrb[0].mxu0
        %v1065 = vadd.f32 %v716, %v1064
        %v1066 = vpop.f32.mrb[0].mxu0
        %v1067 = vpop.f32.mrb[0].mxu0
        %v1068 = vadd.f32 %v719, %v1067
        %v1069 = vpop.f32.mrb[0].mxu0
        %1070 = vmatprep.mubr.bf16.mxu0 0
        %1071 = vmatmul.mubr.bf16.gmra.mrb[0].mxu0 %v477
        %v1072 = vpop.f32.mrb[0].mxu0
        %v1073 = vadd.f32 %v724, %v1072
        %v1074 = vpop.f32.mrb[0].mxu0
        %v1075 = vpop.f32.mrb[0].mxu0
        %v1076 = vadd.f32 %v727, %v1075
        %v1077 = vpop.f32.mrb[0].mxu0
        %1078 = vmatprep.mubr.bf16.mxu0 0
        %1079 = vmatmul.mubr.bf16.gmra.mrb[0].mxu0 %v478
        %v1080 = vpop.f32.mrb[0].mxu0
        %v1081 = vadd.f32 %v732, %v1080
        %v1082 = vpop.f32.mrb[0].mxu0
        %v1083 = vpop.f32.mrb[0].mxu0
        %v1084 = vadd.f32 %v735, %v1083
        %v1085 = vpop.f32.mrb[0].mxu0
        %1086 = vmatprep.mubr.bf16.mxu0 0
        %1087 = vmatmul.mubr.bf16.gmra.mrb[0].mxu0 %v479
        %v1088 = vpop.f32.mrb[0].mxu0
        %v1089 = vadd.f32 %v740, %v1088
        %v1090 = vpop.f32.mrb[0].mxu0
        %v1091 = vpop.f32.mrb[0].mxu0
        %v1092 = vadd.f32 %v743, %v1091
        %v1093 = vpop.f32.mrb[0].mxu0
        %1094 = vmatprep.mubr.bf16.mxu0 0
        %1095 = vmatmul.mubr.bf16.gmra.mrb[0].mxu0 %v480
        %v1096 = vpop.f32.mrb[0].mxu0
        %v1097 = vadd.f32 %v748, %v1096
        %v1098 = vpop.f32.mrb[0].mxu0
        %v1099 = vpop.f32.mrb[0].mxu0
        %v1100 = vadd.f32 %v751, %v1099
        %v1101 = vpop.f32.mrb[0].mxu0
        %1102 = vmatprep.mubr.bf16.mxu0 0
        %1103 = vmatmul.mubr.bf16.gmra.mrb[0].mxu0 %v481
        %v1104 = vpop.f32.mrb[0].mxu0
        %v1105 = vadd.f32 %v756, %v1104
        %v1106 = vpop.f32.mrb[0].mxu0
        %v1107 = vpop.f32.mrb[0].mxu0
        %v1108 = vadd.f32 %v759, %v1107
        %v1109 = vpop.f32.mrb[0].mxu0
        %1110 = vmatprep.mubr.bf16.mxu0 0
        %1111 = vmatmul.mubr.bf16.gmra.mrb[0].mxu0 %v482
        %v1112 = vpop.f32.mrb[0].mxu0
        %v1113 = vadd.f32 %v764, %v1112
        %v1114 = vpop.f32.mrb[0].mxu0
        %v1115 = vpop.f32.mrb[0].mxu0
        %v1116 = vadd.f32 %v767, %v1115
        %v1117 = vpop.f32.mrb[0].mxu0
        %1118 = vmatprep.mubr.bf16.mxu0 0
        %1119 = vmatmul.mubr.bf16.gmra.mrb[0].mxu0 %v483
        %v1120 = vpop.f32.mrb[0].mxu0
        %v1121 = vadd.f32 %v772, %v1120
        %v1122 = vpop.f32.mrb[0].mxu0
        %v1123 = vpop.f32.mrb[0].mxu0
        %v1124 = vadd.f32 %v775, %v1123
        %v1125 = vpop.f32.mrb[0].mxu0
        %1126 = vmatprep.mubr.bf16.mxu0 0
        %1127 = vmatmul.mubr.bf16.gmra.mrb[0].mxu0 %v484
        %v1128 = vpop.f32.mrb[0].mxu0
        %v1129 = vadd.f32 %v780, %v1128
        %v1130 = vpop.f32.mrb[0].mxu0
        %v1131 = vpop.f32.mrb[0].mxu0
        %v1132 = vadd.f32 %v783, %v1131
        %v1133 = vpop.f32.mrb[0].mxu0
        %1134 = vmatprep.mubr.bf16.mxu0 0
        %1135 = vmatmul.mubr.bf16.gmra.mrb[0].mxu0 %v485
        %v1136 = vpop.f32.mrb[0].mxu0
        %v1137 = vadd.f32 %v788, %v1136
        %v1138 = vpop.f32.mrb[0].mxu0
        %v1139 = vpop.f32.mrb[0].mxu0
        %v1140 = vadd.f32 %v791, %v1139
        %v1141 = vpop.f32.mrb[0].mxu0
        %1142 = vmatprep.mubr.bf16.mxu0 0
        %1143 = vmatmul.mubr.bf16.gmra.mrb[0].mxu0 %v486
        %v1144 = vpop.f32.mrb[0].mxu0
        %v1145 = vadd.f32 %v796, %v1144
        %v1146 = vpop.f32.mrb[0].mxu0
        %v1147 = vpop.f32.mrb[0].mxu0
        %v1148 = vadd.f32 %v799, %v1147
        %v1149 = vpop.f32.mrb[0].mxu0
        %1150 = vmatprep.mubr.bf16.mxu0 0
        %1151 = vmatmul.mubr.bf16.gmra.mrb[0].mxu0 %v487
        %v1152 = vpop.f32.mrb[0].mxu0
        %v1153 = vadd.f32 %v804, %v1152
        %v1154 = vpop.f32.mrb[0].mxu0
        %v1155 = vpop.f32.mrb[0].mxu0
        %v1156 = vadd.f32 %v807, %v1155
        %v1157 = vpop.f32.mrb[0].mxu0
        %1158 = vmatprep.mubr.bf16.mxu0 0
        %1159 = vmatmul.mubr.bf16.gmra.mrb[0].mxu0 %v488
        %v1160 = vpop.f32.mrb[0].mxu0
        %v1161 = vadd.f32 %v812, %v1160
        %v1162 = vpop.f32.mrb[0].mxu0
        %v1163 = vpop.f32.mrb[0].mxu0
        %v1164 = vadd.f32 %v815, %v1163
        %v1165 = vpop.f32.mrb[0].mxu0
        %1166 = vmatprep.mubr.bf16.mxu0 0
        %1167 = vmatmul.mubr.bf16.gmra.mrb[0].mxu0 %v489
        %v1168 = vpop.f32.mrb[0].mxu0
        %v1169 = vadd.f32 %v820, %v1168
        %v1170 = vpop.f32.mrb[0].mxu0
        %v1171 = vpop.f32.mrb[0].mxu0
        %v1172 = vadd.f32 %v823, %v1171
        %v1173 = vpop.f32.mrb[0].mxu0
        %1174 = vmatprep.mubr.bf16.mxu0 0
        %1175 = vmatmul.mubr.bf16.gmra.mrb[0].mxu0 %v490
        %v1176 = vpop.f32.mrb[0].mxu0
        %v1177 = vadd.f32 %v828, %v1176
        %v1178 = vpop.f32.mrb[0].mxu0
        %v1179 = vpop.f32.mrb[0].mxu0
        %v1180 = vadd.f32 %v831, %v1179
        %v1181 = vpop.f32.mrb[0].mxu0
        %1182 = vmatprep.mubr.bf16.mxu0 0
        %1183 = vmatmul.mubr.bf16.gmra.mrb[0].mxu0 %v491
        %v1184 = vpop.f32.mrb[0].mxu0
        %v1185 = vadd.f32 %v836, %v1184
        %v1186 = vpop.f32.mrb[0].mxu0
        %v1187 = vpop.f32.mrb[0].mxu0
        %v1188 = vadd.f32 %v839, %v1187
        %v1189 = vpop.f32.mrb[0].mxu0
        %1190 = vmatprep.mubr.bf16.mxu0 0
        %1191 = vmatmul.mubr.bf16.gmra.mrb[0].mxu0 %v492
        %v1192 = vpop.f32.mrb[0].mxu0
        %v1193 = vadd.f32 %v844, %v1192
        %v1194 = vpop.f32.mrb[0].mxu0
        %v1195 = vpop.f32.mrb[0].mxu0
        %v1196 = vadd.f32 %v847, %v1195
        %v1197 = vpop.f32.mrb[0].mxu0
        %1198 = vmatprep.mubr.bf16.mxu0 0
        %1199 = vmatmul.mubr.bf16.gmra.mrb[0].mxu0 %v493
        %v1200 = vpop.f32.mrb[0].mxu0
        %v1201 = vadd.f32 %v852, %v1200
        %v1202 = vpop.f32.mrb[0].mxu0
        %v1203 = vpop.f32.mrb[0].mxu0
        %v1204 = vadd.f32 %v855, %v1203
        %v1205 = vpop.f32.mrb[0].mxu0
        %1206 = vmatprep.mubr.bf16.mxu0 0
        %1207 = vmatmul.mubr.bf16.gmra.mrb[0].mxu0 %v494
        %v1208 = vpop.f32.mrb[0].mxu0
        %v1209 = vadd.f32 %v860, %v1208
        %v1210 = vpop.f32.mrb[0].mxu0
        %v1211 = vpop.f32.mrb[0].mxu0
        %v1212 = vadd.f32 %v863, %v1211
        %v1213 = vpop.f32.mrb[0].mxu0
        %1214 = vdwg.mxu0
        %v1215 = vld [vmem:[%s203 + $0x20] sm:$0xf]
        %v1216 = vld [vmem:[%s203 + $0x24] sm:$0xf]
        %v1217 = vld [vmem:[%s203 + $0x28] sm:$0xf]
        %v1218 = vld [vmem:[%s203 + $0x2c] sm:$0xf]
        %v1219 = vld [vmem:[%s203 + $0x30] sm:$0xf]
        %v1220 = vld [vmem:[%s203 + $0x34] sm:$0xf]
        %v1221 = vld [vmem:[%s203 + $0x38] sm:$0xf]
        %v1222 = vld [vmem:[%s203 + $0x3c] sm:$0xf]
        %v1223 = vld [vmem:[%s203 + $0x40] sm:$0xf]
        %v1224 = vld [vmem:[%s203 + $0x44] sm:$0xf]
        %v1225 = vld [vmem:[%s203 + $0x48] sm:$0xf]
        %v1226 = vld [vmem:[%s203 + $0x4c] sm:$0xf]
        %v1227 = vld [vmem:[%s203 + $0x50] sm:$0xf]
        %v1228 = vld [vmem:[%s203 + $0x54] sm:$0xf]
        %v1229 = vld [vmem:[%s203 + $0x58] sm:$0xf]
        %v1230 = vld [vmem:[%s203 + $0x5c] sm:$0xf]
        %v1231 = vld [vmem:[%s203 + $0x60] sm:$0xf]
        %v1232 = vld [vmem:[%s203 + $0x64] sm:$0xf]
        %v1233 = vld [vmem:[%s203 + $0x68] sm:$0xf]
        %v1234 = vld [vmem:[%s203 + $0x6c] sm:$0xf]
        %v1235 = vld [vmem:[%s203 + $0x70] sm:$0xf]
        %v1236 = vld [vmem:[%s203 + $0x74] sm:$0xf]
        %v1237 = vld [vmem:[%s203 + $0x78] sm:$0xf]
        %v1238 = vld [vmem:[%s203 + $0x7c] sm:$0xf]
        %v1239 = vld [vmem:[%s203 + $0x80] sm:$0xf]
        %v1240 = vld [vmem:[%s203 + $0x84] sm:$0xf]
        %v1241 = vld [vmem:[%s203 + $0x88] sm:$0xf]
        %v1242 = vld [vmem:[%s203 + $0x8c] sm:$0xf]
        %v1243 = vld [vmem:[%s203 + $0x90] sm:$0xf]
        %v1244 = vld [vmem:[%s203 + $0x94] sm:$0xf]
        %v1245 = vld [vmem:[%s203 + $0x98] sm:$0xf]
        %v1246 = vld [vmem:[%s203 + $0x9c] sm:$0xf]
        %v1247 = vld [vmem:[%s203 + $0xa0] sm:$0xf]
        %v1248 = vld [vmem:[%s203 + $0xa4] sm:$0xf]
        %v1249 = vld [vmem:[%s203 + $0xa8] sm:$0xf]
        %v1250 = vld [vmem:[%s203 + $0xac] sm:$0xf]
        %v1251 = vld [vmem:[%s203 + $0xb0] sm:$0xf]
        %v1252 = vld [vmem:[%s203 + $0xb4] sm:$0xf]
        %v1253 = vld [vmem:[%s203 + $0xb8] sm:$0xf]
        %v1254 = vld [vmem:[%s203 + $0xbc] sm:$0xf]
        %v1255 = vld [vmem:[%s203 + $0xc0] sm:$0xf]
        %v1256 = vld [vmem:[%s203 + $0xc4] sm:$0xf]
        %v1257 = vld [vmem:[%s203 + $0xc8] sm:$0xf]
        %v1258 = vld [vmem:[%s203 + $0xcc] sm:$0xf]
        %v1259 = vld [vmem:[%s203 + $0xd0] sm:$0xf]
        %v1260 = vld [vmem:[%s203 + $0xd4] sm:$0xf]
        %v1261 = vld [vmem:[%s203 + $0xd8] sm:$0xf]
        %v1262 = vld [vmem:[%s203 + $0xdc] sm:$0xf]
        %v1263 = vld [vmem:[%s203 + $0xe0] sm:$0xf]
        %v1264 = vld [vmem:[%s203 + $0xe4] sm:$0xf]
        %v1265 = vld [vmem:[%s203 + $0xe8] sm:$0xf]
        %v1266 = vld [vmem:[%s203 + $0xec] sm:$0xf]
        %v1267 = vld [vmem:[%s203 + $0xf0] sm:$0xf]
        %v1268 = vld [vmem:[%s203 + $0xf4] sm:$0xf]
        %v1269 = vld [vmem:[%s203 + $0xf8] sm:$0xf]
        %v1270 = vld [vmem:[%s203 + $0xfc] sm:$0xf]
        %v1271 = vld [vmem:[%s203 + $0x100] sm:$0xf]
        %v1272 = vld [vmem:[%s203 + $0x104] sm:$0xf]
        %v1273 = vld [vmem:[%s203 + $0x108] sm:$0xf]
        %v1274 = vld [vmem:[%s203 + $0x10c] sm:$0xf]
        %v1275 = vld [vmem:[%s203 + $0x110] sm:$0xf]
        %v1276 = vld [vmem:[%s203 + $0x114] sm:$0xf]
        %v1277 = vld [vmem:[%s203 + $0x118] sm:$0xf]
        %v1278 = vld [vmem:[%s203 + $0x11c] sm:$0xf]
        %s1279 = scalar_lea.vmem [#allocation5], 128
        %v1280 = vld [vmem:[%s1279] sm:$0xf]
        %v1281 = vld [vmem:[%s1279 + $0x4] sm:$0xf]
        %v1282 = vld [vmem:[%s1279 + $0x8] sm:$0xf]
        %v1283 = vld [vmem:[%s1279 + $0xc] sm:$0xf]
        %v1284 = vld [vmem:[%s1279 + $0x10] sm:$0xf]
        %v1285 = vld [vmem:[%s1279 + $0x14] sm:$0xf]
        %v1286 = vld [vmem:[%s1279 + $0x18] sm:$0xf]
        %v1287 = vld [vmem:[%s1279 + $0x1c] sm:$0xf]
        %v1288 = vld [vmem:[%s1279 + $0x20] sm:$0xf]
        %v1289 = vld [vmem:[%s1279 + $0x24] sm:$0xf]
        %v1290 = vld [vmem:[%s1279 + $0x28] sm:$0xf]
        %v1291 = vld [vmem:[%s1279 + $0x2c] sm:$0xf]
        %v1292 = vld [vmem:[%s1279 + $0x30] sm:$0xf]
        %v1293 = vld [vmem:[%s1279 + $0x34] sm:$0xf]
        %v1294 = vld [vmem:[%s1279 + $0x38] sm:$0xf]
        %v1295 = vld [vmem:[%s1279 + $0x3c] sm:$0xf]
        %v1360 = vunpack.c.l.b16 %v1215
        %v1361 = vunpack.c.l.b16 %v1216
        %v1362 = vunpack.c.l.b16 %v1217
        %v1363 = vunpack.c.l.b16 %v1218
        %v1364 = vunpack.c.l.b16 %v1219
        %v1365 = vunpack.c.l.b16 %v1220
        %v1366 = vunpack.c.l.b16 %v1221
        %v1367 = vunpack.c.l.b16 %v1222
        %v1368 = vunpack.c.l.b16 %v1223
        %v1369 = vunpack.c.l.b16 %v1224
        %v1370 = vunpack.c.l.b16 %v1225
        %v1371 = vunpack.c.l.b16 %v1226
        %v1372 = vunpack.c.l.b16 %v1227
        %v1373 = vunpack.c.l.b16 %v1228
        %v1374 = vunpack.c.l.b16 %v1229
        %v1375 = vunpack.c.l.b16 %v1230
        %v1376 = vunpack.c.l.b16 %v1231
        %v1377 = vunpack.c.l.b16 %v1232
        %v1378 = vunpack.c.l.b16 %v1233
        %v1379 = vunpack.c.l.b16 %v1234
        %v1380 = vunpack.c.l.b16 %v1235
        %v1381 = vunpack.c.l.b16 %v1236
        %v1382 = vunpack.c.l.b16 %v1237
        %v1383 = vunpack.c.l.b16 %v1238
        %v1384 = vunpack.c.l.b16 %v1239
        %v1385 = vunpack.c.l.b16 %v1240
        %v1386 = vunpack.c.l.b16 %v1241
        %v1387 = vunpack.c.l.b16 %v1242
        %v1388 = vunpack.c.l.b16 %v1243
        %v1389 = vunpack.c.l.b16 %v1244
        %v1390 = vunpack.c.l.b16 %v1245
        %v1391 = vunpack.c.l.b16 %v1246
        %v1392 = vunpack.c.l.b16 %v1247
        %v1393 = vunpack.c.l.b16 %v1248
        %v1394 = vunpack.c.l.b16 %v1249
        %v1395 = vunpack.c.l.b16 %v1250
        %v1396 = vunpack.c.l.b16 %v1251
        %v1397 = vunpack.c.l.b16 %v1252
        %v1398 = vunpack.c.l.b16 %v1253
        %v1399 = vunpack.c.l.b16 %v1254
        %v1400 = vunpack.c.l.b16 %v1255
        %v1401 = vunpack.c.l.b16 %v1256
        %v1402 = vunpack.c.l.b16 %v1257
        %v1403 = vunpack.c.l.b16 %v1258
        %v1404 = vunpack.c.l.b16 %v1259
        %v1405 = vunpack.c.l.b16 %v1260
        %v1406 = vunpack.c.l.b16 %v1261
        %v1407 = vunpack.c.l.b16 %v1262
        %v1408 = vunpack.c.l.b16 %v1263
        %v1409 = vunpack.c.l.b16 %v1264
        %v1410 = vunpack.c.l.b16 %v1265
        %v1411 = vunpack.c.l.b16 %v1266
        %v1412 = vunpack.c.l.b16 %v1267
        %v1413 = vunpack.c.l.b16 %v1268
        %v1414 = vunpack.c.l.b16 %v1269
        %v1415 = vunpack.c.l.b16 %v1270
        %v1416 = vunpack.c.l.b16 %v1271
        %v1417 = vunpack.c.l.b16 %v1272
        %v1418 = vunpack.c.l.b16 %v1273
        %v1419 = vunpack.c.l.b16 %v1274
        %v1420 = vunpack.c.l.b16 %v1275
        %v1421 = vunpack.c.l.b16 %v1276
        %v1422 = vunpack.c.l.b16 %v1277
        %v1423 = vunpack.c.l.b16 %v1278
        %v1424 = vpack.c.b16 %v1361, %v1360
        %v1425 = vpack.c.b16 %v1363, %v1362
        %v1426 = vpack.c.b16 %v1365, %v1364
        %v1427 = vpack.c.b16 %v1367, %v1366
        %v1428 = vpack.c.b16 %v1369, %v1368
        %v1429 = vpack.c.b16 %v1371, %v1370
        %v1430 = vpack.c.b16 %v1373, %v1372
        %v1431 = vpack.c.b16 %v1375, %v1374
        %v1432 = vpack.c.b16 %v1377, %v1376
        %v1433 = vpack.c.b16 %v1379, %v1378
        %v1434 = vpack.c.b16 %v1381, %v1380
        %v1435 = vpack.c.b16 %v1383, %v1382
        %v1436 = vpack.c.b16 %v1385, %v1384
        %v1437 = vpack.c.b16 %v1387, %v1386
        %v1438 = vpack.c.b16 %v1389, %v1388
        %v1439 = vpack.c.b16 %v1391, %v1390
        %v1440 = vpack.c.b16 %v1393, %v1392
        %v1441 = vpack.c.b16 %v1395, %v1394
        %v1442 = vpack.c.b16 %v1397, %v1396
        %v1443 = vpack.c.b16 %v1399, %v1398
        %v1444 = vpack.c.b16 %v1401, %v1400
        %v1445 = vpack.c.b16 %v1403, %v1402
        %v1446 = vpack.c.b16 %v1405, %v1404
        %v1447 = vpack.c.b16 %v1407, %v1406
        %v1448 = vpack.c.b16 %v1409, %v1408
        %v1449 = vpack.c.b16 %v1411, %v1410
        %v1450 = vpack.c.b16 %v1413, %v1412
        %v1451 = vpack.c.b16 %v1415, %v1414
        %v1452 = vpack.c.b16 %v1417, %v1416
        %v1453 = vpack.c.b16 %v1419, %v1418
        %v1454 = vpack.c.b16 %v1421, %v1420
        %v1455 = vpack.c.b16 %v1423, %v1422
        %v1504 = vunpack.c.l.b16 %v1280
        %v1505 = vunpack.c.l.b16 %v1281
        %v1506 = vunpack.c.l.b16 %v1282
        %v1507 = vunpack.c.l.b16 %v1283
        %v1508 = vunpack.c.l.b16 %v1284
        %v1509 = vunpack.c.l.b16 %v1285
        %v1510 = vunpack.c.l.b16 %v1286
        %v1511 = vunpack.c.l.b16 %v1287
        %v1512 = vunpack.c.l.b16 %v1288
        %v1513 = vunpack.c.l.b16 %v1289
        %v1514 = vunpack.c.l.b16 %v1290
        %v1515 = vunpack.c.l.b16 %v1291
        %v1516 = vunpack.c.l.b16 %v1292
        %v1517 = vunpack.c.l.b16 %v1293
        %v1518 = vunpack.c.l.b16 %v1294
        %v1519 = vunpack.c.l.b16 %v1295
        %v1520 = vpack.c.b16 %v1505, %v1504
        %v1521 = vpack.c.b16 %v1507, %v1506
        %v1522 = vpack.c.b16 %v1509, %v1508
        %v1523 = vpack.c.b16 %v1511, %v1510
        %v1524 = vpack.c.b16 %v1513, %v1512
        %v1525 = vpack.c.b16 %v1515, %v1514
        %v1526 = vpack.c.b16 %v1517, %v1516
        %v1527 = vpack.c.b16 %v1519, %v1518
        %1536 = vmatprep.subr.bf16.mxu0 0
        %1537 = vmatpush1.bf16.msra.mxu0 %v1520
        %1538 = vmatprep.subr.bf16.mxu0 0
        %1539 = vmatpush1.bf16.msra.mxu0 %v1521
        %1540 = vmatprep.subr.bf16.mxu0 0
        %1541 = vmatpush1.bf16.msra.mxu0 %v1522
        %1542 = vmatprep.subr.bf16.mxu0 0
        %1543 = vmatpush1.bf16.msra.mxu0 %v1523
        %1544 = vmatprep.subr.bf16.mxu0 0
        %1545 = vmatpush1.bf16.msra.mxu0 %v1524
        %1546 = vmatprep.subr.bf16.mxu0 0
        %1547 = vmatpush1.bf16.msra.mxu0 %v1525
        %1548 = vmatprep.subr.bf16.mxu0 0
        %1549 = vmatpush1.bf16.msra.mxu0 %v1526
        %1550 = vmatprep.subr.bf16.mxu0 0
        %1551 = vmatpush1.bf16.msra.mxu0 %v1527
        %1552 = vmatprep.subr.bf16.mxu0 0
        %1553 = vmatpush1.bf16.msra.mxu0 0
        %1554 = vmatprep.subr.bf16.mxu0 0
        %1555 = vmatpush1.bf16.msra.mxu0 0
        %1556 = vmatprep.subr.bf16.mxu0 0
        %1557 = vmatpush1.bf16.msra.mxu0 0
        %1558 = vmatprep.subr.bf16.mxu0 0
        %1559 = vmatpush1.bf16.msra.mxu0 0
        %1560 = vmatprep.subr.bf16.mxu0 0
        %1561 = vmatpush1.bf16.msra.mxu0 0
        %1562 = vmatprep.subr.bf16.mxu0 0
        %1563 = vmatpush1.bf16.msra.mxu0 0
        %1564 = vmatprep.subr.bf16.mxu0 0
        %1565 = vmatpush1.bf16.msra.mxu0 0
        %1566 = vmatprep.subr.bf16.mxu0 0
        %1567 = vmatpush1.bf16.msra.mxu0 0
        %1568 = vmatprep.mubr.bf16.mxu0 0
        %1569 = vmatmul.mubr.bf16.gmra.mrb[0].mxu0 %v1424
        %v1570 = vpop.f32.mrb[0].mxu0
        %v1571 = vadd.f32 0.0, %v1570
        %v1572 = vpop.f32.mrb[0].mxu0
        %v1573 = vpop.f32.mrb[0].mxu0
        %v1574 = vadd.f32 0.0, %v1573
        %v1575 = vpop.f32.mrb[0].mxu0
        %1576 = vmatprep.mubr.bf16.mxu0 0
        %1577 = vmatmul.mubr.bf16.gmra.mrb[0].mxu0 %v1425
        %v1578 = vpop.f32.mrb[0].mxu0
        %v1579 = vadd.f32 0.0, %v1578
        %v1580 = vpop.f32.mrb[0].mxu0
        %v1581 = vpop.f32.mrb[0].mxu0
        %v1582 = vadd.f32 0.0, %v1581
        %v1583 = vpop.f32.mrb[0].mxu0
        %1584 = vmatprep.mubr.bf16.mxu0 0
        %1585 = vmatmul.mubr.bf16.gmra.mrb[0].mxu0 %v1426
        %v1586 = vpop.f32.mrb[0].mxu0
        %v1587 = vadd.f32 0.0, %v1586
        %v1588 = vpop.f32.mrb[0].mxu0
        %v1589 = vpop.f32.mrb[0].mxu0
        %v1590 = vadd.f32 0.0, %v1589
        %v1591 = vpop.f32.mrb[0].mxu0
        %1592 = vmatprep.mubr.bf16.mxu0 0
        %1593 = vmatmul.mubr.bf16.gmra.mrb[0].mxu0 %v1427
        %v1594 = vpop.f32.mrb[0].mxu0
        %v1595 = vadd.f32 0.0, %v1594
        %v1596 = vpop.f32.mrb[0].mxu0
        %v1597 = vpop.f32.mrb[0].mxu0
        %v1598 = vadd.f32 0.0, %v1597
        %v1599 = vpop.f32.mrb[0].mxu0
        %1600 = vmatprep.mubr.bf16.mxu0 0
        %1601 = vmatmul.mubr.bf16.gmra.mrb[0].mxu0 %v1428
        %v1602 = vpop.f32.mrb[0].mxu0
        %v1603 = vadd.f32 0.0, %v1602
        %v1604 = vpop.f32.mrb[0].mxu0
        %v1605 = vpop.f32.mrb[0].mxu0
        %v1606 = vadd.f32 0.0, %v1605
        %v1607 = vpop.f32.mrb[0].mxu0
        %1608 = vmatprep.mubr.bf16.mxu0 0
        %1609 = vmatmul.mubr.bf16.gmra.mrb[0].mxu0 %v1429
        %v1610 = vpop.f32.mrb[0].mxu0
        %v1611 = vadd.f32 0.0, %v1610
        %v1612 = vpop.f32.mrb[0].mxu0
        %v1613 = vpop.f32.mrb[0].mxu0
        %v1614 = vadd.f32 0.0, %v1613
        %v1615 = vpop.f32.mrb[0].mxu0
        %1616 = vmatprep.mubr.bf16.mxu0 0
        %1617 = vmatmul.mubr.bf16.gmra.mrb[0].mxu0 %v1430
        %v1618 = vpop.f32.mrb[0].mxu0
        %v1619 = vadd.f32 0.0, %v1618
        %v1620 = vpop.f32.mrb[0].mxu0
        %v1621 = vpop.f32.mrb[0].mxu0
        %v1622 = vadd.f32 0.0, %v1621
        %v1623 = vpop.f32.mrb[0].mxu0
        %1624 = vmatprep.mubr.bf16.mxu0 0
        %1625 = vmatmul.mubr.bf16.gmra.mrb[0].mxu0 %v1431
        %v1626 = vpop.f32.mrb[0].mxu0
        %v1627 = vadd.f32 0.0, %v1626
        %v1628 = vpop.f32.mrb[0].mxu0
        %v1629 = vpop.f32.mrb[0].mxu0
        %v1630 = vadd.f32 0.0, %v1629
        %v1631 = vpop.f32.mrb[0].mxu0
        %1632 = vmatprep.mubr.bf16.mxu0 0
        %1633 = vmatmul.mubr.bf16.gmra.mrb[0].mxu0 %v1432
        %v1634 = vpop.f32.mrb[0].mxu0
        %v1635 = vadd.f32 0.0, %v1634
        %v1636 = vpop.f32.mrb[0].mxu0
        %v1637 = vpop.f32.mrb[0].mxu0
        %v1638 = vadd.f32 0.0, %v1637
        %v1639 = vpop.f32.mrb[0].mxu0
        %1640 = vmatprep.mubr.bf16.mxu0 0
        %1641 = vmatmul.mubr.bf16.gmra.mrb[0].mxu0 %v1433
        %v1642 = vpop.f32.mrb[0].mxu0
        %v1643 = vadd.f32 0.0, %v1642
        %v1644 = vpop.f32.mrb[0].mxu0
        %v1645 = vpop.f32.mrb[0].mxu0
        %v1646 = vadd.f32 0.0, %v1645
        %v1647 = vpop.f32.mrb[0].mxu0
        %1648 = vmatprep.mubr.bf16.mxu0 0
        %1649 = vmatmul.mubr.bf16.gmra.mrb[0].mxu0 %v1434
        %v1650 = vpop.f32.mrb[0].mxu0
        %v1651 = vadd.f32 0.0, %v1650
        %v1652 = vpop.f32.mrb[0].mxu0
        %v1653 = vpop.f32.mrb[0].mxu0
        %v1654 = vadd.f32 0.0, %v1653
        %v1655 = vpop.f32.mrb[0].mxu0
        %1656 = vmatprep.mubr.bf16.mxu0 0
        %1657 = vmatmul.mubr.bf16.gmra.mrb[0].mxu0 %v1435
        %v1658 = vpop.f32.mrb[0].mxu0
        %v1659 = vadd.f32 0.0, %v1658
        %v1660 = vpop.f32.mrb[0].mxu0
        %v1661 = vpop.f32.mrb[0].mxu0
        %v1662 = vadd.f32 0.0, %v1661
        %v1663 = vpop.f32.mrb[0].mxu0
        %1664 = vmatprep.mubr.bf16.mxu0 0
        %1665 = vmatmul.mubr.bf16.gmra.mrb[0].mxu0 %v1436
        %v1666 = vpop.f32.mrb[0].mxu0
        %v1667 = vadd.f32 0.0, %v1666
        %v1668 = vpop.f32.mrb[0].mxu0
        %v1669 = vpop.f32.mrb[0].mxu0
        %v1670 = vadd.f32 0.0, %v1669
        %v1671 = vpop.f32.mrb[0].mxu0
        %1672 = vmatprep.mubr.bf16.mxu0 0
        %1673 = vmatmul.mubr.bf16.gmra.mrb[0].mxu0 %v1437
        %v1674 = vpop.f32.mrb[0].mxu0
        %v1675 = vadd.f32 0.0, %v1674
        %v1676 = vpop.f32.mrb[0].mxu0
        %v1677 = vpop.f32.mrb[0].mxu0
        %v1678 = vadd.f32 0.0, %v1677
        %v1679 = vpop.f32.mrb[0].mxu0
        %1680 = vmatprep.mubr.bf16.mxu0 0
        %1681 = vmatmul.mubr.bf16.gmra.mrb[0].mxu0 %v1438
        %v1682 = vpop.f32.mrb[0].mxu0
        %v1683 = vadd.f32 0.0, %v1682
        %v1684 = vpop.f32.mrb[0].mxu0
        %v1685 = vpop.f32.mrb[0].mxu0
        %v1686 = vadd.f32 0.0, %v1685
        %v1687 = vpop.f32.mrb[0].mxu0
        %1688 = vmatprep.mubr.bf16.mxu0 0
        %1689 = vmatmul.mubr.bf16.gmra.mrb[0].mxu0 %v1439
        %v1690 = vpop.f32.mrb[0].mxu0
        %v1691 = vadd.f32 0.0, %v1690
        %v1692 = vpop.f32.mrb[0].mxu0
        %v1693 = vpop.f32.mrb[0].mxu0
        %v1694 = vadd.f32 0.0, %v1693
        %v1695 = vpop.f32.mrb[0].mxu0
        %1696 = vmatprep.mubr.bf16.mxu0 0
        %1697 = vmatmul.mubr.bf16.gmra.mrb[0].mxu0 %v1440
        %v1698 = vpop.f32.mrb[0].mxu0
        %v1699 = vadd.f32 0.0, %v1698
        %v1700 = vpop.f32.mrb[0].mxu0
        %v1701 = vpop.f32.mrb[0].mxu0
        %v1702 = vadd.f32 0.0, %v1701
        %v1703 = vpop.f32.mrb[0].mxu0
        %1704 = vmatprep.mubr.bf16.mxu0 0
        %1705 = vmatmul.mubr.bf16.gmra.mrb[0].mxu0 %v1441
        %v1706 = vpop.f32.mrb[0].mxu0
        %v1707 = vadd.f32 0.0, %v1706
        %v1708 = vpop.f32.mrb[0].mxu0
        %v1709 = vpop.f32.mrb[0].mxu0
        %v1710 = vadd.f32 0.0, %v1709
        %v1711 = vpop.f32.mrb[0].mxu0
        %1712 = vmatprep.mubr.bf16.mxu0 0
        %1713 = vmatmul.mubr.bf16.gmra.mrb[0].mxu0 %v1442
        %v1714 = vpop.f32.mrb[0].mxu0
        %v1715 = vadd.f32 0.0, %v1714
        %v1716 = vpop.f32.mrb[0].mxu0
        %v1717 = vpop.f32.mrb[0].mxu0
        %v1718 = vadd.f32 0.0, %v1717
        %v1719 = vpop.f32.mrb[0].mxu0
        %1720 = vmatprep.mubr.bf16.mxu0 0
        %1721 = vmatmul.mubr.bf16.gmra.mrb[0].mxu0 %v1443
        %v1722 = vpop.f32.mrb[0].mxu0
        %v1723 = vadd.f32 0.0, %v1722
        %v1724 = vpop.f32.mrb[0].mxu0
        %v1725 = vpop.f32.mrb[0].mxu0
        %v1726 = vadd.f32 0.0, %v1725
        %v1727 = vpop.f32.mrb[0].mxu0
        %1728 = vmatprep.mubr.bf16.mxu0 0
        %1729 = vmatmul.mubr.bf16.gmra.mrb[0].mxu0 %v1444
        %v1730 = vpop.f32.mrb[0].mxu0
        %v1731 = vadd.f32 0.0, %v1730
        %v1732 = vpop.f32.mrb[0].mxu0
        %v1733 = vpop.f32.mrb[0].mxu0
        %v1734 = vadd.f32 0.0, %v1733
        %v1735 = vpop.f32.mrb[0].mxu0
        %1736 = vmatprep.mubr.bf16.mxu0 0
        %1737 = vmatmul.mubr.bf16.gmra.mrb[0].mxu0 %v1445
        %v1738 = vpop.f32.mrb[0].mxu0
        %v1739 = vadd.f32 0.0, %v1738
        %v1740 = vpop.f32.mrb[0].mxu0
        %v1741 = vpop.f32.mrb[0].mxu0
        %v1742 = vadd.f32 0.0, %v1741
        %v1743 = vpop.f32.mrb[0].mxu0
        %1744 = vmatprep.mubr.bf16.mxu0 0
        %1745 = vmatmul.mubr.bf16.gmra.mrb[0].mxu0 %v1446
        %v1746 = vpop.f32.mrb[0].mxu0
        %v1747 = vadd.f32 0.0, %v1746
        %v1748 = vpop.f32.mrb[0].mxu0
        %v1749 = vpop.f32.mrb[0].mxu0
        %v1750 = vadd.f32 0.0, %v1749
        %v1751 = vpop.f32.mrb[0].mxu0
        %1752 = vmatprep.mubr.bf16.mxu0 0
        %1753 = vmatmul.mubr.bf16.gmra.mrb[0].mxu0 %v1447
        %v1754 = vpop.f32.mrb[0].mxu0
        %v1755 = vadd.f32 0.0, %v1754
        %v1756 = vpop.f32.mrb[0].mxu0
        %v1757 = vpop.f32.mrb[0].mxu0
        %v1758 = vadd.f32 0.0, %v1757
        %v1759 = vpop.f32.mrb[0].mxu0
        %1760 = vmatprep.mubr.bf16.mxu0 0
        %1761 = vmatmul.mubr.bf16.gmra.mrb[0].mxu0 %v1448
        %v1762 = vpop.f32.mrb[0].mxu0
        %v1763 = vadd.f32 0.0, %v1762
        %v1764 = vpop.f32.mrb[0].mxu0
        %v1765 = vpop.f32.mrb[0].mxu0
        %v1766 = vadd.f32 0.0, %v1765
        %v1767 = vpop.f32.mrb[0].mxu0
        %1768 = vmatprep.mubr.bf16.mxu0 0
        %1769 = vmatmul.mubr.bf16.gmra.mrb[0].mxu0 %v1449
        %v1770 = vpop.f32.mrb[0].mxu0
        %v1771 = vadd.f32 0.0, %v1770
        %v1772 = vpop.f32.mrb[0].mxu0
        %v1773 = vpop.f32.mrb[0].mxu0
        %v1774 = vadd.f32 0.0, %v1773
        %v1775 = vpop.f32.mrb[0].mxu0
        %1776 = vmatprep.mubr.bf16.mxu0 0
        %1777 = vmatmul.mubr.bf16.gmra.mrb[0].mxu0 %v1450
        %v1778 = vpop.f32.mrb[0].mxu0
        %v1779 = vadd.f32 0.0, %v1778
        %v1780 = vpop.f32.mrb[0].mxu0
        %v1781 = vpop.f32.mrb[0].mxu0
        %v1782 = vadd.f32 0.0, %v1781
        %v1783 = vpop.f32.mrb[0].mxu0
        %1784 = vmatprep.mubr.bf16.mxu0 0
        %1785 = vmatmul.mubr.bf16.gmra.mrb[0].mxu0 %v1451
        %v1786 = vpop.f32.mrb[0].mxu0
        %v1787 = vadd.f32 0.0, %v1786
        %v1788 = vpop.f32.mrb[0].mxu0
        %v1789 = vpop.f32.mrb[0].mxu0
        %v1790 = vadd.f32 0.0, %v1789
        %v1791 = vpop.f32.mrb[0].mxu0
        %1792 = vmatprep.mubr.bf16.mxu0 0
        %1793 = vmatmul.mubr.bf16.gmra.mrb[0].mxu0 %v1452
        %v1794 = vpop.f32.mrb[0].mxu0
        %v1795 = vadd.f32 0.0, %v1794
        %v1796 = vpop.f32.mrb[0].mxu0
        %v1797 = vpop.f32.mrb[0].mxu0
        %v1798 = vadd.f32 0.0, %v1797
        %v1799 = vpop.f32.mrb[0].mxu0
        %1800 = vmatprep.mubr.bf16.mxu0 0
        %1801 = vmatmul.mubr.bf16.gmra.mrb[0].mxu0 %v1453
        %v1802 = vpop.f32.mrb[0].mxu0
        %v1803 = vadd.f32 0.0, %v1802
        %v1804 = vpop.f32.mrb[0].mxu0
        %v1805 = vpop.f32.mrb[0].mxu0
        %v1806 = vadd.f32 0.0, %v1805
        %v1807 = vpop.f32.mrb[0].mxu0
        %1808 = vmatprep.mubr.bf16.mxu0 0
        %1809 = vmatmul.mubr.bf16.gmra.mrb[0].mxu0 %v1454
        %v1810 = vpop.f32.mrb[0].mxu0
        %v1811 = vadd.f32 0.0, %v1810
        %v1812 = vpop.f32.mrb[0].mxu0
        %v1813 = vpop.f32.mrb[0].mxu0
        %v1814 = vadd.f32 0.0, %v1813
        %v1815 = vpop.f32.mrb[0].mxu0
        %1816 = vmatprep.mubr.bf16.mxu0 0
        %1817 = vmatmul.mubr.bf16.gmra.mrb[0].mxu0 %v1455
        %v1818 = vpop.f32.mrb[0].mxu0
        %v1819 = vadd.f32 0.0, %v1818
        %v1820 = vpop.f32.mrb[0].mxu0
        %v1821 = vpop.f32.mrb[0].mxu0
        %v1822 = vadd.f32 0.0, %v1821
        %v1823 = vpop.f32.mrb[0].mxu0
        %1824 = vdwg.mxu0
        %v1825 = vadd.f32 %v961, %v1571
        %v1826 = vadd.f32 %v964, %v1574
        %v1827 = vadd.f32 %v969, %v1579
        %v1828 = vadd.f32 %v972, %v1582
        %v1829 = vadd.f32 %v977, %v1587
        %v1830 = vadd.f32 %v980, %v1590
        %v1831 = vadd.f32 %v985, %v1595
        %v1832 = vadd.f32 %v988, %v1598
        %v1833 = vadd.f32 %v993, %v1603
        %v1834 = vadd.f32 %v996, %v1606
        %v1835 = vadd.f32 %v1001, %v1611
        %v1836 = vadd.f32 %v1004, %v1614
        %v1837 = vadd.f32 %v1009, %v1619
        %v1838 = vadd.f32 %v1012, %v1622
        %v1839 = vadd.f32 %v1017, %v1627
        %v1840 = vadd.f32 %v1020, %v1630
        %v1841 = vadd.f32 %v1025, %v1635
        %v1842 = vadd.f32 %v1028, %v1638
        %v1843 = vadd.f32 %v1033, %v1643
        %v1844 = vadd.f32 %v1036, %v1646
        %v1845 = vadd.f32 %v1041, %v1651
        %v1846 = vadd.f32 %v1044, %v1654
        %v1847 = vadd.f32 %v1049, %v1659
        %v1848 = vadd.f32 %v1052, %v1662
        %v1849 = vadd.f32 %v1057, %v1667
        %v1850 = vadd.f32 %v1060, %v1670
        %v1851 = vadd.f32 %v1065, %v1675
        %v1852 = vadd.f32 %v1068, %v1678
        %v1853 = vadd.f32 %v1073, %v1683
        %v1854 = vadd.f32 %v1076, %v1686
        %v1855 = vadd.f32 %v1081, %v1691
        %v1856 = vadd.f32 %v1084, %v1694
        %v1857 = vadd.f32 %v1089, %v1699
        %v1858 = vadd.f32 %v1092, %v1702
        %v1859 = vadd.f32 %v1097, %v1707
        %v1860 = vadd.f32 %v1100, %v1710
        %v1861 = vadd.f32 %v1105, %v1715
        %v1862 = vadd.f32 %v1108, %v1718
        %v1863 = vadd.f32 %v1113, %v1723
        %v1864 = vadd.f32 %v1116, %v1726
        %v1865 = vadd.f32 %v1121, %v1731
        %v1866 = vadd.f32 %v1124, %v1734
        %v1867 = vadd.f32 %v1129, %v1739
        %v1868 = vadd.f32 %v1132, %v1742
        %v1869 = vadd.f32 %v1137, %v1747
        %v1870 = vadd.f32 %v1140, %v1750
        %v1871 = vadd.f32 %v1145, %v1755
        %v1872 = vadd.f32 %v1148, %v1758
        %v1873 = vadd.f32 %v1153, %v1763
        %v1874 = vadd.f32 %v1156, %v1766
        %v1875 = vadd.f32 %v1161, %v1771
        %v1876 = vadd.f32 %v1164, %v1774
        %v1877 = vadd.f32 %v1169, %v1779
        %v1878 = vadd.f32 %v1172, %v1782
        %v1879 = vadd.f32 %v1177, %v1787
        %v1880 = vadd.f32 %v1180, %v1790
        %v1881 = vadd.f32 %v1185, %v1795
        %v1882 = vadd.f32 %v1188, %v1798
        %v1883 = vadd.f32 %v1193, %v1803
        %v1884 = vadd.f32 %v1196, %v1806
        %v1885 = vadd.f32 %v1201, %v1811
        %v1886 = vadd.f32 %v1204, %v1814
        %v1887 = vadd.f32 %v1209, %v1819
        %v1888 = vadd.f32 %v1212, %v1822
        %v1889 = vld [vmem:[%s203 + $0x30] sm:$0xf]
        %v1890 = vld [vmem:[%s203 + $0x34] sm:$0xf]
        %v1891 = vld [vmem:[%s203 + $0x38] sm:$0xf]
        %v1892 = vld [vmem:[%s203 + $0x3c] sm:$0xf]
        %v1893 = vld [vmem:[%s203 + $0x40] sm:$0xf]
        %v1894 = vld [vmem:[%s203 + $0x44] sm:$0xf]
        %v1895 = vld [vmem:[%s203 + $0x48] sm:$0xf]
        %v1896 = vld [vmem:[%s203 + $0x4c] sm:$0xf]
        %v1897 = vld [vmem:[%s203 + $0x50] sm:$0xf]
        %v1898 = vld [vmem:[%s203 + $0x54] sm:$0xf]
        %v1899 = vld [vmem:[%s203 + $0x58] sm:$0xf]
        %v1900 = vld [vmem:[%s203 + $0x5c] sm:$0xf]
        %v1901 = vld [vmem:[%s203 + $0x60] sm:$0xf]
        %v1902 = vld [vmem:[%s203 + $0x64] sm:$0xf]
        %v1903 = vld [vmem:[%s203 + $0x68] sm:$0xf]
        %v1904 = vld [vmem:[%s203 + $0x6c] sm:$0xf]
        %v1905 = vld [vmem:[%s203 + $0x70] sm:$0xf]
        %v1906 = vld [vmem:[%s203 + $0x74] sm:$0xf]
        %v1907 = vld [vmem:[%s203 + $0x78] sm:$0xf]
        %v1908 = vld [vmem:[%s203 + $0x7c] sm:$0xf]
        %v1909 = vld [vmem:[%s203 + $0x80] sm:$0xf]
        %v1910 = vld [vmem:[%s203 + $0x84] sm:$0xf]
        %v1911 = vld [vmem:[%s203 + $0x88] sm:$0xf]
        %v1912 = vld [vmem:[%s203 + $0x8c] sm:$0xf]
        %v1913 = vld [vmem:[%s203 + $0x90] sm:$0xf]
        %v1914 = vld [vmem:[%s203 + $0x94] sm:$0xf]
        %v1915 = vld [vmem:[%s203 + $0x98] sm:$0xf]
        %v1916 = vld [vmem:[%s203 + $0x9c] sm:$0xf]
        %v1917 = vld [vmem:[%s203 + $0xa0] sm:$0xf]
        %v1918 = vld [vmem:[%s203 + $0xa4] sm:$0xf]
        %v1919 = vld [vmem:[%s203 + $0xa8] sm:$0xf]
        %v1920 = vld [vmem:[%s203 + $0xac] sm:$0xf]
        %v1921 = vld [vmem:[%s203 + $0xb0] sm:$0xf]
        %v1922 = vld [vmem:[%s203 + $0xb4] sm:$0xf]
        %v1923 = vld [vmem:[%s203 + $0xb8] sm:$0xf]
        %v1924 = vld [vmem:[%s203 + $0xbc] sm:$0xf]
        %v1925 = vld [vmem:[%s203 + $0xc0] sm:$0xf]
        %v1926 = vld [vmem:[%s203 + $0xc4] sm:$0xf]
        %v1927 = vld [vmem:[%s203 + $0xc8] sm:$0xf]
        %v1928 = vld [vmem:[%s203 + $0xcc] sm:$0xf]
        %v1929 = vld [vmem:[%s203 + $0xd0] sm:$0xf]
        %v1930 = vld [vmem:[%s203 + $0xd4] sm:$0xf]
        %v1931 = vld [vmem:[%s203 + $0xd8] sm:$0xf]
        %v1932 = vld [vmem:[%s203 + $0xdc] sm:$0xf]
        %v1933 = vld [vmem:[%s203 + $0xe0] sm:$0xf]
        %v1934 = vld [vmem:[%s203 + $0xe4] sm:$0xf]
        %v1935 = vld [vmem:[%s203 + $0xe8] sm:$0xf]
        %v1936 = vld [vmem:[%s203 + $0xec] sm:$0xf]
        %v1937 = vld [vmem:[%s203 + $0xf0] sm:$0xf]
        %v1938 = vld [vmem:[%s203 + $0xf4] sm:$0xf]
        %v1939 = vld [vmem:[%s203 + $0xf8] sm:$0xf]
        %v1940 = vld [vmem:[%s203 + $0xfc] sm:$0xf]
        %v1941 = vld [vmem:[%s203 + $0x100] sm:$0xf]
        %v1942 = vld [vmem:[%s203 + $0x104] sm:$0xf]
        %v1943 = vld [vmem:[%s203 + $0x108] sm:$0xf]
        %v1944 = vld [vmem:[%s203 + $0x10c] sm:$0xf]
        %v1945 = vld [vmem:[%s203 + $0x110] sm:$0xf]
        %v1946 = vld [vmem:[%s203 + $0x114] sm:$0xf]
        %v1947 = vld [vmem:[%s203 + $0x118] sm:$0xf]
        %v1948 = vld [vmem:[%s203 + $0x11c] sm:$0xf]
        %v1949 = vld [vmem:[%s203 + $0x120] sm:$0xf]
        %v1950 = vld [vmem:[%s203 + $0x124] sm:$0xf]
        %v1951 = vld [vmem:[%s203 + $0x128] sm:$0xf]
        %v1952 = vld [vmem:[%s203 + $0x12c] sm:$0xf]
        %s1953 = scalar_lea.vmem [#allocation5], 192
        %v1954 = vld [vmem:[%s1953] sm:$0xf]
        %v1955 = vld [vmem:[%s1953 + $0x4] sm:$0xf]
        %v1956 = vld [vmem:[%s1953 + $0x8] sm:$0xf]
        %v1957 = vld [vmem:[%s1953 + $0xc] sm:$0xf]
        %v1958 = vld [vmem:[%s1953 + $0x10] sm:$0xf]
        %v1959 = vld [vmem:[%s1953 + $0x14] sm:$0xf]
        %v1960 = vld [vmem:[%s1953 + $0x18] sm:$0xf]
        %v1961 = vld [vmem:[%s1953 + $0x1c] sm:$0xf]
        %v1962 = vld [vmem:[%s1953 + $0x20] sm:$0xf]
        %v1963 = vld [vmem:[%s1953 + $0x24] sm:$0xf]
        %v1964 = vld [vmem:[%s1953 + $0x28] sm:$0xf]
        %v1965 = vld [vmem:[%s1953 + $0x2c] sm:$0xf]
        %v1966 = vld [vmem:[%s1953 + $0x30] sm:$0xf]
        %v1967 = vld [vmem:[%s1953 + $0x34] sm:$0xf]
        %v1968 = vld [vmem:[%s1953 + $0x38] sm:$0xf]
        %v1969 = vld [vmem:[%s1953 + $0x3c] sm:$0xf]
        %v2034 = vunpack.c.l.b16 %v1889
        %v2035 = vunpack.c.l.b16 %v1890
        %v2036 = vunpack.c.l.b16 %v1891
        %v2037 = vunpack.c.l.b16 %v1892
        %v2038 = vunpack.c.l.b16 %v1893
        %v2039 = vunpack.c.l.b16 %v1894
        %v2040 = vunpack.c.l.b16 %v1895
        %v2041 = vunpack.c.l.b16 %v1896
        %v2042 = vunpack.c.l.b16 %v1897
        %v2043 = vunpack.c.l.b16 %v1898
        %v2044 = vunpack.c.l.b16 %v1899
        %v2045 = vunpack.c.l.b16 %v1900
        %v2046 = vunpack.c.l.b16 %v1901
        %v2047 = vunpack.c.l.b16 %v1902
        %v2048 = vunpack.c.l.b16 %v1903
        %v2049 = vunpack.c.l.b16 %v1904
        %v2050 = vunpack.c.l.b16 %v1905
        %v2051 = vunpack.c.l.b16 %v1906
        %v2052 = vunpack.c.l.b16 %v1907
        %v2053 = vunpack.c.l.b16 %v1908
        %v2054 = vunpack.c.l.b16 %v1909
        %v2055 = vunpack.c.l.b16 %v1910
        %v2056 = vunpack.c.l.b16 %v1911
        %v2057 = vunpack.c.l.b16 %v1912
        %v2058 = vunpack.c.l.b16 %v1913
        %v2059 = vunpack.c.l.b16 %v1914
        %v2060 = vunpack.c.l.b16 %v1915
        %v2061 = vunpack.c.l.b16 %v1916
        %v2062 = vunpack.c.l.b16 %v1917
        %v2063 = vunpack.c.l.b16 %v1918
        %v2064 = vunpack.c.l.b16 %v1919
        %v2065 = vunpack.c.l.b16 %v1920
        %v2066 = vunpack.c.l.b16 %v1921
        %v2067 = vunpack.c.l.b16 %v1922
        %v2068 = vunpack.c.l.b16 %v1923
        %v2069 = vunpack.c.l.b16 %v1924
        %v2070 = vunpack.c.l.b16 %v1925
        %v2071 = vunpack.c.l.b16 %v1926
        %v2072 = vunpack.c.l.b16 %v1927
        %v2073 = vunpack.c.l.b16 %v1928
        %v2074 = vunpack.c.l.b16 %v1929
        %v2075 = vunpack.c.l.b16 %v1930
        %v2076 = vunpack.c.l.b16 %v1931
        %v2077 = vunpack.c.l.b16 %v1932
        %v2078 = vunpack.c.l.b16 %v1933
        %v2079 = vunpack.c.l.b16 %v1934
        %v2080 = vunpack.c.l.b16 %v1935
        %v2081 = vunpack.c.l.b16 %v1936
        %v2082 = vunpack.c.l.b16 %v1937
        %v2083 = vunpack.c.l.b16 %v1938
        %v2084 = vunpack.c.l.b16 %v1939
        %v2085 = vunpack.c.l.b16 %v1940
        %v2086 = vunpack.c.l.b16 %v1941
        %v2087 = vunpack.c.l.b16 %v1942
        %v2088 = vunpack.c.l.b16 %v1943
        %v2089 = vunpack.c.l.b16 %v1944
        %v2090 = vunpack.c.l.b16 %v1945
        %v2091 = vunpack.c.l.b16 %v1946
        %v2092 = vunpack.c.l.b16 %v1947
        %v2093 = vunpack.c.l.b16 %v1948
        %v2094 = vunpack.c.l.b16 %v1949
        %v2095 = vunpack.c.l.b16 %v1950
        %v2096 = vunpack.c.l.b16 %v1951
        %v2097 = vunpack.c.l.b16 %v1952
        %v2098 = vpack.c.b16 %v2035, %v2034
        %v2099 = vpack.c.b16 %v2037, %v2036
        %v2100 = vpack.c.b16 %v2039, %v2038
        %v2101 = vpack.c.b16 %v2041, %v2040
        %v2102 = vpack.c.b16 %v2043, %v2042
        %v2103 = vpack.c.b16 %v2045, %v2044
        %v2104 = vpack.c.b16 %v2047, %v2046
        %v2105 = vpack.c.b16 %v2049, %v2048
        %v2106 = vpack.c.b16 %v2051, %v2050
        %v2107 = vpack.c.b16 %v2053, %v2052
        %v2108 = vpack.c.b16 %v2055, %v2054
        %v2109 = vpack.c.b16 %v2057, %v2056
        %v2110 = vpack.c.b16 %v2059, %v2058
        %v2111 = vpack.c.b16 %v2061, %v2060
        %v2112 = vpack.c.b16 %v2063, %v2062
        %v2113 = vpack.c.b16 %v2065, %v2064
        %v2114 = vpack.c.b16 %v2067, %v2066
        %v2115 = vpack.c.b16 %v2069, %v2068
        %v2116 = vpack.c.b16 %v2071, %v2070
        %v2117 = vpack.c.b16 %v2073, %v2072
        %v2118 = vpack.c.b16 %v2075, %v2074
        %v2119 = vpack.c.b16 %v2077, %v2076
        %v2120 = vpack.c.b16 %v2079, %v2078
        %v2121 = vpack.c.b16 %v2081, %v2080
        %v2122 = vpack.c.b16 %v2083, %v2082
        %v2123 = vpack.c.b16 %v2085, %v2084
        %v2124 = vpack.c.b16 %v2087, %v2086
        %v2125 = vpack.c.b16 %v2089, %v2088
        %v2126 = vpack.c.b16 %v2091, %v2090
        %v2127 = vpack.c.b16 %v2093, %v2092
        %v2128 = vpack.c.b16 %v2095, %v2094
        %v2129 = vpack.c.b16 %v2097, %v2096
        %v2178 = vunpack.c.l.b16 %v1954
        %v2179 = vunpack.c.l.b16 %v1955
        %v2180 = vunpack.c.l.b16 %v1956
        %v2181 = vunpack.c.l.b16 %v1957
        %v2182 = vunpack.c.l.b16 %v1958
        %v2183 = vunpack.c.l.b16 %v1959
        %v2184 = vunpack.c.l.b16 %v1960
        %v2185 = vunpack.c.l.b16 %v1961
        %v2186 = vunpack.c.l.b16 %v1962
        %v2187 = vunpack.c.l.b16 %v1963
        %v2188 = vunpack.c.l.b16 %v1964
        %v2189 = vunpack.c.l.b16 %v1965
        %v2190 = vunpack.c.l.b16 %v1966
        %v2191 = vunpack.c.l.b16 %v1967
        %v2192 = vunpack.c.l.b16 %v1968
        %v2193 = vunpack.c.l.b16 %v1969
        %v2194 = vpack.c.b16 %v2179, %v2178
        %v2195 = vpack.c.b16 %v2181, %v2180
        %v2196 = vpack.c.b16 %v2183, %v2182
        %v2197 = vpack.c.b16 %v2185, %v2184
        %v2198 = vpack.c.b16 %v2187, %v2186
        %v2199 = vpack.c.b16 %v2189, %v2188
        %v2200 = vpack.c.b16 %v2191, %v2190
        %v2201 = vpack.c.b16 %v2193, %v2192
        %2210 = vmatprep.subr.bf16.mxu0 0
        %2211 = vmatpush1.bf16.msra.mxu0 %v2194
        %2212 = vmatprep.subr.bf16.mxu0 0
        %2213 = vmatpush1.bf16.msra.mxu0 %v2195
        %2214 = vmatprep.subr.bf16.mxu0 0
        %2215 = vmatpush1.bf16.msra.mxu0 %v2196
        %2216 = vmatprep.subr.bf16.mxu0 0
        %2217 = vmatpush1.bf16.msra.mxu0 %v2197
        %2218 = vmatprep.subr.bf16.mxu0 0
        %2219 = vmatpush1.bf16.msra.mxu0 %v2198
        %2220 = vmatprep.subr.bf16.mxu0 0
        %2221 = vmatpush1.bf16.msra.mxu0 %v2199
        %2222 = vmatprep.subr.bf16.mxu0 0
        %2223 = vmatpush1.bf16.msra.mxu0 %v2200
        %2224 = vmatprep.subr.bf16.mxu0 0
        %2225 = vmatpush1.bf16.msra.mxu0 %v2201
        %2226 = vmatprep.subr.bf16.mxu0 0
        %2227 = vmatpush1.bf16.msra.mxu0 0
        %2228 = vmatprep.subr.bf16.mxu0 0
        %2229 = vmatpush1.bf16.msra.mxu0 0
        %2230 = vmatprep.subr.bf16.mxu0 0
        %2231 = vmatpush1.bf16.msra.mxu0 0
        %2232 = vmatprep.subr.bf16.mxu0 0
        %2233 = vmatpush1.bf16.msra.mxu0 0
        %2234 = vmatprep.subr.bf16.mxu0 0
        %2235 = vmatpush1.bf16.msra.mxu0 0
        %2236 = vmatprep.subr.bf16.mxu0 0
        %2237 = vmatpush1.bf16.msra.mxu0 0
        %2238 = vmatprep.subr.bf16.mxu0 0
        %2239 = vmatpush1.bf16.msra.mxu0 0
        %2240 = vmatprep.subr.bf16.mxu0 0
        %2241 = vmatpush1.bf16.msra.mxu0 0
        %2242 = vmatprep.mubr.bf16.mxu0 0
        %2243 = vmatmul.mubr.bf16.gmra.mrb[0].mxu0 %v2098
        %v2244 = vpop.f32.mrb[0].mxu0
        %v2245 = vadd.f32 0.0, %v2244
        %v2246 = vpop.f32.mrb[0].mxu0
        %v2247 = vpop.f32.mrb[0].mxu0
        %v2248 = vadd.f32 0.0, %v2247
        %v2249 = vpop.f32.mrb[0].mxu0
        %2250 = vmatprep.mubr.bf16.mxu0 0
        %2251 = vmatmul.mubr.bf16.gmra.mrb[0].mxu0 %v2099
        %v2252 = vpop.f32.mrb[0].mxu0
        %v2253 = vadd.f32 0.0, %v2252
        %v2254 = vpop.f32.mrb[0].mxu0
        %v2255 = vpop.f32.mrb[0].mxu0
        %v2256 = vadd.f32 0.0, %v2255
        %v2257 = vpop.f32.mrb[0].mxu0
        %2258 = vmatprep.mubr.bf16.mxu0 0
        %2259 = vmatmul.mubr.bf16.gmra.mrb[0].mxu0 %v2100
        %v2260 = vpop.f32.mrb[0].mxu0
        %v2261 = vadd.f32 0.0, %v2260
        %v2262 = vpop.f32.mrb[0].mxu0
        %v2263 = vpop.f32.mrb[0].mxu0
        %v2264 = vadd.f32 0.0, %v2263
        %v2265 = vpop.f32.mrb[0].mxu0
        %2266 = vmatprep.mubr.bf16.mxu0 0
        %2267 = vmatmul.mubr.bf16.gmra.mrb[0].mxu0 %v2101
        %v2268 = vpop.f32.mrb[0].mxu0
        %v2269 = vadd.f32 0.0, %v2268
        %v2270 = vpop.f32.mrb[0].mxu0
        %v2271 = vpop.f32.mrb[0].mxu0
        %v2272 = vadd.f32 0.0, %v2271
        %v2273 = vpop.f32.mrb[0].mxu0
        %2274 = vmatprep.mubr.bf16.mxu0 0
        %2275 = vmatmul.mubr.bf16.gmra.mrb[0].mxu0 %v2102
        %v2276 = vpop.f32.mrb[0].mxu0
        %v2277 = vadd.f32 0.0, %v2276
        %v2278 = vpop.f32.mrb[0].mxu0
        %v2279 = vpop.f32.mrb[0].mxu0
        %v2280 = vadd.f32 0.0, %v2279
        %v2281 = vpop.f32.mrb[0].mxu0
        %2282 = vmatprep.mubr.bf16.mxu0 0
        %2283 = vmatmul.mubr.bf16.gmra.mrb[0].mxu0 %v2103
        %v2284 = vpop.f32.mrb[0].mxu0
        %v2285 = vadd.f32 0.0, %v2284
        %v2286 = vpop.f32.mrb[0].mxu0
        %v2287 = vpop.f32.mrb[0].mxu0
        %v2288 = vadd.f32 0.0, %v2287
        %v2289 = vpop.f32.mrb[0].mxu0
        %2290 = vmatprep.mubr.bf16.mxu0 0
        %2291 = vmatmul.mubr.bf16.gmra.mrb[0].mxu0 %v2104
        %v2292 = vpop.f32.mrb[0].mxu0
        %v2293 = vadd.f32 0.0, %v2292
        %v2294 = vpop.f32.mrb[0].mxu0
        %v2295 = vpop.f32.mrb[0].mxu0
        %v2296 = vadd.f32 0.0, %v2295
        %v2297 = vpop.f32.mrb[0].mxu0
        %2298 = vmatprep.mubr.bf16.mxu0 0
        %2299 = vmatmul.mubr.bf16.gmra.mrb[0].mxu0 %v2105
        %v2300 = vpop.f32.mrb[0].mxu0
        %v2301 = vadd.f32 0.0, %v2300
        %v2302 = vpop.f32.mrb[0].mxu0
        %v2303 = vpop.f32.mrb[0].mxu0
        %v2304 = vadd.f32 0.0, %v2303
        %v2305 = vpop.f32.mrb[0].mxu0
        %2306 = vmatprep.mubr.bf16.mxu0 0
        %2307 = vmatmul.mubr.bf16.gmra.mrb[0].mxu0 %v2106
        %v2308 = vpop.f32.mrb[0].mxu0
        %v2309 = vadd.f32 0.0, %v2308
        %v2310 = vpop.f32.mrb[0].mxu0
        %v2311 = vpop.f32.mrb[0].mxu0
        %v2312 = vadd.f32 0.0, %v2311
        %v2313 = vpop.f32.mrb[0].mxu0
        %2314 = vmatprep.mubr.bf16.mxu0 0
        %2315 = vmatmul.mubr.bf16.gmra.mrb[0].mxu0 %v2107
        %v2316 = vpop.f32.mrb[0].mxu0
        %v2317 = vadd.f32 0.0, %v2316
        %v2318 = vpop.f32.mrb[0].mxu0
        %v2319 = vpop.f32.mrb[0].mxu0
        %v2320 = vadd.f32 0.0, %v2319
        %v2321 = vpop.f32.mrb[0].mxu0
        %2322 = vmatprep.mubr.bf16.mxu0 0
        %2323 = vmatmul.mubr.bf16.gmra.mrb[0].mxu0 %v2108
        %v2324 = vpop.f32.mrb[0].mxu0
        %v2325 = vadd.f32 0.0, %v2324
        %v2326 = vpop.f32.mrb[0].mxu0
        %v2327 = vpop.f32.mrb[0].mxu0
        %v2328 = vadd.f32 0.0, %v2327
        %v2329 = vpop.f32.mrb[0].mxu0
        %2330 = vmatprep.mubr.bf16.mxu0 0
        %2331 = vmatmul.mubr.bf16.gmra.mrb[0].mxu0 %v2109
        %v2332 = vpop.f32.mrb[0].mxu0
        %v2333 = vadd.f32 0.0, %v2332
        %v2334 = vpop.f32.mrb[0].mxu0
        %v2335 = vpop.f32.mrb[0].mxu0
        %v2336 = vadd.f32 0.0, %v2335
        %v2337 = vpop.f32.mrb[0].mxu0
        %2338 = vmatprep.mubr.bf16.mxu0 0
        %2339 = vmatmul.mubr.bf16.gmra.mrb[0].mxu0 %v2110
        %v2340 = vpop.f32.mrb[0].mxu0
        %v2341 = vadd.f32 0.0, %v2340
        %v2342 = vpop.f32.mrb[0].mxu0
        %v2343 = vpop.f32.mrb[0].mxu0
        %v2344 = vadd.f32 0.0, %v2343
        %v2345 = vpop.f32.mrb[0].mxu0
        %2346 = vmatprep.mubr.bf16.mxu0 0
        %2347 = vmatmul.mubr.bf16.gmra.mrb[0].mxu0 %v2111
        %v2348 = vpop.f32.mrb[0].mxu0
        %v2349 = vadd.f32 0.0, %v2348
        %v2350 = vpop.f32.mrb[0].mxu0
        %v2351 = vpop.f32.mrb[0].mxu0
        %v2352 = vadd.f32 0.0, %v2351
        %v2353 = vpop.f32.mrb[0].mxu0
        %2354 = vmatprep.mubr.bf16.mxu0 0
        %2355 = vmatmul.mubr.bf16.gmra.mrb[0].mxu0 %v2112
        %v2356 = vpop.f32.mrb[0].mxu0
        %v2357 = vadd.f32 0.0, %v2356
        %v2358 = vpop.f32.mrb[0].mxu0
        %v2359 = vpop.f32.mrb[0].mxu0
        %v2360 = vadd.f32 0.0, %v2359
        %v2361 = vpop.f32.mrb[0].mxu0
        %2362 = vmatprep.mubr.bf16.mxu0 0
        %2363 = vmatmul.mubr.bf16.gmra.mrb[0].mxu0 %v2113
        %v2364 = vpop.f32.mrb[0].mxu0
        %v2365 = vadd.f32 0.0, %v2364
        %v2366 = vpop.f32.mrb[0].mxu0
        %v2367 = vpop.f32.mrb[0].mxu0
        %v2368 = vadd.f32 0.0, %v2367
        %v2369 = vpop.f32.mrb[0].mxu0
        %2370 = vmatprep.mubr.bf16.mxu0 0
        %2371 = vmatmul.mubr.bf16.gmra.mrb[0].mxu0 %v2114
        %v2372 = vpop.f32.mrb[0].mxu0
        %v2373 = vadd.f32 0.0, %v2372
        %v2374 = vpop.f32.mrb[0].mxu0
        %v2375 = vpop.f32.mrb[0].mxu0
        %v2376 = vadd.f32 0.0, %v2375
        %v2377 = vpop.f32.mrb[0].mxu0
        %2378 = vmatprep.mubr.bf16.mxu0 0
        %2379 = vmatmul.mubr.bf16.gmra.mrb[0].mxu0 %v2115
        %v2380 = vpop.f32.mrb[0].mxu0
        %v2381 = vadd.f32 0.0, %v2380
        %v2382 = vpop.f32.mrb[0].mxu0
        %v2383 = vpop.f32.mrb[0].mxu0
        %v2384 = vadd.f32 0.0, %v2383
        %v2385 = vpop.f32.mrb[0].mxu0
        %2386 = vmatprep.mubr.bf16.mxu0 0
        %2387 = vmatmul.mubr.bf16.gmra.mrb[0].mxu0 %v2116
        %v2388 = vpop.f32.mrb[0].mxu0
        %v2389 = vadd.f32 0.0, %v2388
        %v2390 = vpop.f32.mrb[0].mxu0
        %v2391 = vpop.f32.mrb[0].mxu0
        %v2392 = vadd.f32 0.0, %v2391
        %v2393 = vpop.f32.mrb[0].mxu0
        %2394 = vmatprep.mubr.bf16.mxu0 0
        %2395 = vmatmul.mubr.bf16.gmra.mrb[0].mxu0 %v2117
        %v2396 = vpop.f32.mrb[0].mxu0
        %v2397 = vadd.f32 0.0, %v2396
        %v2398 = vpop.f32.mrb[0].mxu0
        %v2399 = vpop.f32.mrb[0].mxu0
        %v2400 = vadd.f32 0.0, %v2399
        %v2401 = vpop.f32.mrb[0].mxu0
        %2402 = vmatprep.mubr.bf16.mxu0 0
        %2403 = vmatmul.mubr.bf16.gmra.mrb[0].mxu0 %v2118
        %v2404 = vpop.f32.mrb[0].mxu0
        %v2405 = vadd.f32 0.0, %v2404
        %v2406 = vpop.f32.mrb[0].mxu0
        %v2407 = vpop.f32.mrb[0].mxu0
        %v2408 = vadd.f32 0.0, %v2407
        %v2409 = vpop.f32.mrb[0].mxu0
        %2410 = vmatprep.mubr.bf16.mxu0 0
        %2411 = vmatmul.mubr.bf16.gmra.mrb[0].mxu0 %v2119
        %v2412 = vpop.f32.mrb[0].mxu0
        %v2413 = vadd.f32 0.0, %v2412
        %v2414 = vpop.f32.mrb[0].mxu0
        %v2415 = vpop.f32.mrb[0].mxu0
        %v2416 = vadd.f32 0.0, %v2415
        %v2417 = vpop.f32.mrb[0].mxu0
        %2418 = vmatprep.mubr.bf16.mxu0 0
        %2419 = vmatmul.mubr.bf16.gmra.mrb[0].mxu0 %v2120
        %v2420 = vpop.f32.mrb[0].mxu0
        %v2421 = vadd.f32 0.0, %v2420
        %v2422 = vpop.f32.mrb[0].mxu0
        %v2423 = vpop.f32.mrb[0].mxu0
        %v2424 = vadd.f32 0.0, %v2423
        %v2425 = vpop.f32.mrb[0].mxu0
        %2426 = vmatprep.mubr.bf16.mxu0 0
        %2427 = vmatmul.mubr.bf16.gmra.mrb[0].mxu0 %v2121
        %v2428 = vpop.f32.mrb[0].mxu0
        %v2429 = vadd.f32 0.0, %v2428
        %v2430 = vpop.f32.mrb[0].mxu0
        %v2431 = vpop.f32.mrb[0].mxu0
        %v2432 = vadd.f32 0.0, %v2431
        %v2433 = vpop.f32.mrb[0].mxu0
        %2434 = vmatprep.mubr.bf16.mxu0 0
        %2435 = vmatmul.mubr.bf16.gmra.mrb[0].mxu0 %v2122
        %v2436 = vpop.f32.mrb[0].mxu0
        %v2437 = vadd.f32 0.0, %v2436
        %v2438 = vpop.f32.mrb[0].mxu0
        %v2439 = vpop.f32.mrb[0].mxu0
        %v2440 = vadd.f32 0.0, %v2439
        %v2441 = vpop.f32.mrb[0].mxu0
        %2442 = vmatprep.mubr.bf16.mxu0 0
        %2443 = vmatmul.mubr.bf16.gmra.mrb[0].mxu0 %v2123
        %v2444 = vpop.f32.mrb[0].mxu0
        %v2445 = vadd.f32 0.0, %v2444
        %v2446 = vpop.f32.mrb[0].mxu0
        %v2447 = vpop.f32.mrb[0].mxu0
        %v2448 = vadd.f32 0.0, %v2447
        %v2449 = vpop.f32.mrb[0].mxu0
        %2450 = vmatprep.mubr.bf16.mxu0 0
        %2451 = vmatmul.mubr.bf16.gmra.mrb[0].mxu0 %v2124
        %v2452 = vpop.f32.mrb[0].mxu0
        %v2453 = vadd.f32 0.0, %v2452
        %v2454 = vpop.f32.mrb[0].mxu0
        %v2455 = vpop.f32.mrb[0].mxu0
        %v2456 = vadd.f32 0.0, %v2455
        %v2457 = vpop.f32.mrb[0].mxu0
        %2458 = vmatprep.mubr.bf16.mxu0 0
        %2459 = vmatmul.mubr.bf16.gmra.mrb[0].mxu0 %v2125
        %v2460 = vpop.f32.mrb[0].mxu0
        %v2461 = vadd.f32 0.0, %v2460
        %v2462 = vpop.f32.mrb[0].mxu0
        %v2463 = vpop.f32.mrb[0].mxu0
        %v2464 = vadd.f32 0.0, %v2463
        %v2465 = vpop.f32.mrb[0].mxu0
        %2466 = vmatprep.mubr.bf16.mxu0 0
        %2467 = vmatmul.mubr.bf16.gmra.mrb[0].mxu0 %v2126
        %v2468 = vpop.f32.mrb[0].mxu0
        %v2469 = vadd.f32 0.0, %v2468
        %v2470 = vpop.f32.mrb[0].mxu0
        %v2471 = vpop.f32.mrb[0].mxu0
        %v2472 = vadd.f32 0.0, %v2471
        %v2473 = vpop.f32.mrb[0].mxu0
        %2474 = vmatprep.mubr.bf16.mxu0 0
        %2475 = vmatmul.mubr.bf16.gmra.mrb[0].mxu0 %v2127
        %v2476 = vpop.f32.mrb[0].mxu0
        %v2477 = vadd.f32 0.0, %v2476
        %v2478 = vpop.f32.mrb[0].mxu0
        %v2479 = vpop.f32.mrb[0].mxu0
        %v2480 = vadd.f32 0.0, %v2479
        %v2481 = vpop.f32.mrb[0].mxu0
        %2482 = vmatprep.mubr.bf16.mxu0 0
        %2483 = vmatmul.mubr.bf16.gmra.mrb[0].mxu0 %v2128
        %v2484 = vpop.f32.mrb[0].mxu0
        %v2485 = vadd.f32 0.0, %v2484
        %v2486 = vpop.f32.mrb[0].mxu0
        %v2487 = vpop.f32.mrb[0].mxu0
        %v2488 = vadd.f32 0.0, %v2487
        %v2489 = vpop.f32.mrb[0].mxu0
        %2490 = vmatprep.mubr.bf16.mxu0 0
        %2491 = vmatmul.mubr.bf16.gmra.mrb[0].mxu0 %v2129
        %v2492 = vpop.f32.mrb[0].mxu0
        %v2493 = vadd.f32 0.0, %v2492
        %v2494 = vpop.f32.mrb[0].mxu0
        %v2495 = vpop.f32.mrb[0].mxu0
        %v2496 = vadd.f32 0.0, %v2495
        %v2497 = vpop.f32.mrb[0].mxu0
        %2498 = vdwg.mxu0
        %v2499 = vadd.f32 %v1825, %v2245
        %v2500 = vadd.f32 %v1826, %v2248
        %v2501 = vadd.f32 %v1827, %v2253
        %v2502 = vadd.f32 %v1828, %v2256
        %v2503 = vadd.f32 %v1829, %v2261
        %v2504 = vadd.f32 %v1830, %v2264
        %v2505 = vadd.f32 %v1831, %v2269
        %v2506 = vadd.f32 %v1832, %v2272
        %v2507 = vadd.f32 %v1833, %v2277
        %v2508 = vadd.f32 %v1834, %v2280
        %v2509 = vadd.f32 %v1835, %v2285
        %v2510 = vadd.f32 %v1836, %v2288
        %v2511 = vadd.f32 %v1837, %v2293
        %v2512 = vadd.f32 %v1838, %v2296
        %v2513 = vadd.f32 %v1839, %v2301
        %v2514 = vadd.f32 %v1840, %v2304
        %v2515 = vadd.f32 %v1841, %v2309
        %v2516 = vadd.f32 %v1842, %v2312
        %v2517 = vadd.f32 %v1843, %v2317
        %v2518 = vadd.f32 %v1844, %v2320
        %v2519 = vadd.f32 %v1845, %v2325
        %v2520 = vadd.f32 %v1846, %v2328
        %v2521 = vadd.f32 %v1847, %v2333
        %v2522 = vadd.f32 %v1848, %v2336
        %v2523 = vadd.f32 %v1849, %v2341
        %v2524 = vadd.f32 %v1850, %v2344
        %v2525 = vadd.f32 %v1851, %v2349
        %v2526 = vadd.f32 %v1852, %v2352
        %v2527 = vadd.f32 %v1853, %v2357
        %v2528 = vadd.f32 %v1854, %v2360
        %v2529 = vadd.f32 %v1855, %v2365
        %v2530 = vadd.f32 %v1856, %v2368
        %v2531 = vadd.f32 %v1857, %v2373
        %v2532 = vadd.f32 %v1858, %v2376
        %v2533 = vadd.f32 %v1859, %v2381
        %v2534 = vadd.f32 %v1860, %v2384
        %v2535 = vadd.f32 %v1861, %v2389
        %v2536 = vadd.f32 %v1862, %v2392
        %v2537 = vadd.f32 %v1863, %v2397
        %v2538 = vadd.f32 %v1864, %v2400
        %v2539 = vadd.f32 %v1865, %v2405
        %v2540 = vadd.f32 %v1866, %v2408
        %v2541 = vadd.f32 %v1867, %v2413
        %v2542 = vadd.f32 %v1868, %v2416
        %v2543 = vadd.f32 %v1869, %v2421
        %v2544 = vadd.f32 %v1870, %v2424
        %v2545 = vadd.f32 %v1871, %v2429
        %v2546 = vadd.f32 %v1872, %v2432
        %v2547 = vadd.f32 %v1873, %v2437
        %v2548 = vadd.f32 %v1874, %v2440
        %v2549 = vadd.f32 %v1875, %v2445
        %v2550 = vadd.f32 %v1876, %v2448
        %v2551 = vadd.f32 %v1877, %v2453
        %v2552 = vadd.f32 %v1878, %v2456
        %v2553 = vadd.f32 %v1879, %v2461
        %v2554 = vadd.f32 %v1880, %v2464
        %v2555 = vadd.f32 %v1881, %v2469
        %v2556 = vadd.f32 %v1882, %v2472
        %v2557 = vadd.f32 %v1883, %v2477
        %v2558 = vadd.f32 %v1884, %v2480
        %v2559 = vadd.f32 %v1885, %v2485
        %v2560 = vadd.f32 %v1886, %v2488
        %v2561 = vadd.f32 %v1887, %v2493
        %v2562 = vadd.f32 %v1888, %v2496
        %v2563 = vld [vmem:[%s203 + $0x40] sm:$0xf]
        %v2564 = vld [vmem:[%s203 + $0x44] sm:$0xf]
        %v2565 = vld [vmem:[%s203 + $0x48] sm:$0xf]
        %v2566 = vld [vmem:[%s203 + $0x4c] sm:$0xf]
        %v2567 = vld [vmem:[%s203 + $0x50] sm:$0xf]
        %v2568 = vld [vmem:[%s203 + $0x54] sm:$0xf]
        %v2569 = vld [vmem:[%s203 + $0x58] sm:$0xf]
        %v2570 = vld [vmem:[%s203 + $0x5c] sm:$0xf]
        %v2571 = vld [vmem:[%s203 + $0x60] sm:$0xf]
        %v2572 = vld [vmem:[%s203 + $0x64] sm:$0xf]
        %v2573 = vld [vmem:[%s203 + $0x68] sm:$0xf]
        %v2574 = vld [vmem:[%s203 + $0x6c] sm:$0xf]
        %v2575 = vld [vmem:[%s203 + $0x70] sm:$0xf]
        %v2576 = vld [vmem:[%s203 + $0x74] sm:$0xf]
        %v2577 = vld [vmem:[%s203 + $0x78] sm:$0xf]
        %v2578 = vld [vmem:[%s203 + $0x7c] sm:$0xf]
        %v2579 = vld [vmem:[%s203 + $0x80] sm:$0xf]
        %v2580 = vld [vmem:[%s203 + $0x84] sm:$0xf]
        %v2581 = vld [vmem:[%s203 + $0x88] sm:$0xf]
        %v2582 = vld [vmem:[%s203 + $0x8c] sm:$0xf]
        %v2583 = vld [vmem:[%s203 + $0x90] sm:$0xf]
        %v2584 = vld [vmem:[%s203 + $0x94] sm:$0xf]
        %v2585 = vld [vmem:[%s203 + $0x98] sm:$0xf]
        %v2586 = vld [vmem:[%s203 + $0x9c] sm:$0xf]
        %v2587 = vld [vmem:[%s203 + $0xa0] sm:$0xf]
        %v2588 = vld [vmem:[%s203 + $0xa4] sm:$0xf]
        %v2589 = vld [vmem:[%s203 + $0xa8] sm:$0xf]
        %v2590 = vld [vmem:[%s203 + $0xac] sm:$0xf]
        %v2591 = vld [vmem:[%s203 + $0xb0] sm:$0xf]
        %v2592 = vld [vmem:[%s203 + $0xb4] sm:$0xf]
        %v2593 = vld [vmem:[%s203 + $0xb8] sm:$0xf]
        %v2594 = vld [vmem:[%s203 + $0xbc] sm:$0xf]
        %v2595 = vld [vmem:[%s203 + $0xc0] sm:$0xf]
        %v2596 = vld [vmem:[%s203 + $0xc4] sm:$0xf]
        %v2597 = vld [vmem:[%s203 + $0xc8] sm:$0xf]
        %v2598 = vld [vmem:[%s203 + $0xcc] sm:$0xf]
        %v2599 = vld [vmem:[%s203 + $0xd0] sm:$0xf]
        %v2600 = vld [vmem:[%s203 + $0xd4] sm:$0xf]
        %v2601 = vld [vmem:[%s203 + $0xd8] sm:$0xf]
        %v2602 = vld [vmem:[%s203 + $0xdc] sm:$0xf]
        %v2603 = vld [vmem:[%s203 + $0xe0] sm:$0xf]
        %v2604 = vld [vmem:[%s203 + $0xe4] sm:$0xf]
        %v2605 = vld [vmem:[%s203 + $0xe8] sm:$0xf]
        %v2606 = vld [vmem:[%s203 + $0xec] sm:$0xf]
        %v2607 = vld [vmem:[%s203 + $0xf0] sm:$0xf]
        %v2608 = vld [vmem:[%s203 + $0xf4] sm:$0xf]
        %v2609 = vld [vmem:[%s203 + $0xf8] sm:$0xf]
        %v2610 = vld [vmem:[%s203 + $0xfc] sm:$0xf]
        %v2611 = vld [vmem:[%s203 + $0x100] sm:$0xf]
        %v2612 = vld [vmem:[%s203 + $0x104] sm:$0xf]
        %v2613 = vld [vmem:[%s203 + $0x108] sm:$0xf]
        %v2614 = vld [vmem:[%s203 + $0x10c] sm:$0xf]
        %v2615 = vld [vmem:[%s203 + $0x110] sm:$0xf]
        %v2616 = vld [vmem:[%s203 + $0x114] sm:$0xf]
        %v2617 = vld [vmem:[%s203 + $0x118] sm:$0xf]
        %v2618 = vld [vmem:[%s203 + $0x11c] sm:$0xf]
        %v2619 = vld [vmem:[%s203 + $0x120] sm:$0xf]
        %v2620 = vld [vmem:[%s203 + $0x124] sm:$0xf]
        %v2621 = vld [vmem:[%s203 + $0x128] sm:$0xf]
        %v2622 = vld [vmem:[%s203 + $0x12c] sm:$0xf]
        %v2623 = vld [vmem:[%s203 + $0x130] sm:$0xf]
        %v2624 = vld [vmem:[%s203 + $0x134] sm:$0xf]
        %v2625 = vld [vmem:[%s203 + $0x138] sm:$0xf]
        %v2626 = vld [vmem:[%s203 + $0x13c] sm:$0xf]
        %s2627 = scalar_lea.vmem [#allocation5], 256
        %v2628 = vld [vmem:[%s2627] sm:$0xf]
        %v2629 = vld [vmem:[%s2627 + $0x4] sm:$0xf]
        %v2630 = vld [vmem:[%s2627 + $0x8] sm:$0xf]
        %v2631 = vld [vmem:[%s2627 + $0xc] sm:$0xf]
        %v2632 = vld [vmem:[%s2627 + $0x10] sm:$0xf]
        %v2633 = vld [vmem:[%s2627 + $0x14] sm:$0xf]
        %v2634 = vld [vmem:[%s2627 + $0x18] sm:$0xf]
        %v2635 = vld [vmem:[%s2627 + $0x1c] sm:$0xf]
        %v2636 = vld [vmem:[%s2627 + $0x20] sm:$0xf]
        %v2637 = vld [vmem:[%s2627 + $0x24] sm:$0xf]
        %v2638 = vld [vmem:[%s2627 + $0x28] sm:$0xf]
        %v2639 = vld [vmem:[%s2627 + $0x2c] sm:$0xf]
        %v2640 = vld [vmem:[%s2627 + $0x30] sm:$0xf]
        %v2641 = vld [vmem:[%s2627 + $0x34] sm:$0xf]
        %v2642 = vld [vmem:[%s2627 + $0x38] sm:$0xf]
        %v2643 = vld [vmem:[%s2627 + $0x3c] sm:$0xf]
        %v2708 = vunpack.c.l.b16 %v2563
        %v2709 = vunpack.c.l.b16 %v2564
        %v2710 = vunpack.c.l.b16 %v2565
        %v2711 = vunpack.c.l.b16 %v2566
        %v2712 = vunpack.c.l.b16 %v2567
        %v2713 = vunpack.c.l.b16 %v2568
        %v2714 = vunpack.c.l.b16 %v2569
        %v2715 = vunpack.c.l.b16 %v2570
        %v2716 = vunpack.c.l.b16 %v2571
        %v2717 = vunpack.c.l.b16 %v2572
        %v2718 = vunpack.c.l.b16 %v2573
        %v2719 = vunpack.c.l.b16 %v2574
        %v2720 = vunpack.c.l.b16 %v2575
        %v2721 = vunpack.c.l.b16 %v2576
        %v2722 = vunpack.c.l.b16 %v2577
        %v2723 = vunpack.c.l.b16 %v2578
        %v2724 = vunpack.c.l.b16 %v2579
        %v2725 = vunpack.c.l.b16 %v2580
        %v2726 = vunpack.c.l.b16 %v2581
        %v2727 = vunpack.c.l.b16 %v2582
        %v2728 = vunpack.c.l.b16 %v2583
        %v2729 = vunpack.c.l.b16 %v2584
        %v2730 = vunpack.c.l.b16 %v2585
        %v2731 = vunpack.c.l.b16 %v2586
        %v2732 = vunpack.c.l.b16 %v2587
        %v2733 = vunpack.c.l.b16 %v2588
        %v2734 = vunpack.c.l.b16 %v2589
        %v2735 = vunpack.c.l.b16 %v2590
        %v2736 = vunpack.c.l.b16 %v2591
        %v2737 = vunpack.c.l.b16 %v2592
        %v2738 = vunpack.c.l.b16 %v2593
        %v2739 = vunpack.c.l.b16 %v2594
        %v2740 = vunpack.c.l.b16 %v2595
        %v2741 = vunpack.c.l.b16 %v2596
        %v2742 = vunpack.c.l.b16 %v2597
        %v2743 = vunpack.c.l.b16 %v2598
        %v2744 = vunpack.c.l.b16 %v2599
        %v2745 = vunpack.c.l.b16 %v2600
        %v2746 = vunpack.c.l.b16 %v2601
        %v2747 = vunpack.c.l.b16 %v2602
        %v2748 = vunpack.c.l.b16 %v2603
        %v2749 = vunpack.c.l.b16 %v2604
        %v2750 = vunpack.c.l.b16 %v2605
        %v2751 = vunpack.c.l.b16 %v2606
        %v2752 = vunpack.c.l.b16 %v2607
        %v2753 = vunpack.c.l.b16 %v2608
        %v2754 = vunpack.c.l.b16 %v2609
        %v2755 = vunpack.c.l.b16 %v2610
        %v2756 = vunpack.c.l.b16 %v2611
        %v2757 = vunpack.c.l.b16 %v2612
        %v2758 = vunpack.c.l.b16 %v2613
        %v2759 = vunpack.c.l.b16 %v2614
        %v2760 = vunpack.c.l.b16 %v2615
        %v2761 = vunpack.c.l.b16 %v2616
        %v2762 = vunpack.c.l.b16 %v2617
        %v2763 = vunpack.c.l.b16 %v2618
        %v2764 = vunpack.c.l.b16 %v2619
        %v2765 = vunpack.c.l.b16 %v2620
        %v2766 = vunpack.c.l.b16 %v2621
        %v2767 = vunpack.c.l.b16 %v2622
        %v2768 = vunpack.c.l.b16 %v2623
        %v2769 = vunpack.c.l.b16 %v2624
        %v2770 = vunpack.c.l.b16 %v2625
        %v2771 = vunpack.c.l.b16 %v2626
        %v2772 = vpack.c.b16 %v2709, %v2708
        %v2773 = vpack.c.b16 %v2711, %v2710
        %v2774 = vpack.c.b16 %v2713, %v2712
        %v2775 = vpack.c.b16 %v2715, %v2714
        %v2776 = vpack.c.b16 %v2717, %v2716
        %v2777 = vpack.c.b16 %v2719, %v2718
        %v2778 = vpack.c.b16 %v2721, %v2720
        %v2779 = vpack.c.b16 %v2723, %v2722
        %v2780 = vpack.c.b16 %v2725, %v2724
        %v2781 = vpack.c.b16 %v2727, %v2726
        %v2782 = vpack.c.b16 %v2729, %v2728
        %v2783 = vpack.c.b16 %v2731, %v2730
        %v2784 = vpack.c.b16 %v2733, %v2732
        %v2785 = vpack.c.b16 %v2735, %v2734
        %v2786 = vpack.c.b16 %v2737, %v2736
        %v2787 = vpack.c.b16 %v2739, %v2738
        %v2788 = vpack.c.b16 %v2741, %v2740
        %v2789 = vpack.c.b16 %v2743, %v2742
        %v2790 = vpack.c.b16 %v2745, %v2744
        %v2791 = vpack.c.b16 %v2747, %v2746
        %v2792 = vpack.c.b16 %v2749, %v2748
        %v2793 = vpack.c.b16 %v2751, %v2750
        %v2794 = vpack.c.b16 %v2753, %v2752
        %v2795 = vpack.c.b16 %v2755, %v2754
        %v2796 = vpack.c.b16 %v2757, %v2756
        %v2797 = vpack.c.b16 %v2759, %v2758
        %v2798 = vpack.c.b16 %v2761, %v2760
        %v2799 = vpack.c.b16 %v2763, %v2762
        %v2800 = vpack.c.b16 %v2765, %v2764
        %v2801 = vpack.c.b16 %v2767, %v2766
        %v2802 = vpack.c.b16 %v2769, %v2768
        %v2803 = vpack.c.b16 %v2771, %v2770
        %v2852 = vunpack.c.l.b16 %v2628
        %v2853 = vunpack.c.l.b16 %v2629
        %v2854 = vunpack.c.l.b16 %v2630
        %v2855 = vunpack.c.l.b16 %v2631
        %v2856 = vunpack.c.l.b16 %v2632
        %v2857 = vunpack.c.l.b16 %v2633
        %v2858 = vunpack.c.l.b16 %v2634
        %v2859 = vunpack.c.l.b16 %v2635
        %v2860 = vunpack.c.l.b16 %v2636
        %v2861 = vunpack.c.l.b16 %v2637
        %v2862 = vunpack.c.l.b16 %v2638
        %v2863 = vunpack.c.l.b16 %v2639
        %v2864 = vunpack.c.l.b16 %v2640
        %v2865 = vunpack.c.l.b16 %v2641
        %v2866 = vunpack.c.l.b16 %v2642
        %v2867 = vunpack.c.l.b16 %v2643
        %v2868 = vpack.c.b16 %v2853, %v2852
        %v2869 = vpack.c.b16 %v2855, %v2854
        %v2870 = vpack.c.b16 %v2857, %v2856
        %v2871 = vpack.c.b16 %v2859, %v2858
        %v2872 = vpack.c.b16 %v2861, %v2860
        %v2873 = vpack.c.b16 %v2863, %v2862
        %v2874 = vpack.c.b16 %v2865, %v2864
        %v2875 = vpack.c.b16 %v2867, %v2866
        %2884 = vmatprep.subr.bf16.mxu0 0
        %2885 = vmatpush1.bf16.msra.mxu0 %v2868
        %2886 = vmatprep.subr.bf16.mxu0 0
        %2887 = vmatpush1.bf16.msra.mxu0 %v2869
        %2888 = vmatprep.subr.bf16.mxu0 0
        %2889 = vmatpush1.bf16.msra.mxu0 %v2870
        %2890 = vmatprep.subr.bf16.mxu0 0
        %2891 = vmatpush1.bf16.msra.mxu0 %v2871
        %2892 = vmatprep.subr.bf16.mxu0 0
        %2893 = vmatpush1.bf16.msra.mxu0 %v2872
        %2894 = vmatprep.subr.bf16.mxu0 0
        %2895 = vmatpush1.bf16.msra.mxu0 %v2873
        %2896 = vmatprep.subr.bf16.mxu0 0
        %2897 = vmatpush1.bf16.msra.mxu0 %v2874
        %2898 = vmatprep.subr.bf16.mxu0 0
        %2899 = vmatpush1.bf16.msra.mxu0 %v2875
        %2900 = vmatprep.subr.bf16.mxu0 0
        %2901 = vmatpush1.bf16.msra.mxu0 0
        %2902 = vmatprep.subr.bf16.mxu0 0
        %2903 = vmatpush1.bf16.msra.mxu0 0
        %2904 = vmatprep.subr.bf16.mxu0 0
        %2905 = vmatpush1.bf16.msra.mxu0 0
        %2906 = vmatprep.subr.bf16.mxu0 0
        %2907 = vmatpush1.bf16.msra.mxu0 0
        %2908 = vmatprep.subr.bf16.mxu0 0
        %2909 = vmatpush1.bf16.msra.mxu0 0
        %2910 = vmatprep.subr.bf16.mxu0 0
        %2911 = vmatpush1.bf16.msra.mxu0 0
        %2912 = vmatprep.subr.bf16.mxu0 0
        %2913 = vmatpush1.bf16.msra.mxu0 0
        %2914 = vmatprep.subr.bf16.mxu0 0
        %2915 = vmatpush1.bf16.msra.mxu0 0
        %2916 = vmatprep.mubr.bf16.mxu0 0
        %2917 = vmatmul.mubr.bf16.gmra.mrb[0].mxu0 %v2772
        %v2918 = vpop.f32.mrb[0].mxu0
        %v2919 = vadd.f32 0.0, %v2918
        %v2920 = vpop.f32.mrb[0].mxu0
        %v2921 = vpop.f32.mrb[0].mxu0
        %v2922 = vadd.f32 0.0, %v2921
        %v2923 = vpop.f32.mrb[0].mxu0
        %2924 = vmatprep.mubr.bf16.mxu0 0
        %2925 = vmatmul.mubr.bf16.gmra.mrb[0].mxu0 %v2773
        %v2926 = vpop.f32.mrb[0].mxu0
        %v2927 = vadd.f32 0.0, %v2926
        %v2928 = vpop.f32.mrb[0].mxu0
        %v2929 = vpop.f32.mrb[0].mxu0
        %v2930 = vadd.f32 0.0, %v2929
        %v2931 = vpop.f32.mrb[0].mxu0
        %2932 = vmatprep.mubr.bf16.mxu0 0
        %2933 = vmatmul.mubr.bf16.gmra.mrb[0].mxu0 %v2774
        %v2934 = vpop.f32.mrb[0].mxu0
        %v2935 = vadd.f32 0.0, %v2934
        %v2936 = vpop.f32.mrb[0].mxu0
        %v2937 = vpop.f32.mrb[0].mxu0
        %v2938 = vadd.f32 0.0, %v2937
        %v2939 = vpop.f32.mrb[0].mxu0
        %2940 = vmatprep.mubr.bf16.mxu0 0
        %2941 = vmatmul.mubr.bf16.gmra.mrb[0].mxu0 %v2775
        %v2942 = vpop.f32.mrb[0].mxu0
        %v2943 = vadd.f32 0.0, %v2942
        %v2944 = vpop.f32.mrb[0].mxu0
        %v2945 = vpop.f32.mrb[0].mxu0
        %v2946 = vadd.f32 0.0, %v2945
        %v2947 = vpop.f32.mrb[0].mxu0
        %2948 = vmatprep.mubr.bf16.mxu0 0
        %2949 = vmatmul.mubr.bf16.gmra.mrb[0].mxu0 %v2776
        %v2950 = vpop.f32.mrb[0].mxu0
        %v2951 = vadd.f32 0.0, %v2950
        %v2952 = vpop.f32.mrb[0].mxu0
        %v2953 = vpop.f32.mrb[0].mxu0
        %v2954 = vadd.f32 0.0, %v2953
        %v2955 = vpop.f32.mrb[0].mxu0
        %2956 = vmatprep.mubr.bf16.mxu0 0
        %2957 = vmatmul.mubr.bf16.gmra.mrb[0].mxu0 %v2777
        %v2958 = vpop.f32.mrb[0].mxu0
        %v2959 = vadd.f32 0.0, %v2958
        %v2960 = vpop.f32.mrb[0].mxu0
        %v2961 = vpop.f32.mrb[0].mxu0
        %v2962 = vadd.f32 0.0, %v2961
        %v2963 = vpop.f32.mrb[0].mxu0
        %2964 = vmatprep.mubr.bf16.mxu0 0
        %2965 = vmatmul.mubr.bf16.gmra.mrb[0].mxu0 %v2778
        %v2966 = vpop.f32.mrb[0].mxu0
        %v2967 = vadd.f32 0.0, %v2966
        %v2968 = vpop.f32.mrb[0].mxu0
        %v2969 = vpop.f32.mrb[0].mxu0
        %v2970 = vadd.f32 0.0, %v2969
        %v2971 = vpop.f32.mrb[0].mxu0
        %2972 = vmatprep.mubr.bf16.mxu0 0
        %2973 = vmatmul.mubr.bf16.gmra.mrb[0].mxu0 %v2779
        %v2974 = vpop.f32.mrb[0].mxu0
        %v2975 = vadd.f32 0.0, %v2974
        %v2976 = vpop.f32.mrb[0].mxu0
        %v2977 = vpop.f32.mrb[0].mxu0
        %v2978 = vadd.f32 0.0, %v2977
        %v2979 = vpop.f32.mrb[0].mxu0
        %2980 = vmatprep.mubr.bf16.mxu0 0
        %2981 = vmatmul.mubr.bf16.gmra.mrb[0].mxu0 %v2780
        %v2982 = vpop.f32.mrb[0].mxu0
        %v2983 = vadd.f32 0.0, %v2982
        %v2984 = vpop.f32.mrb[0].mxu0
        %v2985 = vpop.f32.mrb[0].mxu0
        %v2986 = vadd.f32 0.0, %v2985
        %v2987 = vpop.f32.mrb[0].mxu0
        %2988 = vmatprep.mubr.bf16.mxu0 0
        %2989 = vmatmul.mubr.bf16.gmra.mrb[0].mxu0 %v2781
        %v2990 = vpop.f32.mrb[0].mxu0
        %v2991 = vadd.f32 0.0, %v2990
        %v2992 = vpop.f32.mrb[0].mxu0
        %v2993 = vpop.f32.mrb[0].mxu0
        %v2994 = vadd.f32 0.0, %v2993
        %v2995 = vpop.f32.mrb[0].mxu0
        %2996 = vmatprep.mubr.bf16.mxu0 0
        %2997 = vmatmul.mubr.bf16.gmra.mrb[0].mxu0 %v2782
        %v2998 = vpop.f32.mrb[0].mxu0
        %v2999 = vadd.f32 0.0, %v2998
        %v3000 = vpop.f32.mrb[0].mxu0
        %v3001 = vpop.f32.mrb[0].mxu0
        %v3002 = vadd.f32 0.0, %v3001
        %v3003 = vpop.f32.mrb[0].mxu0
        %3004 = vmatprep.mubr.bf16.mxu0 0
        %3005 = vmatmul.mubr.bf16.gmra.mrb[0].mxu0 %v2783
        %v3006 = vpop.f32.mrb[0].mxu0
        %v3007 = vadd.f32 0.0, %v3006
        %v3008 = vpop.f32.mrb[0].mxu0
        %v3009 = vpop.f32.mrb[0].mxu0
        %v3010 = vadd.f32 0.0, %v3009
        %v3011 = vpop.f32.mrb[0].mxu0
        %3012 = vmatprep.mubr.bf16.mxu0 0
        %3013 = vmatmul.mubr.bf16.gmra.mrb[0].mxu0 %v2784
        %v3014 = vpop.f32.mrb[0].mxu0
        %v3015 = vadd.f32 0.0, %v3014
        %v3016 = vpop.f32.mrb[0].mxu0
        %v3017 = vpop.f32.mrb[0].mxu0
        %v3018 = vadd.f32 0.0, %v3017
        %v3019 = vpop.f32.mrb[0].mxu0
        %3020 = vmatprep.mubr.bf16.mxu0 0
        %3021 = vmatmul.mubr.bf16.gmra.mrb[0].mxu0 %v2785
        %v3022 = vpop.f32.mrb[0].mxu0
        %v3023 = vadd.f32 0.0, %v3022
        %v3024 = vpop.f32.mrb[0].mxu0
        %v3025 = vpop.f32.mrb[0].mxu0
        %v3026 = vadd.f32 0.0, %v3025
        %v3027 = vpop.f32.mrb[0].mxu0
        %3028 = vmatprep.mubr.bf16.mxu0 0
        %3029 = vmatmul.mubr.bf16.gmra.mrb[0].mxu0 %v2786
        %v3030 = vpop.f32.mrb[0].mxu0
        %v3031 = vadd.f32 0.0, %v3030
        %v3032 = vpop.f32.mrb[0].mxu0
        %v3033 = vpop.f32.mrb[0].mxu0
        %v3034 = vadd.f32 0.0, %v3033
        %v3035 = vpop.f32.mrb[0].mxu0
        %3036 = vmatprep.mubr.bf16.mxu0 0
        %3037 = vmatmul.mubr.bf16.gmra.mrb[0].mxu0 %v2787
        %v3038 = vpop.f32.mrb[0].mxu0
        %v3039 = vadd.f32 0.0, %v3038
        %v3040 = vpop.f32.mrb[0].mxu0
        %v3041 = vpop.f32.mrb[0].mxu0
        %v3042 = vadd.f32 0.0, %v3041
        %v3043 = vpop.f32.mrb[0].mxu0
        %3044 = vmatprep.mubr.bf16.mxu0 0
        %3045 = vmatmul.mubr.bf16.gmra.mrb[0].mxu0 %v2788
        %v3046 = vpop.f32.mrb[0].mxu0
        %v3047 = vadd.f32 0.0, %v3046
        %v3048 = vpop.f32.mrb[0].mxu0
        %v3049 = vpop.f32.mrb[0].mxu0
        %v3050 = vadd.f32 0.0, %v3049
        %v3051 = vpop.f32.mrb[0].mxu0
        %3052 = vmatprep.mubr.bf16.mxu0 0
        %3053 = vmatmul.mubr.bf16.gmra.mrb[0].mxu0 %v2789
        %v3054 = vpop.f32.mrb[0].mxu0
        %v3055 = vadd.f32 0.0, %v3054
        %v3056 = vpop.f32.mrb[0].mxu0
        %v3057 = vpop.f32.mrb[0].mxu0
        %v3058 = vadd.f32 0.0, %v3057
        %v3059 = vpop.f32.mrb[0].mxu0
        %3060 = vmatprep.mubr.bf16.mxu0 0
        %3061 = vmatmul.mubr.bf16.gmra.mrb[0].mxu0 %v2790
        %v3062 = vpop.f32.mrb[0].mxu0
        %v3063 = vadd.f32 0.0, %v3062
        %v3064 = vpop.f32.mrb[0].mxu0
        %v3065 = vpop.f32.mrb[0].mxu0
        %v3066 = vadd.f32 0.0, %v3065
        %v3067 = vpop.f32.mrb[0].mxu0
        %3068 = vmatprep.mubr.bf16.mxu0 0
        %3069 = vmatmul.mubr.bf16.gmra.mrb[0].mxu0 %v2791
        %v3070 = vpop.f32.mrb[0].mxu0
        %v3071 = vadd.f32 0.0, %v3070
        %v3072 = vpop.f32.mrb[0].mxu0
        %v3073 = vpop.f32.mrb[0].mxu0
        %v3074 = vadd.f32 0.0, %v3073
        %v3075 = vpop.f32.mrb[0].mxu0
        %3076 = vmatprep.mubr.bf16.mxu0 0
        %3077 = vmatmul.mubr.bf16.gmra.mrb[0].mxu0 %v2792
        %v3078 = vpop.f32.mrb[0].mxu0
        %v3079 = vadd.f32 0.0, %v3078
        %v3080 = vpop.f32.mrb[0].mxu0
        %v3081 = vpop.f32.mrb[0].mxu0
        %v3082 = vadd.f32 0.0, %v3081
        %v3083 = vpop.f32.mrb[0].mxu0
        %3084 = vmatprep.mubr.bf16.mxu0 0
        %3085 = vmatmul.mubr.bf16.gmra.mrb[0].mxu0 %v2793
        %v3086 = vpop.f32.mrb[0].mxu0
        %v3087 = vadd.f32 0.0, %v3086
        %v3088 = vpop.f32.mrb[0].mxu0
        %v3089 = vpop.f32.mrb[0].mxu0
        %v3090 = vadd.f32 0.0, %v3089
        %v3091 = vpop.f32.mrb[0].mxu0
        %3092 = vmatprep.mubr.bf16.mxu0 0
        %3093 = vmatmul.mubr.bf16.gmra.mrb[0].mxu0 %v2794
        %v3094 = vpop.f32.mrb[0].mxu0
        %v3095 = vadd.f32 0.0, %v3094
        %v3096 = vpop.f32.mrb[0].mxu0
        %v3097 = vpop.f32.mrb[0].mxu0
        %v3098 = vadd.f32 0.0, %v3097
        %v3099 = vpop.f32.mrb[0].mxu0
        %3100 = vmatprep.mubr.bf16.mxu0 0
        %3101 = vmatmul.mubr.bf16.gmra.mrb[0].mxu0 %v2795
        %v3102 = vpop.f32.mrb[0].mxu0
        %v3103 = vadd.f32 0.0, %v3102
        %v3104 = vpop.f32.mrb[0].mxu0
        %v3105 = vpop.f32.mrb[0].mxu0
        %v3106 = vadd.f32 0.0, %v3105
        %v3107 = vpop.f32.mrb[0].mxu0
        %3108 = vmatprep.mubr.bf16.mxu0 0
        %3109 = vmatmul.mubr.bf16.gmra.mrb[0].mxu0 %v2796
        %v3110 = vpop.f32.mrb[0].mxu0
        %v3111 = vadd.f32 0.0, %v3110
        %v3112 = vpop.f32.mrb[0].mxu0
        %v3113 = vpop.f32.mrb[0].mxu0
        %v3114 = vadd.f32 0.0, %v3113
        %v3115 = vpop.f32.mrb[0].mxu0
        %3116 = vmatprep.mubr.bf16.mxu0 0
        %3117 = vmatmul.mubr.bf16.gmra.mrb[0].mxu0 %v2797
        %v3118 = vpop.f32.mrb[0].mxu0
        %v3119 = vadd.f32 0.0, %v3118
        %v3120 = vpop.f32.mrb[0].mxu0
        %v3121 = vpop.f32.mrb[0].mxu0
        %v3122 = vadd.f32 0.0, %v3121
        %v3123 = vpop.f32.mrb[0].mxu0
        %3124 = vmatprep.mubr.bf16.mxu0 0
        %3125 = vmatmul.mubr.bf16.gmra.mrb[0].mxu0 %v2798
        %v3126 = vpop.f32.mrb[0].mxu0
        %v3127 = vadd.f32 0.0, %v3126
        %v3128 = vpop.f32.mrb[0].mxu0
        %v3129 = vpop.f32.mrb[0].mxu0
        %v3130 = vadd.f32 0.0, %v3129
        %v3131 = vpop.f32.mrb[0].mxu0
        %3132 = vmatprep.mubr.bf16.mxu0 0
        %3133 = vmatmul.mubr.bf16.gmra.mrb[0].mxu0 %v2799
        %v3134 = vpop.f32.mrb[0].mxu0
        %v3135 = vadd.f32 0.0, %v3134
        %v3136 = vpop.f32.mrb[0].mxu0
        %v3137 = vpop.f32.mrb[0].mxu0
        %v3138 = vadd.f32 0.0, %v3137
        %v3139 = vpop.f32.mrb[0].mxu0
        %3140 = vmatprep.mubr.bf16.mxu0 0
        %3141 = vmatmul.mubr.bf16.gmra.mrb[0].mxu0 %v2800
        %v3142 = vpop.f32.mrb[0].mxu0
        %v3143 = vadd.f32 0.0, %v3142
        %v3144 = vpop.f32.mrb[0].mxu0
        %v3145 = vpop.f32.mrb[0].mxu0
        %v3146 = vadd.f32 0.0, %v3145
        %v3147 = vpop.f32.mrb[0].mxu0
        %3148 = vmatprep.mubr.bf16.mxu0 0
        %3149 = vmatmul.mubr.bf16.gmra.mrb[0].mxu0 %v2801
        %v3150 = vpop.f32.mrb[0].mxu0
        %v3151 = vadd.f32 0.0, %v3150
        %v3152 = vpop.f32.mrb[0].mxu0
        %v3153 = vpop.f32.mrb[0].mxu0
        %v3154 = vadd.f32 0.0, %v3153
        %v3155 = vpop.f32.mrb[0].mxu0
        %3156 = vmatprep.mubr.bf16.mxu0 0
        %3157 = vmatmul.mubr.bf16.gmra.mrb[0].mxu0 %v2802
        %v3158 = vpop.f32.mrb[0].mxu0
        %v3159 = vadd.f32 0.0, %v3158
        %v3160 = vpop.f32.mrb[0].mxu0
        %v3161 = vpop.f32.mrb[0].mxu0
        %v3162 = vadd.f32 0.0, %v3161
        %v3163 = vpop.f32.mrb[0].mxu0
        %3164 = vmatprep.mubr.bf16.mxu0 0
        %3165 = vmatmul.mubr.bf16.gmra.mrb[0].mxu0 %v2803
        %v3166 = vpop.f32.mrb[0].mxu0
        %v3167 = vadd.f32 0.0, %v3166
        %v3168 = vpop.f32.mrb[0].mxu0
        %v3169 = vpop.f32.mrb[0].mxu0
        %v3170 = vadd.f32 0.0, %v3169
        %v3171 = vpop.f32.mrb[0].mxu0
        %3172 = vdwg.mxu0
        %v3173 = vadd.f32 %v2499, %v2919
        %v3174 = vadd.f32 %v2500, %v2922
        %v3175 = vadd.f32 %v2501, %v2927
        %v3176 = vadd.f32 %v2502, %v2930
        %v3177 = vadd.f32 %v2503, %v2935
        %v3178 = vadd.f32 %v2504, %v2938
        %v3179 = vadd.f32 %v2505, %v2943
        %v3180 = vadd.f32 %v2506, %v2946
        %v3181 = vadd.f32 %v2507, %v2951
        %v3182 = vadd.f32 %v2508, %v2954
        %v3183 = vadd.f32 %v2509, %v2959
        %v3184 = vadd.f32 %v2510, %v2962
        %v3185 = vadd.f32 %v2511, %v2967
        %v3186 = vadd.f32 %v2512, %v2970
        %v3187 = vadd.f32 %v2513, %v2975
        %v3188 = vadd.f32 %v2514, %v2978
        %v3189 = vadd.f32 %v2515, %v2983
        %v3190 = vadd.f32 %v2516, %v2986
        %v3191 = vadd.f32 %v2517, %v2991
        %v3192 = vadd.f32 %v2518, %v2994
        %v3193 = vadd.f32 %v2519, %v2999
        %v3194 = vadd.f32 %v2520, %v3002
        %v3195 = vadd.f32 %v2521, %v3007
        %v3196 = vadd.f32 %v2522, %v3010
        %v3197 = vadd.f32 %v2523, %v3015
        %v3198 = vadd.f32 %v2524, %v3018
        %v3199 = vadd.f32 %v2525, %v3023
        %v3200 = vadd.f32 %v2526, %v3026
        %v3201 = vadd.f32 %v2527, %v3031
        %v3202 = vadd.f32 %v2528, %v3034
        %v3203 = vadd.f32 %v2529, %v3039
        %v3204 = vadd.f32 %v2530, %v3042
        %v3205 = vadd.f32 %v2531, %v3047
        %v3206 = vadd.f32 %v2532, %v3050
        %v3207 = vadd.f32 %v2533, %v3055
        %v3208 = vadd.f32 %v2534, %v3058
        %v3209 = vadd.f32 %v2535, %v3063
        %v3210 = vadd.f32 %v2536, %v3066
        %v3211 = vadd.f32 %v2537, %v3071
        %v3212 = vadd.f32 %v2538, %v3074
        %v3213 = vadd.f32 %v2539, %v3079
        %v3214 = vadd.f32 %v2540, %v3082
        %v3215 = vadd.f32 %v2541, %v3087
        %v3216 = vadd.f32 %v2542, %v3090
        %v3217 = vadd.f32 %v2543, %v3095
        %v3218 = vadd.f32 %v2544, %v3098
        %v3219 = vadd.f32 %v2545, %v3103
        %v3220 = vadd.f32 %v2546, %v3106
        %v3221 = vadd.f32 %v2547, %v3111
        %v3222 = vadd.f32 %v2548, %v3114
        %v3223 = vadd.f32 %v2549, %v3119
        %v3224 = vadd.f32 %v2550, %v3122
        %v3225 = vadd.f32 %v2551, %v3127
        %v3226 = vadd.f32 %v2552, %v3130
        %v3227 = vadd.f32 %v2553, %v3135
        %v3228 = vadd.f32 %v2554, %v3138
        %v3229 = vadd.f32 %v2555, %v3143
        %v3230 = vadd.f32 %v2556, %v3146
        %v3231 = vadd.f32 %v2557, %v3151
        %v3232 = vadd.f32 %v2558, %v3154
        %v3233 = vadd.f32 %v2559, %v3159
        %v3234 = vadd.f32 %v2560, %v3162
        %v3235 = vadd.f32 %v2561, %v3167
        %v3236 = vadd.f32 %v2562, %v3170
        %v3237 = vld [vmem:[%s203 + $0x50] sm:$0xf]
        %v3238 = vld [vmem:[%s203 + $0x54] sm:$0xf]
        %v3239 = vld [vmem:[%s203 + $0x58] sm:$0xf]
        %v3240 = vld [vmem:[%s203 + $0x5c] sm:$0xf]
        %v3241 = vld [vmem:[%s203 + $0x60] sm:$0xf]
        %v3242 = vld [vmem:[%s203 + $0x64] sm:$0xf]
        %v3243 = vld [vmem:[%s203 + $0x68] sm:$0xf]
        %v3244 = vld [vmem:[%s203 + $0x6c] sm:$0xf]
        %v3245 = vld [vmem:[%s203 + $0x70] sm:$0xf]
        %v3246 = vld [vmem:[%s203 + $0x74] sm:$0xf]
        %v3247 = vld [vmem:[%s203 + $0x78] sm:$0xf]
        %v3248 = vld [vmem:[%s203 + $0x7c] sm:$0xf]
        %v3249 = vld [vmem:[%s203 + $0x80] sm:$0xf]
        %v3250 = vld [vmem:[%s203 + $0x84] sm:$0xf]
        %v3251 = vld [vmem:[%s203 + $0x88] sm:$0xf]
        %v3252 = vld [vmem:[%s203 + $0x8c] sm:$0xf]
        %v3253 = vld [vmem:[%s203 + $0x90] sm:$0xf]
        %v3254 = vld [vmem:[%s203 + $0x94] sm:$0xf]
        %v3255 = vld [vmem:[%s203 + $0x98] sm:$0xf]
        %v3256 = vld [vmem:[%s203 + $0x9c] sm:$0xf]
        %v3257 = vld [vmem:[%s203 + $0xa0] sm:$0xf]
        %v3258 = vld [vmem:[%s203 + $0xa4] sm:$0xf]
        %v3259 = vld [vmem:[%s203 + $0xa8] sm:$0xf]
        %v3260 = vld [vmem:[%s203 + $0xac] sm:$0xf]
        %v3261 = vld [vmem:[%s203 + $0xb0] sm:$0xf]
        %v3262 = vld [vmem:[%s203 + $0xb4] sm:$0xf]
        %v3263 = vld [vmem:[%s203 + $0xb8] sm:$0xf]
        %v3264 = vld [vmem:[%s203 + $0xbc] sm:$0xf]
        %v3265 = vld [vmem:[%s203 + $0xc0] sm:$0xf]
        %v3266 = vld [vmem:[%s203 + $0xc4] sm:$0xf]
        %v3267 = vld [vmem:[%s203 + $0xc8] sm:$0xf]
        %v3268 = vld [vmem:[%s203 + $0xcc] sm:$0xf]
        %v3269 = vld [vmem:[%s203 + $0xd0] sm:$0xf]
        %v3270 = vld [vmem:[%s203 + $0xd4] sm:$0xf]
        %v3271 = vld [vmem:[%s203 + $0xd8] sm:$0xf]
        %v3272 = vld [vmem:[%s203 + $0xdc] sm:$0xf]
        %v3273 = vld [vmem:[%s203 + $0xe0] sm:$0xf]
        %v3274 = vld [vmem:[%s203 + $0xe4] sm:$0xf]
        %v3275 = vld [vmem:[%s203 + $0xe8] sm:$0xf]
        %v3276 = vld [vmem:[%s203 + $0xec] sm:$0xf]
        %v3277 = vld [vmem:[%s203 + $0xf0] sm:$0xf]
        %v3278 = vld [vmem:[%s203 + $0xf4] sm:$0xf]
        %v3279 = vld [vmem:[%s203 + $0xf8] sm:$0xf]
        %v3280 = vld [vmem:[%s203 + $0xfc] sm:$0xf]
        %v3281 = vld [vmem:[%s203 + $0x100] sm:$0xf]
        %v3282 = vld [vmem:[%s203 + $0x104] sm:$0xf]
        %v3283 = vld [vmem:[%s203 + $0x108] sm:$0xf]
        %v3284 = vld [vmem:[%s203 + $0x10c] sm:$0xf]
        %v3285 = vld [vmem:[%s203 + $0x110] sm:$0xf]
        %v3286 = vld [vmem:[%s203 + $0x114] sm:$0xf]
        %v3287 = vld [vmem:[%s203 + $0x118] sm:$0xf]
        %v3288 = vld [vmem:[%s203 + $0x11c] sm:$0xf]
        %v3289 = vld [vmem:[%s203 + $0x120] sm:$0xf]
        %v3290 = vld [vmem:[%s203 + $0x124] sm:$0xf]
        %v3291 = vld [vmem:[%s203 + $0x128] sm:$0xf]
        %v3292 = vld [vmem:[%s203 + $0x12c] sm:$0xf]
        %v3293 = vld [vmem:[%s203 + $0x130] sm:$0xf]
        %v3294 = vld [vmem:[%s203 + $0x134] sm:$0xf]
        %v3295 = vld [vmem:[%s203 + $0x138] sm:$0xf]
        %v3296 = vld [vmem:[%s203 + $0x13c] sm:$0xf]
        %v3297 = vld [vmem:[%s203 + $0x140] sm:$0xf]
        %v3298 = vld [vmem:[%s203 + $0x144] sm:$0xf]
        %v3299 = vld [vmem:[%s203 + $0x148] sm:$0xf]
        %v3300 = vld [vmem:[%s203 + $0x14c] sm:$0xf]
        %s3301 = scalar_lea.vmem [#allocation5], 320
        %v3302 = vld [vmem:[%s3301] sm:$0xf]
        %v3303 = vld [vmem:[%s3301 + $0x4] sm:$0xf]
        %v3304 = vld [vmem:[%s3301 + $0x8] sm:$0xf]
        %v3305 = vld [vmem:[%s3301 + $0xc] sm:$0xf]
        %v3306 = vld [vmem:[%s3301 + $0x10] sm:$0xf]
        %v3307 = vld [vmem:[%s3301 + $0x14] sm:$0xf]
        %v3308 = vld [vmem:[%s3301 + $0x18] sm:$0xf]
        %v3309 = vld [vmem:[%s3301 + $0x1c] sm:$0xf]
        %v3310 = vld [vmem:[%s3301 + $0x20] sm:$0xf]
        %v3311 = vld [vmem:[%s3301 + $0x24] sm:$0xf]
        %v3312 = vld [vmem:[%s3301 + $0x28] sm:$0xf]
        %v3313 = vld [vmem:[%s3301 + $0x2c] sm:$0xf]
        %v3314 = vld [vmem:[%s3301 + $0x30] sm:$0xf]
        %v3315 = vld [vmem:[%s3301 + $0x34] sm:$0xf]
        %v3316 = vld [vmem:[%s3301 + $0x38] sm:$0xf]
        %v3317 = vld [vmem:[%s3301 + $0x3c] sm:$0xf]
        %v3382 = vunpack.c.l.b16 %v3237
        %v3383 = vunpack.c.l.b16 %v3238
        %v3384 = vunpack.c.l.b16 %v3239
        %v3385 = vunpack.c.l.b16 %v3240
        %v3386 = vunpack.c.l.b16 %v3241
        %v3387 = vunpack.c.l.b16 %v3242
        %v3388 = vunpack.c.l.b16 %v3243
        %v3389 = vunpack.c.l.b16 %v3244
        %v3390 = vunpack.c.l.b16 %v3245
        %v3391 = vunpack.c.l.b16 %v3246
        %v3392 = vunpack.c.l.b16 %v3247
        %v3393 = vunpack.c.l.b16 %v3248
        %v3394 = vunpack.c.l.b16 %v3249
        %v3395 = vunpack.c.l.b16 %v3250
        %v3396 = vunpack.c.l.b16 %v3251
        %v3397 = vunpack.c.l.b16 %v3252
        %v3398 = vunpack.c.l.b16 %v3253
        %v3399 = vunpack.c.l.b16 %v3254
        %v3400 = vunpack.c.l.b16 %v3255
        %v3401 = vunpack.c.l.b16 %v3256
        %v3402 = vunpack.c.l.b16 %v3257
        %v3403 = vunpack.c.l.b16 %v3258
        %v3404 = vunpack.c.l.b16 %v3259
        %v3405 = vunpack.c.l.b16 %v3260
        %v3406 = vunpack.c.l.b16 %v3261
        %v3407 = vunpack.c.l.b16 %v3262
        %v3408 = vunpack.c.l.b16 %v3263
        %v3409 = vunpack.c.l.b16 %v3264
        %v3410 = vunpack.c.l.b16 %v3265
        %v3411 = vunpack.c.l.b16 %v3266
        %v3412 = vunpack.c.l.b16 %v3267
        %v3413 = vunpack.c.l.b16 %v3268
        %v3414 = vunpack.c.l.b16 %v3269
        %v3415 = vunpack.c.l.b16 %v3270
        %v3416 = vunpack.c.l.b16 %v3271
        %v3417 = vunpack.c.l.b16 %v3272
        %v3418 = vunpack.c.l.b16 %v3273
        %v3419 = vunpack.c.l.b16 %v3274
        %v3420 = vunpack.c.l.b16 %v3275
        %v3421 = vunpack.c.l.b16 %v3276
        %v3422 = vunpack.c.l.b16 %v3277
        %v3423 = vunpack.c.l.b16 %v3278
        %v3424 = vunpack.c.l.b16 %v3279
        %v3425 = vunpack.c.l.b16 %v3280
        %v3426 = vunpack.c.l.b16 %v3281
        %v3427 = vunpack.c.l.b16 %v3282
        %v3428 = vunpack.c.l.b16 %v3283
        %v3429 = vunpack.c.l.b16 %v3284
        %v3430 = vunpack.c.l.b16 %v3285
        %v3431 = vunpack.c.l.b16 %v3286
        %v3432 = vunpack.c.l.b16 %v3287
        %v3433 = vunpack.c.l.b16 %v3288
        %v3434 = vunpack.c.l.b16 %v3289
        %v3435 = vunpack.c.l.b16 %v3290
        %v3436 = vunpack.c.l.b16 %v3291
        %v3437 = vunpack.c.l.b16 %v3292
        %v3438 = vunpack.c.l.b16 %v3293
        %v3439 = vunpack.c.l.b16 %v3294
        %v3440 = vunpack.c.l.b16 %v3295
        %v3441 = vunpack.c.l.b16 %v3296
        %v3442 = vunpack.c.l.b16 %v3297
        %v3443 = vunpack.c.l.b16 %v3298
        %v3444 = vunpack.c.l.b16 %v3299
        %v3445 = vunpack.c.l.b16 %v3300
        %v3446 = vpack.c.b16 %v3383, %v3382
        %v3447 = vpack.c.b16 %v3385, %v3384
        %v3448 = vpack.c.b16 %v3387, %v3386
        %v3449 = vpack.c.b16 %v3389, %v3388
        %v3450 = vpack.c.b16 %v3391, %v3390
        %v3451 = vpack.c.b16 %v3393, %v3392
        %v3452 = vpack.c.b16 %v3395, %v3394
        %v3453 = vpack.c.b16 %v3397, %v3396
        %v3454 = vpack.c.b16 %v3399, %v3398
        %v3455 = vpack.c.b16 %v3401, %v3400
        %v3456 = vpack.c.b16 %v3403, %v3402
        %v3457 = vpack.c.b16 %v3405, %v3404
        %v3458 = vpack.c.b16 %v3407, %v3406
        %v3459 = vpack.c.b16 %v3409, %v3408
        %v3460 = vpack.c.b16 %v3411, %v3410
        %v3461 = vpack.c.b16 %v3413, %v3412
        %v3462 = vpack.c.b16 %v3415, %v3414
        %v3463 = vpack.c.b16 %v3417, %v3416
        %v3464 = vpack.c.b16 %v3419, %v3418
        %v3465 = vpack.c.b16 %v3421, %v3420
        %v3466 = vpack.c.b16 %v3423, %v3422
        %v3467 = vpack.c.b16 %v3425, %v3424
        %v3468 = vpack.c.b16 %v3427, %v3426
        %v3469 = vpack.c.b16 %v3429, %v3428
        %v3470 = vpack.c.b16 %v3431, %v3430
        %v3471 = vpack.c.b16 %v3433, %v3432
        %v3472 = vpack.c.b16 %v3435, %v3434
        %v3473 = vpack.c.b16 %v3437, %v3436
        %v3474 = vpack.c.b16 %v3439, %v3438
        %v3475 = vpack.c.b16 %v3441, %v3440
        %v3476 = vpack.c.b16 %v3443, %v3442
        %v3477 = vpack.c.b16 %v3445, %v3444
        %v3526 = vunpack.c.l.b16 %v3302
        %v3527 = vunpack.c.l.b16 %v3303
        %v3528 = vunpack.c.l.b16 %v3304
        %v3529 = vunpack.c.l.b16 %v3305
        %v3530 = vunpack.c.l.b16 %v3306
        %v3531 = vunpack.c.l.b16 %v3307
        %v3532 = vunpack.c.l.b16 %v3308
        %v3533 = vunpack.c.l.b16 %v3309
        %v3534 = vunpack.c.l.b16 %v3310
        %v3535 = vunpack.c.l.b16 %v3311
        %v3536 = vunpack.c.l.b16 %v3312
        %v3537 = vunpack.c.l.b16 %v3313
        %v3538 = vunpack.c.l.b16 %v3314
        %v3539 = vunpack.c.l.b16 %v3315
        %v3540 = vunpack.c.l.b16 %v3316
        %v3541 = vunpack.c.l.b16 %v3317
        %v3542 = vpack.c.b16 %v3527, %v3526
        %v3543 = vpack.c.b16 %v3529, %v3528
        %v3544 = vpack.c.b16 %v3531, %v3530
        %v3545 = vpack.c.b16 %v3533, %v3532
        %v3546 = vpack.c.b16 %v3535, %v3534
        %v3547 = vpack.c.b16 %v3537, %v3536
        %v3548 = vpack.c.b16 %v3539, %v3538
        %v3549 = vpack.c.b16 %v3541, %v3540
        %3558 = vmatprep.subr.bf16.mxu0 0
        %3559 = vmatpush1.bf16.msra.mxu0 %v3542
        %3560 = vmatprep.subr.bf16.mxu0 0
        %3561 = vmatpush1.bf16.msra.mxu0 %v3543
        %3562 = vmatprep.subr.bf16.mxu0 0
        %3563 = vmatpush1.bf16.msra.mxu0 %v3544
        %3564 = vmatprep.subr.bf16.mxu0 0
        %3565 = vmatpush1.bf16.msra.mxu0 %v3545
        %3566 = vmatprep.subr.bf16.mxu0 0
        %3567 = vmatpush1.bf16.msra.mxu0 %v3546
        %3568 = vmatprep.subr.bf16.mxu0 0
        %3569 = vmatpush1.bf16.msra.mxu0 %v3547
        %3570 = vmatprep.subr.bf16.mxu0 0
        %3571 = vmatpush1.bf16.msra.mxu0 %v3548
        %3572 = vmatprep.subr.bf16.mxu0 0
        %3573 = vmatpush1.bf16.msra.mxu0 %v3549
        %3574 = vmatprep.subr.bf16.mxu0 0
        %3575 = vmatpush1.bf16.msra.mxu0 0
        %3576 = vmatprep.subr.bf16.mxu0 0
        %3577 = vmatpush1.bf16.msra.mxu0 0
        %3578 = vmatprep.subr.bf16.mxu0 0
        %3579 = vmatpush1.bf16.msra.mxu0 0
        %3580 = vmatprep.subr.bf16.mxu0 0
        %3581 = vmatpush1.bf16.msra.mxu0 0
        %3582 = vmatprep.subr.bf16.mxu0 0
        %3583 = vmatpush1.bf16.msra.mxu0 0
        %3584 = vmatprep.subr.bf16.mxu0 0
        %3585 = vmatpush1.bf16.msra.mxu0 0
        %3586 = vmatprep.subr.bf16.mxu0 0
        %3587 = vmatpush1.bf16.msra.mxu0 0
        %3588 = vmatprep.subr.bf16.mxu0 0
        %3589 = vmatpush1.bf16.msra.mxu0 0
        %3590 = vmatprep.mubr.bf16.mxu0 0
        %3591 = vmatmul.mubr.bf16.gmra.mrb[0].mxu0 %v3446
        %v3592 = vpop.f32.mrb[0].mxu0
        %v3593 = vadd.f32 0.0, %v3592
        %v3594 = vpop.f32.mrb[0].mxu0
        %v3595 = vpop.f32.mrb[0].mxu0
        %v3596 = vadd.f32 0.0, %v3595
        %v3597 = vpop.f32.mrb[0].mxu0
        %3598 = vmatprep.mubr.bf16.mxu0 0
        %3599 = vmatmul.mubr.bf16.gmra.mrb[0].mxu0 %v3447
        %v3600 = vpop.f32.mrb[0].mxu0
        %v3601 = vadd.f32 0.0, %v3600
        %v3602 = vpop.f32.mrb[0].mxu0
        %v3603 = vpop.f32.mrb[0].mxu0
        %v3604 = vadd.f32 0.0, %v3603
        %v3605 = vpop.f32.mrb[0].mxu0
        %3606 = vmatprep.mubr.bf16.mxu0 0
        %3607 = vmatmul.mubr.bf16.gmra.mrb[0].mxu0 %v3448
        %v3608 = vpop.f32.mrb[0].mxu0
        %v3609 = vadd.f32 0.0, %v3608
        %v3610 = vpop.f32.mrb[0].mxu0
        %v3611 = vpop.f32.mrb[0].mxu0
        %v3612 = vadd.f32 0.0, %v3611
        %v3613 = vpop.f32.mrb[0].mxu0
        %3614 = vmatprep.mubr.bf16.mxu0 0
        %3615 = vmatmul.mubr.bf16.gmra.mrb[0].mxu0 %v3449
        %v3616 = vpop.f32.mrb[0].mxu0
        %v3617 = vadd.f32 0.0, %v3616
        %v3618 = vpop.f32.mrb[0].mxu0
        %v3619 = vpop.f32.mrb[0].mxu0
        %v3620 = vadd.f32 0.0, %v3619
        %v3621 = vpop.f32.mrb[0].mxu0
        %3622 = vmatprep.mubr.bf16.mxu0 0
        %3623 = vmatmul.mubr.bf16.gmra.mrb[0].mxu0 %v3450
        %v3624 = vpop.f32.mrb[0].mxu0
        %v3625 = vadd.f32 0.0, %v3624
        %v3626 = vpop.f32.mrb[0].mxu0
        %v3627 = vpop.f32.mrb[0].mxu0
        %v3628 = vadd.f32 0.0, %v3627
        %v3629 = vpop.f32.mrb[0].mxu0
        %3630 = vmatprep.mubr.bf16.mxu0 0
        %3631 = vmatmul.mubr.bf16.gmra.mrb[0].mxu0 %v3451
        %v3632 = vpop.f32.mrb[0].mxu0
        %v3633 = vadd.f32 0.0, %v3632
        %v3634 = vpop.f32.mrb[0].mxu0
        %v3635 = vpop.f32.mrb[0].mxu0
        %v3636 = vadd.f32 0.0, %v3635
        %v3637 = vpop.f32.mrb[0].mxu0
        %3638 = vmatprep.mubr.bf16.mxu0 0
        %3639 = vmatmul.mubr.bf16.gmra.mrb[0].mxu0 %v3452
        %v3640 = vpop.f32.mrb[0].mxu0
        %v3641 = vadd.f32 0.0, %v3640
        %v3642 = vpop.f32.mrb[0].mxu0
        %v3643 = vpop.f32.mrb[0].mxu0
        %v3644 = vadd.f32 0.0, %v3643
        %v3645 = vpop.f32.mrb[0].mxu0
        %3646 = vmatprep.mubr.bf16.mxu0 0
        %3647 = vmatmul.mubr.bf16.gmra.mrb[0].mxu0 %v3453
        %v3648 = vpop.f32.mrb[0].mxu0
        %v3649 = vadd.f32 0.0, %v3648
        %v3650 = vpop.f32.mrb[0].mxu0
        %v3651 = vpop.f32.mrb[0].mxu0
        %v3652 = vadd.f32 0.0, %v3651
        %v3653 = vpop.f32.mrb[0].mxu0
        %3654 = vmatprep.mubr.bf16.mxu0 0
        %3655 = vmatmul.mubr.bf16.gmra.mrb[0].mxu0 %v3454
        %v3656 = vpop.f32.mrb[0].mxu0
        %v3657 = vadd.f32 0.0, %v3656
        %v3658 = vpop.f32.mrb[0].mxu0
        %v3659 = vpop.f32.mrb[0].mxu0
        %v3660 = vadd.f32 0.0, %v3659
        %v3661 = vpop.f32.mrb[0].mxu0
        %3662 = vmatprep.mubr.bf16.mxu0 0
        %3663 = vmatmul.mubr.bf16.gmra.mrb[0].mxu0 %v3455
        %v3664 = vpop.f32.mrb[0].mxu0
        %v3665 = vadd.f32 0.0, %v3664
        %v3666 = vpop.f32.mrb[0].mxu0
        %v3667 = vpop.f32.mrb[0].mxu0
        %v3668 = vadd.f32 0.0, %v3667
        %v3669 = vpop.f32.mrb[0].mxu0
        %3670 = vmatprep.mubr.bf16.mxu0 0
        %3671 = vmatmul.mubr.bf16.gmra.mrb[0].mxu0 %v3456
        %v3672 = vpop.f32.mrb[0].mxu0
        %v3673 = vadd.f32 0.0, %v3672
        %v3674 = vpop.f32.mrb[0].mxu0
        %v3675 = vpop.f32.mrb[0].mxu0
        %v3676 = vadd.f32 0.0, %v3675
        %v3677 = vpop.f32.mrb[0].mxu0
        %3678 = vmatprep.mubr.bf16.mxu0 0
        %3679 = vmatmul.mubr.bf16.gmra.mrb[0].mxu0 %v3457
        %v3680 = vpop.f32.mrb[0].mxu0
        %v3681 = vadd.f32 0.0, %v3680
        %v3682 = vpop.f32.mrb[0].mxu0
        %v3683 = vpop.f32.mrb[0].mxu0
        %v3684 = vadd.f32 0.0, %v3683
        %v3685 = vpop.f32.mrb[0].mxu0
        %3686 = vmatprep.mubr.bf16.mxu0 0
        %3687 = vmatmul.mubr.bf16.gmra.mrb[0].mxu0 %v3458
        %v3688 = vpop.f32.mrb[0].mxu0
        %v3689 = vadd.f32 0.0, %v3688
        %v3690 = vpop.f32.mrb[0].mxu0
        %v3691 = vpop.f32.mrb[0].mxu0
        %v3692 = vadd.f32 0.0, %v3691
        %v3693 = vpop.f32.mrb[0].mxu0
        %3694 = vmatprep.mubr.bf16.mxu0 0
        %3695 = vmatmul.mubr.bf16.gmra.mrb[0].mxu0 %v3459
        %v3696 = vpop.f32.mrb[0].mxu0
        %v3697 = vadd.f32 0.0, %v3696
        %v3698 = vpop.f32.mrb[0].mxu0
        %v3699 = vpop.f32.mrb[0].mxu0
        %v3700 = vadd.f32 0.0, %v3699
        %v3701 = vpop.f32.mrb[0].mxu0
        %3702 = vmatprep.mubr.bf16.mxu0 0
        %3703 = vmatmul.mubr.bf16.gmra.mrb[0].mxu0 %v3460
        %v3704 = vpop.f32.mrb[0].mxu0
        %v3705 = vadd.f32 0.0, %v3704
        %v3706 = vpop.f32.mrb[0].mxu0
        %v3707 = vpop.f32.mrb[0].mxu0
        %v3708 = vadd.f32 0.0, %v3707
        %v3709 = vpop.f32.mrb[0].mxu0
        %3710 = vmatprep.mubr.bf16.mxu0 0
        %3711 = vmatmul.mubr.bf16.gmra.mrb[0].mxu0 %v3461
        %v3712 = vpop.f32.mrb[0].mxu0
        %v3713 = vadd.f32 0.0, %v3712
        %v3714 = vpop.f32.mrb[0].mxu0
        %v3715 = vpop.f32.mrb[0].mxu0
        %v3716 = vadd.f32 0.0, %v3715
        %v3717 = vpop.f32.mrb[0].mxu0
        %3718 = vmatprep.mubr.bf16.mxu0 0
        %3719 = vmatmul.mubr.bf16.gmra.mrb[0].mxu0 %v3462
        %v3720 = vpop.f32.mrb[0].mxu0
        %v3721 = vadd.f32 0.0, %v3720
        %v3722 = vpop.f32.mrb[0].mxu0
        %v3723 = vpop.f32.mrb[0].mxu0
        %v3724 = vadd.f32 0.0, %v3723
        %v3725 = vpop.f32.mrb[0].mxu0
        %3726 = vmatprep.mubr.bf16.mxu0 0
        %3727 = vmatmul.mubr.bf16.gmra.mrb[0].mxu0 %v3463
        %v3728 = vpop.f32.mrb[0].mxu0
        %v3729 = vadd.f32 0.0, %v3728
        %v3730 = vpop.f32.mrb[0].mxu0
        %v3731 = vpop.f32.mrb[0].mxu0
        %v3732 = vadd.f32 0.0, %v3731
        %v3733 = vpop.f32.mrb[0].mxu0
        %3734 = vmatprep.mubr.bf16.mxu0 0
        %3735 = vmatmul.mubr.bf16.gmra.mrb[0].mxu0 %v3464
        %v3736 = vpop.f32.mrb[0].mxu0
        %v3737 = vadd.f32 0.0, %v3736
        %v3738 = vpop.f32.mrb[0].mxu0
        %v3739 = vpop.f32.mrb[0].mxu0
        %v3740 = vadd.f32 0.0, %v3739
        %v3741 = vpop.f32.mrb[0].mxu0
        %3742 = vmatprep.mubr.bf16.mxu0 0
        %3743 = vmatmul.mubr.bf16.gmra.mrb[0].mxu0 %v3465
        %v3744 = vpop.f32.mrb[0].mxu0
        %v3745 = vadd.f32 0.0, %v3744
        %v3746 = vpop.f32.mrb[0].mxu0
        %v3747 = vpop.f32.mrb[0].mxu0
        %v3748 = vadd.f32 0.0, %v3747
        %v3749 = vpop.f32.mrb[0].mxu0
        %3750 = vmatprep.mubr.bf16.mxu0 0
        %3751 = vmatmul.mubr.bf16.gmra.mrb[0].mxu0 %v3466
        %v3752 = vpop.f32.mrb[0].mxu0
        %v3753 = vadd.f32 0.0, %v3752
        %v3754 = vpop.f32.mrb[0].mxu0
        %v3755 = vpop.f32.mrb[0].mxu0
        %v3756 = vadd.f32 0.0, %v3755
        %v3757 = vpop.f32.mrb[0].mxu0
        %3758 = vmatprep.mubr.bf16.mxu0 0
        %3759 = vmatmul.mubr.bf16.gmra.mrb[0].mxu0 %v3467
        %v3760 = vpop.f32.mrb[0].mxu0
        %v3761 = vadd.f32 0.0, %v3760
        %v3762 = vpop.f32.mrb[0].mxu0
        %v3763 = vpop.f32.mrb[0].mxu0
        %v3764 = vadd.f32 0.0, %v3763
        %v3765 = vpop.f32.mrb[0].mxu0
        %3766 = vmatprep.mubr.bf16.mxu0 0
        %3767 = vmatmul.mubr.bf16.gmra.mrb[0].mxu0 %v3468
        %v3768 = vpop.f32.mrb[0].mxu0
        %v3769 = vadd.f32 0.0, %v3768
        %v3770 = vpop.f32.mrb[0].mxu0
        %v3771 = vpop.f32.mrb[0].mxu0
        %v3772 = vadd.f32 0.0, %v3771
        %v3773 = vpop.f32.mrb[0].mxu0
        %3774 = vmatprep.mubr.bf16.mxu0 0
        %3775 = vmatmul.mubr.bf16.gmra.mrb[0].mxu0 %v3469
        %v3776 = vpop.f32.mrb[0].mxu0
        %v3777 = vadd.f32 0.0, %v3776
        %v3778 = vpop.f32.mrb[0].mxu0
        %v3779 = vpop.f32.mrb[0].mxu0
        %v3780 = vadd.f32 0.0, %v3779
        %v3781 = vpop.f32.mrb[0].mxu0
        %3782 = vmatprep.mubr.bf16.mxu0 0
        %3783 = vmatmul.mubr.bf16.gmra.mrb[0].mxu0 %v3470
        %v3784 = vpop.f32.mrb[0].mxu0
        %v3785 = vadd.f32 0.0, %v3784
        %v3786 = vpop.f32.mrb[0].mxu0
        %v3787 = vpop.f32.mrb[0].mxu0
        %v3788 = vadd.f32 0.0, %v3787
        %v3789 = vpop.f32.mrb[0].mxu0
        %3790 = vmatprep.mubr.bf16.mxu0 0
        %3791 = vmatmul.mubr.bf16.gmra.mrb[0].mxu0 %v3471
        %v3792 = vpop.f32.mrb[0].mxu0
        %v3793 = vadd.f32 0.0, %v3792
        %v3794 = vpop.f32.mrb[0].mxu0
        %v3795 = vpop.f32.mrb[0].mxu0
        %v3796 = vadd.f32 0.0, %v3795
        %v3797 = vpop.f32.mrb[0].mxu0
        %3798 = vmatprep.mubr.bf16.mxu0 0
        %3799 = vmatmul.mubr.bf16.gmra.mrb[0].mxu0 %v3472
        %v3800 = vpop.f32.mrb[0].mxu0
        %v3801 = vadd.f32 0.0, %v3800
        %v3802 = vpop.f32.mrb[0].mxu0
        %v3803 = vpop.f32.mrb[0].mxu0
        %v3804 = vadd.f32 0.0, %v3803
        %v3805 = vpop.f32.mrb[0].mxu0
        %3806 = vmatprep.mubr.bf16.mxu0 0
        %3807 = vmatmul.mubr.bf16.gmra.mrb[0].mxu0 %v3473
        %v3808 = vpop.f32.mrb[0].mxu0
        %v3809 = vadd.f32 0.0, %v3808
        %v3810 = vpop.f32.mrb[0].mxu0
        %v3811 = vpop.f32.mrb[0].mxu0
        %v3812 = vadd.f32 0.0, %v3811
        %v3813 = vpop.f32.mrb[0].mxu0
        %3814 = vmatprep.mubr.bf16.mxu0 0
        %3815 = vmatmul.mubr.bf16.gmra.mrb[0].mxu0 %v3474
        %v3816 = vpop.f32.mrb[0].mxu0
        %v3817 = vadd.f32 0.0, %v3816
        %v3818 = vpop.f32.mrb[0].mxu0
        %v3819 = vpop.f32.mrb[0].mxu0
        %v3820 = vadd.f32 0.0, %v3819
        %v3821 = vpop.f32.mrb[0].mxu0
        %3822 = vmatprep.mubr.bf16.mxu0 0
        %3823 = vmatmul.mubr.bf16.gmra.mrb[0].mxu0 %v3475
        %v3824 = vpop.f32.mrb[0].mxu0
        %v3825 = vadd.f32 0.0, %v3824
        %v3826 = vpop.f32.mrb[0].mxu0
        %v3827 = vpop.f32.mrb[0].mxu0
        %v3828 = vadd.f32 0.0, %v3827
        %v3829 = vpop.f32.mrb[0].mxu0
        %3830 = vmatprep.mubr.bf16.mxu0 0
        %3831 = vmatmul.mubr.bf16.gmra.mrb[0].mxu0 %v3476
        %v3832 = vpop.f32.mrb[0].mxu0
        %v3833 = vadd.f32 0.0, %v3832
        %v3834 = vpop.f32.mrb[0].mxu0
        %v3835 = vpop.f32.mrb[0].mxu0
        %v3836 = vadd.f32 0.0, %v3835
        %v3837 = vpop.f32.mrb[0].mxu0
        %3838 = vmatprep.mubr.bf16.mxu0 0
        %3839 = vmatmul.mubr.bf16.gmra.mrb[0].mxu0 %v3477
        %v3840 = vpop.f32.mrb[0].mxu0
        %v3841 = vadd.f32 0.0, %v3840
        %v3842 = vpop.f32.mrb[0].mxu0
        %v3843 = vpop.f32.mrb[0].mxu0
        %v3844 = vadd.f32 0.0, %v3843
        %v3845 = vpop.f32.mrb[0].mxu0
        %3846 = vdwg.mxu0
        %v3847 = vadd.f32 %v3173, %v3593
        %v3848 = vadd.f32 %v3174, %v3596
        %v3849 = vadd.f32 %v3175, %v3601
        %v3850 = vadd.f32 %v3176, %v3604
        %v3851 = vadd.f32 %v3177, %v3609
        %v3852 = vadd.f32 %v3178, %v3612
        %v3853 = vadd.f32 %v3179, %v3617
        %v3854 = vadd.f32 %v3180, %v3620
        %v3855 = vadd.f32 %v3181, %v3625
        %v3856 = vadd.f32 %v3182, %v3628
        %v3857 = vadd.f32 %v3183, %v3633
        %v3858 = vadd.f32 %v3184, %v3636
        %v3859 = vadd.f32 %v3185, %v3641
        %v3860 = vadd.f32 %v3186, %v3644
        %v3861 = vadd.f32 %v3187, %v3649
        %v3862 = vadd.f32 %v3188, %v3652
        %v3863 = vadd.f32 %v3189, %v3657
        %v3864 = vadd.f32 %v3190, %v3660
        %v3865 = vadd.f32 %v3191, %v3665
        %v3866 = vadd.f32 %v3192, %v3668
        %v3867 = vadd.f32 %v3193, %v3673
        %v3868 = vadd.f32 %v3194, %v3676
        %v3869 = vadd.f32 %v3195, %v3681
        %v3870 = vadd.f32 %v3196, %v3684
        %v3871 = vadd.f32 %v3197, %v3689
        %v3872 = vadd.f32 %v3198, %v3692
        %v3873 = vadd.f32 %v3199, %v3697
        %v3874 = vadd.f32 %v3200, %v3700
        %v3875 = vadd.f32 %v3201, %v3705
        %v3876 = vadd.f32 %v3202, %v3708
        %v3877 = vadd.f32 %v3203, %v3713
        %v3878 = vadd.f32 %v3204, %v3716
        %v3879 = vadd.f32 %v3205, %v3721
        %v3880 = vadd.f32 %v3206, %v3724
        %v3881 = vadd.f32 %v3207, %v3729
        %v3882 = vadd.f32 %v3208, %v3732
        %v3883 = vadd.f32 %v3209, %v3737
        %v3884 = vadd.f32 %v3210, %v3740
        %v3885 = vadd.f32 %v3211, %v3745
        %v3886 = vadd.f32 %v3212, %v3748
        %v3887 = vadd.f32 %v3213, %v3753
        %v3888 = vadd.f32 %v3214, %v3756
        %v3889 = vadd.f32 %v3215, %v3761
        %v3890 = vadd.f32 %v3216, %v3764
        %v3891 = vadd.f32 %v3217, %v3769
        %v3892 = vadd.f32 %v3218, %v3772
        %v3893 = vadd.f32 %v3219, %v3777
        %v3894 = vadd.f32 %v3220, %v3780
        %v3895 = vadd.f32 %v3221, %v3785
        %v3896 = vadd.f32 %v3222, %v3788
        %v3897 = vadd.f32 %v3223, %v3793
        %v3898 = vadd.f32 %v3224, %v3796
        %v3899 = vadd.f32 %v3225, %v3801
        %v3900 = vadd.f32 %v3226, %v3804
        %v3901 = vadd.f32 %v3227, %v3809
        %v3902 = vadd.f32 %v3228, %v3812
        %v3903 = vadd.f32 %v3229, %v3817
        %v3904 = vadd.f32 %v3230, %v3820
        %v3905 = vadd.f32 %v3231, %v3825
        %v3906 = vadd.f32 %v3232, %v3828
        %v3907 = vadd.f32 %v3233, %v3833
        %v3908 = vadd.f32 %v3234, %v3836
        %v3909 = vadd.f32 %v3235, %v3841
        %v3910 = vadd.f32 %v3236, %v3844
        %v3911 = vld [vmem:[%s203 + $0x60] sm:$0xf]
        %v3912 = vld [vmem:[%s203 + $0x64] sm:$0xf]
        %v3913 = vld [vmem:[%s203 + $0x68] sm:$0xf]
        %v3914 = vld [vmem:[%s203 + $0x6c] sm:$0xf]
        %v3915 = vld [vmem:[%s203 + $0x70] sm:$0xf]
        %v3916 = vld [vmem:[%s203 + $0x74] sm:$0xf]
        %v3917 = vld [vmem:[%s203 + $0x78] sm:$0xf]
        %v3918 = vld [vmem:[%s203 + $0x7c] sm:$0xf]
        %v3919 = vld [vmem:[%s203 + $0x80] sm:$0xf]
        %v3920 = vld [vmem:[%s203 + $0x84] sm:$0xf]
        %v3921 = vld [vmem:[%s203 + $0x88] sm:$0xf]
        %v3922 = vld [vmem:[%s203 + $0x8c] sm:$0xf]
        %v3923 = vld [vmem:[%s203 + $0x90] sm:$0xf]
        %v3924 = vld [vmem:[%s203 + $0x94] sm:$0xf]
        %v3925 = vld [vmem:[%s203 + $0x98] sm:$0xf]
        %v3926 = vld [vmem:[%s203 + $0x9c] sm:$0xf]
        %v3927 = vld [vmem:[%s203 + $0xa0] sm:$0xf]
        %v3928 = vld [vmem:[%s203 + $0xa4] sm:$0xf]
        %v3929 = vld [vmem:[%s203 + $0xa8] sm:$0xf]
        %v3930 = vld [vmem:[%s203 + $0xac] sm:$0xf]
        %v3931 = vld [vmem:[%s203 + $0xb0] sm:$0xf]
        %v3932 = vld [vmem:[%s203 + $0xb4] sm:$0xf]
        %v3933 = vld [vmem:[%s203 + $0xb8] sm:$0xf]
        %v3934 = vld [vmem:[%s203 + $0xbc] sm:$0xf]
        %v3935 = vld [vmem:[%s203 + $0xc0] sm:$0xf]
        %v3936 = vld [vmem:[%s203 + $0xc4] sm:$0xf]
        %v3937 = vld [vmem:[%s203 + $0xc8] sm:$0xf]
        %v3938 = vld [vmem:[%s203 + $0xcc] sm:$0xf]
        %v3939 = vld [vmem:[%s203 + $0xd0] sm:$0xf]
        %v3940 = vld [vmem:[%s203 + $0xd4] sm:$0xf]
        %v3941 = vld [vmem:[%s203 + $0xd8] sm:$0xf]
        %v3942 = vld [vmem:[%s203 + $0xdc] sm:$0xf]
        %v3943 = vld [vmem:[%s203 + $0xe0] sm:$0xf]
        %v3944 = vld [vmem:[%s203 + $0xe4] sm:$0xf]
        %v3945 = vld [vmem:[%s203 + $0xe8] sm:$0xf]
        %v3946 = vld [vmem:[%s203 + $0xec] sm:$0xf]
        %v3947 = vld [vmem:[%s203 + $0xf0] sm:$0xf]
        %v3948 = vld [vmem:[%s203 + $0xf4] sm:$0xf]
        %v3949 = vld [vmem:[%s203 + $0xf8] sm:$0xf]
        %v3950 = vld [vmem:[%s203 + $0xfc] sm:$0xf]
        %v3951 = vld [vmem:[%s203 + $0x100] sm:$0xf]
        %v3952 = vld [vmem:[%s203 + $0x104] sm:$0xf]
        %v3953 = vld [vmem:[%s203 + $0x108] sm:$0xf]
        %v3954 = vld [vmem:[%s203 + $0x10c] sm:$0xf]
        %v3955 = vld [vmem:[%s203 + $0x110] sm:$0xf]
        %v3956 = vld [vmem:[%s203 + $0x114] sm:$0xf]
        %v3957 = vld [vmem:[%s203 + $0x118] sm:$0xf]
        %v3958 = vld [vmem:[%s203 + $0x11c] sm:$0xf]
        %v3959 = vld [vmem:[%s203 + $0x120] sm:$0xf]
        %v3960 = vld [vmem:[%s203 + $0x124] sm:$0xf]
        %v3961 = vld [vmem:[%s203 + $0x128] sm:$0xf]
        %v3962 = vld [vmem:[%s203 + $0x12c] sm:$0xf]
        %v3963 = vld [vmem:[%s203 + $0x130] sm:$0xf]
        %v3964 = vld [vmem:[%s203 + $0x134] sm:$0xf]
        %v3965 = vld [vmem:[%s203 + $0x138] sm:$0xf]
        %v3966 = vld [vmem:[%s203 + $0x13c] sm:$0xf]
        %v3967 = vld [vmem:[%s203 + $0x140] sm:$0xf]
        %v3968 = vld [vmem:[%s203 + $0x144] sm:$0xf]
        %v3969 = vld [vmem:[%s203 + $0x148] sm:$0xf]
        %v3970 = vld [vmem:[%s203 + $0x14c] sm:$0xf]
        %v3971 = vld [vmem:[%s203 + $0x150] sm:$0xf]
        %v3972 = vld [vmem:[%s203 + $0x154] sm:$0xf]
        %v3973 = vld [vmem:[%s203 + $0x158] sm:$0xf]
        %v3974 = vld [vmem:[%s203 + $0x15c] sm:$0xf]
        %s3975 = scalar_lea.vmem [#allocation5], 384
        %v3976 = vld [vmem:[%s3975] sm:$0xf]
        %v3977 = vld [vmem:[%s3975 + $0x4] sm:$0xf]
        %v3978 = vld [vmem:[%s3975 + $0x8] sm:$0xf]
        %v3979 = vld [vmem:[%s3975 + $0xc] sm:$0xf]
        %v3980 = vld [vmem:[%s3975 + $0x10] sm:$0xf]
        %v3981 = vld [vmem:[%s3975 + $0x14] sm:$0xf]
        %v3982 = vld [vmem:[%s3975 + $0x18] sm:$0xf]
        %v3983 = vld [vmem:[%s3975 + $0x1c] sm:$0xf]
        %v3984 = vld [vmem:[%s3975 + $0x20] sm:$0xf]
        %v3985 = vld [vmem:[%s3975 + $0x24] sm:$0xf]
        %v3986 = vld [vmem:[%s3975 + $0x28] sm:$0xf]
        %v3987 = vld [vmem:[%s3975 + $0x2c] sm:$0xf]
        %v3988 = vld [vmem:[%s3975 + $0x30] sm:$0xf]
        %v3989 = vld [vmem:[%s3975 + $0x34] sm:$0xf]
        %v3990 = vld [vmem:[%s3975 + $0x38] sm:$0xf]
        %v3991 = vld [vmem:[%s3975 + $0x3c] sm:$0xf]
        %v4056 = vunpack.c.l.b16 %v3911
        %v4057 = vunpack.c.l.b16 %v3912
        %v4058 = vunpack.c.l.b16 %v3913
        %v4059 = vunpack.c.l.b16 %v3914
        %v4060 = vunpack.c.l.b16 %v3915
        %v4061 = vunpack.c.l.b16 %v3916
        %v4062 = vunpack.c.l.b16 %v3917
        %v4063 = vunpack.c.l.b16 %v3918
        %v4064 = vunpack.c.l.b16 %v3919
        %v4065 = vunpack.c.l.b16 %v3920
        %v4066 = vunpack.c.l.b16 %v3921
        %v4067 = vunpack.c.l.b16 %v3922
        %v4068 = vunpack.c.l.b16 %v3923
        %v4069 = vunpack.c.l.b16 %v3924
        %v4070 = vunpack.c.l.b16 %v3925
        %v4071 = vunpack.c.l.b16 %v3926
        %v4072 = vunpack.c.l.b16 %v3927
        %v4073 = vunpack.c.l.b16 %v3928
        %v4074 = vunpack.c.l.b16 %v3929
        %v4075 = vunpack.c.l.b16 %v3930
        %v4076 = vunpack.c.l.b16 %v3931
        %v4077 = vunpack.c.l.b16 %v3932
        %v4078 = vunpack.c.l.b16 %v3933
        %v4079 = vunpack.c.l.b16 %v3934
        %v4080 = vunpack.c.l.b16 %v3935
        %v4081 = vunpack.c.l.b16 %v3936
        %v4082 = vunpack.c.l.b16 %v3937
        %v4083 = vunpack.c.l.b16 %v3938
        %v4084 = vunpack.c.l.b16 %v3939
        %v4085 = vunpack.c.l.b16 %v3940
        %v4086 = vunpack.c.l.b16 %v3941
        %v4087 = vunpack.c.l.b16 %v3942
        %v4088 = vunpack.c.l.b16 %v3943
        %v4089 = vunpack.c.l.b16 %v3944
        %v4090 = vunpack.c.l.b16 %v3945
        %v4091 = vunpack.c.l.b16 %v3946
        %v4092 = vunpack.c.l.b16 %v3947
        %v4093 = vunpack.c.l.b16 %v3948
        %v4094 = vunpack.c.l.b16 %v3949
        %v4095 = vunpack.c.l.b16 %v3950
        %v4096 = vunpack.c.l.b16 %v3951
        %v4097 = vunpack.c.l.b16 %v3952
        %v4098 = vunpack.c.l.b16 %v3953
        %v4099 = vunpack.c.l.b16 %v3954
        %v4100 = vunpack.c.l.b16 %v3955
        %v4101 = vunpack.c.l.b16 %v3956
        %v4102 = vunpack.c.l.b16 %v3957
        %v4103 = vunpack.c.l.b16 %v3958
        %v4104 = vunpack.c.l.b16 %v3959
        %v4105 = vunpack.c.l.b16 %v3960
        %v4106 = vunpack.c.l.b16 %v3961
        %v4107 = vunpack.c.l.b16 %v3962
        %v4108 = vunpack.c.l.b16 %v3963
        %v4109 = vunpack.c.l.b16 %v3964
        %v4110 = vunpack.c.l.b16 %v3965
        %v4111 = vunpack.c.l.b16 %v3966
        %v4112 = vunpack.c.l.b16 %v3967
        %v4113 = vunpack.c.l.b16 %v3968
        %v4114 = vunpack.c.l.b16 %v3969
        %v4115 = vunpack.c.l.b16 %v3970
        %v4116 = vunpack.c.l.b16 %v3971
        %v4117 = vunpack.c.l.b16 %v3972
        %v4118 = vunpack.c.l.b16 %v3973
        %v4119 = vunpack.c.l.b16 %v3974
        %v4120 = vpack.c.b16 %v4057, %v4056
        %v4121 = vpack.c.b16 %v4059, %v4058
        %v4122 = vpack.c.b16 %v4061, %v4060
        %v4123 = vpack.c.b16 %v4063, %v4062
        %v4124 = vpack.c.b16 %v4065, %v4064
        %v4125 = vpack.c.b16 %v4067, %v4066
        %v4126 = vpack.c.b16 %v4069, %v4068
        %v4127 = vpack.c.b16 %v4071, %v4070
        %v4128 = vpack.c.b16 %v4073, %v4072
        %v4129 = vpack.c.b16 %v4075, %v4074
        %v4130 = vpack.c.b16 %v4077, %v4076
        %v4131 = vpack.c.b16 %v4079, %v4078
        %v4132 = vpack.c.b16 %v4081, %v4080
        %v4133 = vpack.c.b16 %v4083, %v4082
        %v4134 = vpack.c.b16 %v4085, %v4084
        %v4135 = vpack.c.b16 %v4087, %v4086
        %v4136 = vpack.c.b16 %v4089, %v4088
        %v4137 = vpack.c.b16 %v4091, %v4090
        %v4138 = vpack.c.b16 %v4093, %v4092
        %v4139 = vpack.c.b16 %v4095, %v4094
        %v4140 = vpack.c.b16 %v4097, %v4096
        %v4141 = vpack.c.b16 %v4099, %v4098
        %v4142 = vpack.c.b16 %v4101, %v4100
        %v4143 = vpack.c.b16 %v4103, %v4102
        %v4144 = vpack.c.b16 %v4105, %v4104
        %v4145 = vpack.c.b16 %v4107, %v4106
        %v4146 = vpack.c.b16 %v4109, %v4108
        %v4147 = vpack.c.b16 %v4111, %v4110
        %v4148 = vpack.c.b16 %v4113, %v4112
        %v4149 = vpack.c.b16 %v4115, %v4114
        %v4150 = vpack.c.b16 %v4117, %v4116
        %v4151 = vpack.c.b16 %v4119, %v4118
        %v4200 = vunpack.c.l.b16 %v3976
        %v4201 = vunpack.c.l.b16 %v3977
        %v4202 = vunpack.c.l.b16 %v3978
        %v4203 = vunpack.c.l.b16 %v3979
        %v4204 = vunpack.c.l.b16 %v3980
        %v4205 = vunpack.c.l.b16 %v3981
        %v4206 = vunpack.c.l.b16 %v3982
        %v4207 = vunpack.c.l.b16 %v3983
        %v4208 = vunpack.c.l.b16 %v3984
        %v4209 = vunpack.c.l.b16 %v3985
        %v4210 = vunpack.c.l.b16 %v3986
        %v4211 = vunpack.c.l.b16 %v3987
        %v4212 = vunpack.c.l.b16 %v3988
        %v4213 = vunpack.c.l.b16 %v3989
        %v4214 = vunpack.c.l.b16 %v3990
        %v4215 = vunpack.c.l.b16 %v3991
        %v4216 = vpack.c.b16 %v4201, %v4200
        %v4217 = vpack.c.b16 %v4203, %v4202
        %v4218 = vpack.c.b16 %v4205, %v4204
        %v4219 = vpack.c.b16 %v4207, %v4206
        %v4220 = vpack.c.b16 %v4209, %v4208
        %v4221 = vpack.c.b16 %v4211, %v4210
        %v4222 = vpack.c.b16 %v4213, %v4212
        %v4223 = vpack.c.b16 %v4215, %v4214
        %4232 = vmatprep.subr.bf16.mxu0 0
        %4233 = vmatpush1.bf16.msra.mxu0 %v4216
        %4234 = vmatprep.subr.bf16.mxu0 0
        %4235 = vmatpush1.bf16.msra.mxu0 %v4217
        %4236 = vmatprep.subr.bf16.mxu0 0
        %4237 = vmatpush1.bf16.msra.mxu0 %v4218
        %4238 = vmatprep.subr.bf16.mxu0 0
        %4239 = vmatpush1.bf16.msra.mxu0 %v4219
        %4240 = vmatprep.subr.bf16.mxu0 0
        %4241 = vmatpush1.bf16.msra.mxu0 %v4220
        %4242 = vmatprep.subr.bf16.mxu0 0
        %4243 = vmatpush1.bf16.msra.mxu0 %v4221
        %4244 = vmatprep.subr.bf16.mxu0 0
        %4245 = vmatpush1.bf16.msra.mxu0 %v4222
        %4246 = vmatprep.subr.bf16.mxu0 0
        %4247 = vmatpush1.bf16.msra.mxu0 %v4223
        %4248 = vmatprep.subr.bf16.mxu0 0
        %4249 = vmatpush1.bf16.msra.mxu0 0
        %4250 = vmatprep.subr.bf16.mxu0 0
        %4251 = vmatpush1.bf16.msra.mxu0 0
        %4252 = vmatprep.subr.bf16.mxu0 0
        %4253 = vmatpush1.bf16.msra.mxu0 0
        %4254 = vmatprep.subr.bf16.mxu0 0
        %4255 = vmatpush1.bf16.msra.mxu0 0
        %4256 = vmatprep.subr.bf16.mxu0 0
        %4257 = vmatpush1.bf16.msra.mxu0 0
        %4258 = vmatprep.subr.bf16.mxu0 0
        %4259 = vmatpush1.bf16.msra.mxu0 0
        %4260 = vmatprep.subr.bf16.mxu0 0
        %4261 = vmatpush1.bf16.msra.mxu0 0
        %4262 = vmatprep.subr.bf16.mxu0 0
        %4263 = vmatpush1.bf16.msra.mxu0 0
        %4264 = vmatprep.mubr.bf16.mxu0 0
        %4265 = vmatmul.mubr.bf16.gmra.mrb[0].mxu0 %v4120
        %v4266 = vpop.f32.mrb[0].mxu0
        %v4267 = vadd.f32 0.0, %v4266
        %v4268 = vpop.f32.mrb[0].mxu0
        %v4269 = vpop.f32.mrb[0].mxu0
        %v4270 = vadd.f32 0.0, %v4269
        %v4271 = vpop.f32.mrb[0].mxu0
        %4272 = vmatprep.mubr.bf16.mxu0 0
        %4273 = vmatmul.mubr.bf16.gmra.mrb[0].mxu0 %v4121
        %v4274 = vpop.f32.mrb[0].mxu0
        %v4275 = vadd.f32 0.0, %v4274
        %v4276 = vpop.f32.mrb[0].mxu0
        %v4277 = vpop.f32.mrb[0].mxu0
        %v4278 = vadd.f32 0.0, %v4277
        %v4279 = vpop.f32.mrb[0].mxu0
        %4280 = vmatprep.mubr.bf16.mxu0 0
        %4281 = vmatmul.mubr.bf16.gmra.mrb[0].mxu0 %v4122
        %v4282 = vpop.f32.mrb[0].mxu0
        %v4283 = vadd.f32 0.0, %v4282
        %v4284 = vpop.f32.mrb[0].mxu0
        %v4285 = vpop.f32.mrb[0].mxu0
        %v4286 = vadd.f32 0.0, %v4285
        %v4287 = vpop.f32.mrb[0].mxu0
        %4288 = vmatprep.mubr.bf16.mxu0 0
        %4289 = vmatmul.mubr.bf16.gmra.mrb[0].mxu0 %v4123
        %v4290 = vpop.f32.mrb[0].mxu0
        %v4291 = vadd.f32 0.0, %v4290
        %v4292 = vpop.f32.mrb[0].mxu0
        %v4293 = vpop.f32.mrb[0].mxu0
        %v4294 = vadd.f32 0.0, %v4293
        %v4295 = vpop.f32.mrb[0].mxu0
        %4296 = vmatprep.mubr.bf16.mxu0 0
        %4297 = vmatmul.mubr.bf16.gmra.mrb[0].mxu0 %v4124
        %v4298 = vpop.f32.mrb[0].mxu0
        %v4299 = vadd.f32 0.0, %v4298
        %v4300 = vpop.f32.mrb[0].mxu0
        %v4301 = vpop.f32.mrb[0].mxu0
        %v4302 = vadd.f32 0.0, %v4301
        %v4303 = vpop.f32.mrb[0].mxu0
        %4304 = vmatprep.mubr.bf16.mxu0 0
        %4305 = vmatmul.mubr.bf16.gmra.mrb[0].mxu0 %v4125
        %v4306 = vpop.f32.mrb[0].mxu0
        %v4307 = vadd.f32 0.0, %v4306
        %v4308 = vpop.f32.mrb[0].mxu0
        %v4309 = vpop.f32.mrb[0].mxu0
        %v4310 = vadd.f32 0.0, %v4309
        %v4311 = vpop.f32.mrb[0].mxu0
        %4312 = vmatprep.mubr.bf16.mxu0 0
        %4313 = vmatmul.mubr.bf16.gmra.mrb[0].mxu0 %v4126
        %v4314 = vpop.f32.mrb[0].mxu0
        %v4315 = vadd.f32 0.0, %v4314
        %v4316 = vpop.f32.mrb[0].mxu0
        %v4317 = vpop.f32.mrb[0].mxu0
        %v4318 = vadd.f32 0.0, %v4317
        %v4319 = vpop.f32.mrb[0].mxu0
        %4320 = vmatprep.mubr.bf16.mxu0 0
        %4321 = vmatmul.mubr.bf16.gmra.mrb[0].mxu0 %v4127
        %v4322 = vpop.f32.mrb[0].mxu0
        %v4323 = vadd.f32 0.0, %v4322
        %v4324 = vpop.f32.mrb[0].mxu0
        %v4325 = vpop.f32.mrb[0].mxu0
        %v4326 = vadd.f32 0.0, %v4325
        %v4327 = vpop.f32.mrb[0].mxu0
        %4328 = vmatprep.mubr.bf16.mxu0 0
        %4329 = vmatmul.mubr.bf16.gmra.mrb[0].mxu0 %v4128
        %v4330 = vpop.f32.mrb[0].mxu0
        %v4331 = vadd.f32 0.0, %v4330
        %v4332 = vpop.f32.mrb[0].mxu0
        %v4333 = vpop.f32.mrb[0].mxu0
        %v4334 = vadd.f32 0.0, %v4333
        %v4335 = vpop.f32.mrb[0].mxu0
        %4336 = vmatprep.mubr.bf16.mxu0 0
        %4337 = vmatmul.mubr.bf16.gmra.mrb[0].mxu0 %v4129
        %v4338 = vpop.f32.mrb[0].mxu0
        %v4339 = vadd.f32 0.0, %v4338
        %v4340 = vpop.f32.mrb[0].mxu0
        %v4341 = vpop.f32.mrb[0].mxu0
        %v4342 = vadd.f32 0.0, %v4341
        %v4343 = vpop.f32.mrb[0].mxu0
        %4344 = vmatprep.mubr.bf16.mxu0 0
        %4345 = vmatmul.mubr.bf16.gmra.mrb[0].mxu0 %v4130
        %v4346 = vpop.f32.mrb[0].mxu0
        %v4347 = vadd.f32 0.0, %v4346
        %v4348 = vpop.f32.mrb[0].mxu0
        %v4349 = vpop.f32.mrb[0].mxu0
        %v4350 = vadd.f32 0.0, %v4349
        %v4351 = vpop.f32.mrb[0].mxu0
        %4352 = vmatprep.mubr.bf16.mxu0 0
        %4353 = vmatmul.mubr.bf16.gmra.mrb[0].mxu0 %v4131
        %v4354 = vpop.f32.mrb[0].mxu0
        %v4355 = vadd.f32 0.0, %v4354
        %v4356 = vpop.f32.mrb[0].mxu0
        %v4357 = vpop.f32.mrb[0].mxu0
        %v4358 = vadd.f32 0.0, %v4357
        %v4359 = vpop.f32.mrb[0].mxu0
        %4360 = vmatprep.mubr.bf16.mxu0 0
        %4361 = vmatmul.mubr.bf16.gmra.mrb[0].mxu0 %v4132
        %v4362 = vpop.f32.mrb[0].mxu0
        %v4363 = vadd.f32 0.0, %v4362
        %v4364 = vpop.f32.mrb[0].mxu0
        %v4365 = vpop.f32.mrb[0].mxu0
        %v4366 = vadd.f32 0.0, %v4365
        %v4367 = vpop.f32.mrb[0].mxu0
        %4368 = vmatprep.mubr.bf16.mxu0 0
        %4369 = vmatmul.mubr.bf16.gmra.mrb[0].mxu0 %v4133
        %v4370 = vpop.f32.mrb[0].mxu0
        %v4371 = vadd.f32 0.0, %v4370
        %v4372 = vpop.f32.mrb[0].mxu0
        %v4373 = vpop.f32.mrb[0].mxu0
        %v4374 = vadd.f32 0.0, %v4373
        %v4375 = vpop.f32.mrb[0].mxu0
        %4376 = vmatprep.mubr.bf16.mxu0 0
        %4377 = vmatmul.mubr.bf16.gmra.mrb[0].mxu0 %v4134
        %v4378 = vpop.f32.mrb[0].mxu0
        %v4379 = vadd.f32 0.0, %v4378
        %v4380 = vpop.f32.mrb[0].mxu0
        %v4381 = vpop.f32.mrb[0].mxu0
        %v4382 = vadd.f32 0.0, %v4381
        %v4383 = vpop.f32.mrb[0].mxu0
        %4384 = vmatprep.mubr.bf16.mxu0 0
        %4385 = vmatmul.mubr.bf16.gmra.mrb[0].mxu0 %v4135
        %v4386 = vpop.f32.mrb[0].mxu0
        %v4387 = vadd.f32 0.0, %v4386
        %v4388 = vpop.f32.mrb[0].mxu0
        %v4389 = vpop.f32.mrb[0].mxu0
        %v4390 = vadd.f32 0.0, %v4389
        %v4391 = vpop.f32.mrb[0].mxu0
        %4392 = vmatprep.mubr.bf16.mxu0 0
        %4393 = vmatmul.mubr.bf16.gmra.mrb[0].mxu0 %v4136
        %v4394 = vpop.f32.mrb[0].mxu0
        %v4395 = vadd.f32 0.0, %v4394
        %v4396 = vpop.f32.mrb[0].mxu0
        %v4397 = vpop.f32.mrb[0].mxu0
        %v4398 = vadd.f32 0.0, %v4397
        %v4399 = vpop.f32.mrb[0].mxu0
        %4400 = vmatprep.mubr.bf16.mxu0 0
        %4401 = vmatmul.mubr.bf16.gmra.mrb[0].mxu0 %v4137
        %v4402 = vpop.f32.mrb[0].mxu0
        %v4403 = vadd.f32 0.0, %v4402
        %v4404 = vpop.f32.mrb[0].mxu0
        %v4405 = vpop.f32.mrb[0].mxu0
        %v4406 = vadd.f32 0.0, %v4405
        %v4407 = vpop.f32.mrb[0].mxu0
        %4408 = vmatprep.mubr.bf16.mxu0 0
        %4409 = vmatmul.mubr.bf16.gmra.mrb[0].mxu0 %v4138
        %v4410 = vpop.f32.mrb[0].mxu0
        %v4411 = vadd.f32 0.0, %v4410
        %v4412 = vpop.f32.mrb[0].mxu0
        %v4413 = vpop.f32.mrb[0].mxu0
        %v4414 = vadd.f32 0.0, %v4413
        %v4415 = vpop.f32.mrb[0].mxu0
        %4416 = vmatprep.mubr.bf16.mxu0 0
        %4417 = vmatmul.mubr.bf16.gmra.mrb[0].mxu0 %v4139
        %v4418 = vpop.f32.mrb[0].mxu0
        %v4419 = vadd.f32 0.0, %v4418
        %v4420 = vpop.f32.mrb[0].mxu0
        %v4421 = vpop.f32.mrb[0].mxu0
        %v4422 = vadd.f32 0.0, %v4421
        %v4423 = vpop.f32.mrb[0].mxu0
        %4424 = vmatprep.mubr.bf16.mxu0 0
        %4425 = vmatmul.mubr.bf16.gmra.mrb[0].mxu0 %v4140
        %v4426 = vpop.f32.mrb[0].mxu0
        %v4427 = vadd.f32 0.0, %v4426
        %v4428 = vpop.f32.mrb[0].mxu0
        %v4429 = vpop.f32.mrb[0].mxu0
        %v4430 = vadd.f32 0.0, %v4429
        %v4431 = vpop.f32.mrb[0].mxu0
        %4432 = vmatprep.mubr.bf16.mxu0 0
        %4433 = vmatmul.mubr.bf16.gmra.mrb[0].mxu0 %v4141
        %v4434 = vpop.f32.mrb[0].mxu0
        %v4435 = vadd.f32 0.0, %v4434
        %v4436 = vpop.f32.mrb[0].mxu0
        %v4437 = vpop.f32.mrb[0].mxu0
        %v4438 = vadd.f32 0.0, %v4437
        %v4439 = vpop.f32.mrb[0].mxu0
        %4440 = vmatprep.mubr.bf16.mxu0 0
        %4441 = vmatmul.mubr.bf16.gmra.mrb[0].mxu0 %v4142
        %v4442 = vpop.f32.mrb[0].mxu0
        %v4443 = vadd.f32 0.0, %v4442
        %v4444 = vpop.f32.mrb[0].mxu0
        %v4445 = vpop.f32.mrb[0].mxu0
        %v4446 = vadd.f32 0.0, %v4445
        %v4447 = vpop.f32.mrb[0].mxu0
        %4448 = vmatprep.mubr.bf16.mxu0 0
        %4449 = vmatmul.mubr.bf16.gmra.mrb[0].mxu0 %v4143
        %v4450 = vpop.f32.mrb[0].mxu0
        %v4451 = vadd.f32 0.0, %v4450
        %v4452 = vpop.f32.mrb[0].mxu0
        %v4453 = vpop.f32.mrb[0].mxu0
        %v4454 = vadd.f32 0.0, %v4453
        %v4455 = vpop.f32.mrb[0].mxu0
        %4456 = vmatprep.mubr.bf16.mxu0 0
        %4457 = vmatmul.mubr.bf16.gmra.mrb[0].mxu0 %v4144
        %v4458 = vpop.f32.mrb[0].mxu0
        %v4459 = vadd.f32 0.0, %v4458
        %v4460 = vpop.f32.mrb[0].mxu0
        %v4461 = vpop.f32.mrb[0].mxu0
        %v4462 = vadd.f32 0.0, %v4461
        %v4463 = vpop.f32.mrb[0].mxu0
        %4464 = vmatprep.mubr.bf16.mxu0 0
        %4465 = vmatmul.mubr.bf16.gmra.mrb[0].mxu0 %v4145
        %v4466 = vpop.f32.mrb[0].mxu0
        %v4467 = vadd.f32 0.0, %v4466
        %v4468 = vpop.f32.mrb[0].mxu0
        %v4469 = vpop.f32.mrb[0].mxu0
        %v4470 = vadd.f32 0.0, %v4469
        %v4471 = vpop.f32.mrb[0].mxu0
        %4472 = vmatprep.mubr.bf16.mxu0 0
        %4473 = vmatmul.mubr.bf16.gmra.mrb[0].mxu0 %v4146
        %v4474 = vpop.f32.mrb[0].mxu0
        %v4475 = vadd.f32 0.0, %v4474
        %v4476 = vpop.f32.mrb[0].mxu0
        %v4477 = vpop.f32.mrb[0].mxu0
        %v4478 = vadd.f32 0.0, %v4477
        %v4479 = vpop.f32.mrb[0].mxu0
        %4480 = vmatprep.mubr.bf16.mxu0 0
        %4481 = vmatmul.mubr.bf16.gmra.mrb[0].mxu0 %v4147
        %v4482 = vpop.f32.mrb[0].mxu0
        %v4483 = vadd.f32 0.0, %v4482
        %v4484 = vpop.f32.mrb[0].mxu0
        %v4485 = vpop.f32.mrb[0].mxu0
        %v4486 = vadd.f32 0.0, %v4485
        %v4487 = vpop.f32.mrb[0].mxu0
        %4488 = vmatprep.mubr.bf16.mxu0 0
        %4489 = vmatmul.mubr.bf16.gmra.mrb[0].mxu0 %v4148
        %v4490 = vpop.f32.mrb[0].mxu0
        %v4491 = vadd.f32 0.0, %v4490
        %v4492 = vpop.f32.mrb[0].mxu0
        %v4493 = vpop.f32.mrb[0].mxu0
        %v4494 = vadd.f32 0.0, %v4493
        %v4495 = vpop.f32.mrb[0].mxu0
        %4496 = vmatprep.mubr.bf16.mxu0 0
        %4497 = vmatmul.mubr.bf16.gmra.mrb[0].mxu0 %v4149
        %v4498 = vpop.f32.mrb[0].mxu0
        %v4499 = vadd.f32 0.0, %v4498
        %v4500 = vpop.f32.mrb[0].mxu0
        %v4501 = vpop.f32.mrb[0].mxu0
        %v4502 = vadd.f32 0.0, %v4501
        %v4503 = vpop.f32.mrb[0].mxu0
        %4504 = vmatprep.mubr.bf16.mxu0 0
        %4505 = vmatmul.mubr.bf16.gmra.mrb[0].mxu0 %v4150
        %v4506 = vpop.f32.mrb[0].mxu0
        %v4507 = vadd.f32 0.0, %v4506
        %v4508 = vpop.f32.mrb[0].mxu0
        %v4509 = vpop.f32.mrb[0].mxu0
        %v4510 = vadd.f32 0.0, %v4509
        %v4511 = vpop.f32.mrb[0].mxu0
        %4512 = vmatprep.mubr.bf16.mxu0 0
        %4513 = vmatmul.mubr.bf16.gmra.mrb[0].mxu0 %v4151
        %v4514 = vpop.f32.mrb[0].mxu0
        %v4515 = vadd.f32 0.0, %v4514
        %v4516 = vpop.f32.mrb[0].mxu0
        %v4517 = vpop.f32.mrb[0].mxu0
        %v4518 = vadd.f32 0.0, %v4517
        %v4519 = vpop.f32.mrb[0].mxu0
        %4520 = vdwg.mxu0
        %v4521 = vadd.f32 %v3847, %v4267
        %v4522 = vadd.f32 %v3848, %v4270
        %v4523 = vadd.f32 %v3849, %v4275
        %v4524 = vadd.f32 %v3850, %v4278
        %v4525 = vadd.f32 %v3851, %v4283
        %v4526 = vadd.f32 %v3852, %v4286
        %v4527 = vadd.f32 %v3853, %v4291
        %v4528 = vadd.f32 %v3854, %v4294
        %v4529 = vadd.f32 %v3855, %v4299
        %v4530 = vadd.f32 %v3856, %v4302
        %v4531 = vadd.f32 %v3857, %v4307
        %v4532 = vadd.f32 %v3858, %v4310
        %v4533 = vadd.f32 %v3859, %v4315
        %v4534 = vadd.f32 %v3860, %v4318
        %v4535 = vadd.f32 %v3861, %v4323
        %v4536 = vadd.f32 %v3862, %v4326
        %v4537 = vadd.f32 %v3863, %v4331
        %v4538 = vadd.f32 %v3864, %v4334
        %v4539 = vadd.f32 %v3865, %v4339
        %v4540 = vadd.f32 %v3866, %v4342
        %v4541 = vadd.f32 %v3867, %v4347
        %v4542 = vadd.f32 %v3868, %v4350
        %v4543 = vadd.f32 %v3869, %v4355
        %v4544 = vadd.f32 %v3870, %v4358
        %v4545 = vadd.f32 %v3871, %v4363
        %v4546 = vadd.f32 %v3872, %v4366
        %v4547 = vadd.f32 %v3873, %v4371
        %v4548 = vadd.f32 %v3874, %v4374
        %v4549 = vadd.f32 %v3875, %v4379
        %v4550 = vadd.f32 %v3876, %v4382
        %v4551 = vadd.f32 %v3877, %v4387
        %v4552 = vadd.f32 %v3878, %v4390
        %v4553 = vadd.f32 %v3879, %v4395
        %v4554 = vadd.f32 %v3880, %v4398
        %v4555 = vadd.f32 %v3881, %v4403
        %v4556 = vadd.f32 %v3882, %v4406
        %v4557 = vadd.f32 %v3883, %v4411
        %v4558 = vadd.f32 %v3884, %v4414
        %v4559 = vadd.f32 %v3885, %v4419
        %v4560 = vadd.f32 %v3886, %v4422
        %v4561 = vadd.f32 %v3887, %v4427
        %v4562 = vadd.f32 %v3888, %v4430
        %v4563 = vadd.f32 %v3889, %v4435
        %v4564 = vadd.f32 %v3890, %v4438
        %v4565 = vadd.f32 %v3891, %v4443
        %v4566 = vadd.f32 %v3892, %v4446
        %v4567 = vadd.f32 %v3893, %v4451
        %v4568 = vadd.f32 %v3894, %v4454
        %v4569 = vadd.f32 %v3895, %v4459
        %v4570 = vadd.f32 %v3896, %v4462
        %v4571 = vadd.f32 %v3897, %v4467
        %v4572 = vadd.f32 %v3898, %v4470
        %v4573 = vadd.f32 %v3899, %v4475
        %v4574 = vadd.f32 %v3900, %v4478
        %v4575 = vadd.f32 %v3901, %v4483
        %v4576 = vadd.f32 %v3902, %v4486
        %v4577 = vadd.f32 %v3903, %v4491
        %v4578 = vadd.f32 %v3904, %v4494
        %v4579 = vadd.f32 %v3905, %v4499
        %v4580 = vadd.f32 %v3906, %v4502
        %v4581 = vadd.f32 %v3907, %v4507
        %v4582 = vadd.f32 %v3908, %v4510
        %v4583 = vadd.f32 %v3909, %v4515
        %v4584 = vadd.f32 %v3910, %v4518
        %v4585 = vpack.c.bf16 %v4522, %v4521
        %v4586 = vpack.c.bf16 %v4524, %v4523
        %v4587 = vpack.c.bf16 %v4526, %v4525
        %v4588 = vpack.c.bf16 %v4528, %v4527
        %v4589 = vpack.c.bf16 %v4530, %v4529
        %v4590 = vpack.c.bf16 %v4532, %v4531
        %v4591 = vpack.c.bf16 %v4534, %v4533
        %v4592 = vpack.c.bf16 %v4536, %v4535
        %v4593 = vpack.c.bf16 %v4538, %v4537
        %v4594 = vpack.c.bf16 %v4540, %v4539
        %v4595 = vpack.c.bf16 %v4542, %v4541
        %v4596 = vpack.c.bf16 %v4544, %v4543
        %v4597 = vpack.c.bf16 %v4546, %v4545
        %v4598 = vpack.c.bf16 %v4548, %v4547
        %v4599 = vpack.c.bf16 %v4550, %v4549
        %v4600 = vpack.c.bf16 %v4552, %v4551
        %v4601 = vpack.c.bf16 %v4554, %v4553
        %v4602 = vpack.c.bf16 %v4556, %v4555
        %v4603 = vpack.c.bf16 %v4558, %v4557
        %v4604 = vpack.c.bf16 %v4560, %v4559
        %v4605 = vpack.c.bf16 %v4562, %v4561
        %v4606 = vpack.c.bf16 %v4564, %v4563
        %v4607 = vpack.c.bf16 %v4566, %v4565
        %v4608 = vpack.c.bf16 %v4568, %v4567
        %v4609 = vpack.c.bf16 %v4570, %v4569
        %v4610 = vpack.c.bf16 %v4572, %v4571
        %v4611 = vpack.c.bf16 %v4574, %v4573
        %v4612 = vpack.c.bf16 %v4576, %v4575
        %v4613 = vpack.c.bf16 %v4578, %v4577
        %v4614 = vpack.c.bf16 %v4580, %v4579
        %v4615 = vpack.c.bf16 %v4582, %v4581
        %v4616 = vpack.c.bf16 %v4584, %v4583
        %v4649 = vunpack.c.l.b16 %v4585
        %v4650 = vunpack.c.h.b16 %v4585
        %v4651 = vunpack.c.l.b16 %v4586
        %v4652 = vunpack.c.h.b16 %v4586
        %v4653 = vunpack.c.l.b16 %v4587
        %v4654 = vunpack.c.h.b16 %v4587
        %v4655 = vunpack.c.l.b16 %v4588
        %v4656 = vunpack.c.h.b16 %v4588
        %v4657 = vunpack.c.l.b16 %v4589
        %v4658 = vunpack.c.h.b16 %v4589
        %v4659 = vunpack.c.l.b16 %v4590
        %v4660 = vunpack.c.h.b16 %v4590
        %v4661 = vunpack.c.l.b16 %v4591
        %v4662 = vunpack.c.h.b16 %v4591
        %v4663 = vunpack.c.l.b16 %v4592
        %v4664 = vunpack.c.h.b16 %v4592
        %v4665 = vunpack.c.l.b16 %v4593
        %v4666 = vunpack.c.h.b16 %v4593
        %v4667 = vunpack.c.l.b16 %v4594
        %v4668 = vunpack.c.h.b16 %v4594
        %v4669 = vunpack.c.l.b16 %v4595
        %v4670 = vunpack.c.h.b16 %v4595
        %v4671 = vunpack.c.l.b16 %v4596
        %v4672 = vunpack.c.h.b16 %v4596
        %v4673 = vunpack.c.l.b16 %v4597
        %v4674 = vunpack.c.h.b16 %v4597
        %v4675 = vunpack.c.l.b16 %v4598
        %v4676 = vunpack.c.h.b16 %v4598
        %v4677 = vunpack.c.l.b16 %v4599
        %v4678 = vunpack.c.h.b16 %v4599
        %v4679 = vunpack.c.l.b16 %v4600
        %v4680 = vunpack.c.h.b16 %v4600
        %v4681 = vunpack.c.l.b16 %v4601
        %v4682 = vunpack.c.h.b16 %v4601
        %v4683 = vunpack.c.l.b16 %v4602
        %v4684 = vunpack.c.h.b16 %v4602
        %v4685 = vunpack.c.l.b16 %v4603
        %v4686 = vunpack.c.h.b16 %v4603
        %v4687 = vunpack.c.l.b16 %v4604
        %v4688 = vunpack.c.h.b16 %v4604
        %v4689 = vunpack.c.l.b16 %v4605
        %v4690 = vunpack.c.h.b16 %v4605
        %v4691 = vunpack.c.l.b16 %v4606
        %v4692 = vunpack.c.h.b16 %v4606
        %v4693 = vunpack.c.l.b16 %v4607
        %v4694 = vunpack.c.h.b16 %v4607
        %v4695 = vunpack.c.l.b16 %v4608
        %v4696 = vunpack.c.h.b16 %v4608
        %v4697 = vunpack.c.l.b16 %v4609
        %v4698 = vunpack.c.h.b16 %v4609
        %v4699 = vunpack.c.l.b16 %v4610
        %v4700 = vunpack.c.h.b16 %v4610
        %v4701 = vunpack.c.l.b16 %v4611
        %v4702 = vunpack.c.h.b16 %v4611
        %v4703 = vunpack.c.l.b16 %v4612
        %v4704 = vunpack.c.h.b16 %v4612
        %v4705 = vunpack.c.l.b16 %v4613
        %v4706 = vunpack.c.h.b16 %v4613
        %v4707 = vunpack.c.l.b16 %v4614
        %v4708 = vunpack.c.h.b16 %v4614
        %v4709 = vunpack.c.l.b16 %v4615
        %v4710 = vunpack.c.h.b16 %v4615
        %v4711 = vunpack.c.l.b16 %v4616
        %v4712 = vunpack.c.h.b16 %v4616
        %v4713 = vpack.c.b16 %v4649, %v4649
        %v4714 = vpack.c.b16 %v4650, %v4650
        %v4715 = vpack.c.b16 %v4651, %v4651
        %v4716 = vpack.c.b16 %v4652, %v4652
        %v4717 = vpack.c.b16 %v4653, %v4653
        %v4718 = vpack.c.b16 %v4654, %v4654
        %v4719 = vpack.c.b16 %v4655, %v4655
        %v4720 = vpack.c.b16 %v4656, %v4656
        %v4721 = vpack.c.b16 %v4657, %v4657
        %v4722 = vpack.c.b16 %v4658, %v4658
        %v4723 = vpack.c.b16 %v4659, %v4659
        %v4724 = vpack.c.b16 %v4660, %v4660
        %v4725 = vpack.c.b16 %v4661, %v4661
        %v4726 = vpack.c.b16 %v4662, %v4662
        %v4727 = vpack.c.b16 %v4663, %v4663
        %v4728 = vpack.c.b16 %v4664, %v4664
        %v4729 = vpack.c.b16 %v4665, %v4665
        %v4730 = vpack.c.b16 %v4666, %v4666
        %v4731 = vpack.c.b16 %v4667, %v4667
        %v4732 = vpack.c.b16 %v4668, %v4668
        %v4733 = vpack.c.b16 %v4669, %v4669
        %v4734 = vpack.c.b16 %v4670, %v4670
        %v4735 = vpack.c.b16 %v4671, %v4671
        %v4736 = vpack.c.b16 %v4672, %v4672
        %v4737 = vpack.c.b16 %v4673, %v4673
        %v4738 = vpack.c.b16 %v4674, %v4674
        %v4739 = vpack.c.b16 %v4675, %v4675
        %v4740 = vpack.c.b16 %v4676, %v4676
        %v4741 = vpack.c.b16 %v4677, %v4677
        %v4742 = vpack.c.b16 %v4678, %v4678
        %v4743 = vpack.c.b16 %v4679, %v4679
        %v4744 = vpack.c.b16 %v4680, %v4680
        %v4745 = vpack.c.b16 %v4681, %v4681
        %v4746 = vpack.c.b16 %v4682, %v4682
        %v4747 = vpack.c.b16 %v4683, %v4683
        %v4748 = vpack.c.b16 %v4684, %v4684
        %v4749 = vpack.c.b16 %v4685, %v4685
        %v4750 = vpack.c.b16 %v4686, %v4686
        %v4751 = vpack.c.b16 %v4687, %v4687
        %v4752 = vpack.c.b16 %v4688, %v4688
        %v4753 = vpack.c.b16 %v4689, %v4689
        %v4754 = vpack.c.b16 %v4690, %v4690
        %v4755 = vpack.c.b16 %v4691, %v4691
        %v4756 = vpack.c.b16 %v4692, %v4692
        %v4757 = vpack.c.b16 %v4693, %v4693
        %v4758 = vpack.c.b16 %v4694, %v4694
        %v4759 = vpack.c.b16 %v4695, %v4695
        %v4760 = vpack.c.b16 %v4696, %v4696
        %v4761 = vpack.c.b16 %v4697, %v4697
        %v4762 = vpack.c.b16 %v4698, %v4698
        %v4763 = vpack.c.b16 %v4699, %v4699
        %v4764 = vpack.c.b16 %v4700, %v4700
        %v4765 = vpack.c.b16 %v4701, %v4701
        %v4766 = vpack.c.b16 %v4702, %v4702
        %v4767 = vpack.c.b16 %v4703, %v4703
        %v4768 = vpack.c.b16 %v4704, %v4704
        %v4769 = vpack.c.b16 %v4705, %v4705
        %v4770 = vpack.c.b16 %v4706, %v4706
        %v4771 = vpack.c.b16 %v4707, %v4707
        %v4772 = vpack.c.b16 %v4708, %v4708
        %v4773 = vpack.c.b16 %v4709, %v4709
        %v4774 = vpack.c.b16 %v4710, %v4710
        %v4775 = vpack.c.b16 %v4711, %v4711
        %v4776 = vpack.c.b16 %v4712, %v4712
        %4841 = vst [vmem:[%s227] sm:$0xf] %v4713
        %4842 = vst [vmem:[%s227 + $0x4] sm:$0xf] %v4714
        %4843 = vst [vmem:[%s227 + $0x8] sm:$0xf] %v4715
        %4844 = vst [vmem:[%s227 + $0xc] sm:$0xf] %v4716
        %4845 = vst [vmem:[%s227 + $0x10] sm:$0xf] %v4717
        %4846 = vst [vmem:[%s227 + $0x14] sm:$0xf] %v4718
        %4847 = vst [vmem:[%s227 + $0x18] sm:$0xf] %v4719
        %4848 = vst [vmem:[%s227 + $0x1c] sm:$0xf] %v4720
        %4849 = vst [vmem:[%s227 + $0x20] sm:$0xf] %v4721
        %4850 = vst [vmem:[%s227 + $0x24] sm:$0xf] %v4722
        %4851 = vst [vmem:[%s227 + $0x28] sm:$0xf] %v4723
        %4852 = vst [vmem:[%s227 + $0x2c] sm:$0xf] %v4724
        %4853 = vst [vmem:[%s227 + $0x30] sm:$0xf] %v4725
        %4854 = vst [vmem:[%s227 + $0x34] sm:$0xf] %v4726
        %4855 = vst [vmem:[%s227 + $0x38] sm:$0xf] %v4727
        %4856 = vst [vmem:[%s227 + $0x3c] sm:$0xf] %v4728
        %4857 = vst [vmem:[%s227 + $0x40] sm:$0xf] %v4729
        %4858 = vst [vmem:[%s227 + $0x44] sm:$0xf] %v4730
        %4859 = vst [vmem:[%s227 + $0x48] sm:$0xf] %v4731
        %4860 = vst [vmem:[%s227 + $0x4c] sm:$0xf] %v4732
        %4861 = vst [vmem:[%s227 + $0x50] sm:$0xf] %v4733
        %4862 = vst [vmem:[%s227 + $0x54] sm:$0xf] %v4734
        %4863 = vst [vmem:[%s227 + $0x58] sm:$0xf] %v4735
        %4864 = vst [vmem:[%s227 + $0x5c] sm:$0xf] %v4736
        %4865 = vst [vmem:[%s227 + $0x60] sm:$0xf] %v4737
        %4866 = vst [vmem:[%s227 + $0x64] sm:$0xf] %v4738
        %4867 = vst [vmem:[%s227 + $0x68] sm:$0xf] %v4739
        %4868 = vst [vmem:[%s227 + $0x6c] sm:$0xf] %v4740
        %4869 = vst [vmem:[%s227 + $0x70] sm:$0xf] %v4741
        %4870 = vst [vmem:[%s227 + $0x74] sm:$0xf] %v4742
        %4871 = vst [vmem:[%s227 + $0x78] sm:$0xf] %v4743
        %4872 = vst [vmem:[%s227 + $0x7c] sm:$0xf] %v4744
        %4873 = vst [vmem:[%s227 + $0x80] sm:$0xf] %v4745
        %4874 = vst [vmem:[%s227 + $0x84] sm:$0xf] %v4746
        %4875 = vst [vmem:[%s227 + $0x88] sm:$0xf] %v4747
        %4876 = vst [vmem:[%s227 + $0x8c] sm:$0xf] %v4748
        %4877 = vst [vmem:[%s227 + $0x90] sm:$0xf] %v4749
        %4878 = vst [vmem:[%s227 + $0x94] sm:$0xf] %v4750
        %4879 = vst [vmem:[%s227 + $0x98] sm:$0xf] %v4751
        %4880 = vst [vmem:[%s227 + $0x9c] sm:$0xf] %v4752
        %4881 = vst [vmem:[%s227 + $0xa0] sm:$0xf] %v4753
        %4882 = vst [vmem:[%s227 + $0xa4] sm:$0xf] %v4754
        %4883 = vst [vmem:[%s227 + $0xa8] sm:$0xf] %v4755
        %4884 = vst [vmem:[%s227 + $0xac] sm:$0xf] %v4756
        %4885 = vst [vmem:[%s227 + $0xb0] sm:$0xf] %v4757
        %4886 = vst [vmem:[%s227 + $0xb4] sm:$0xf] %v4758
        %4887 = vst [vmem:[%s227 + $0xb8] sm:$0xf] %v4759
        %4888 = vst [vmem:[%s227 + $0xbc] sm:$0xf] %v4760
        %4889 = vst [vmem:[%s227 + $0xc0] sm:$0xf] %v4761
        %4890 = vst [vmem:[%s227 + $0xc4] sm:$0xf] %v4762
        %4891 = vst [vmem:[%s227 + $0xc8] sm:$0xf] %v4763
        %4892 = vst [vmem:[%s227 + $0xcc] sm:$0xf] %v4764
        %4893 = vst [vmem:[%s227 + $0xd0] sm:$0xf] %v4765
        %4894 = vst [vmem:[%s227 + $0xd4] sm:$0xf] %v4766
        %4895 = vst [vmem:[%s227 + $0xd8] sm:$0xf] %v4767
        %4896 = vst [vmem:[%s227 + $0xdc] sm:$0xf] %v4768
        %4897 = vst [vmem:[%s227 + $0xe0] sm:$0xf] %v4769
        %4898 = vst [vmem:[%s227 + $0xe4] sm:$0xf] %v4770
        %4899 = vst [vmem:[%s227 + $0xe8] sm:$0xf] %v4771
        %4900 = vst [vmem:[%s227 + $0xec] sm:$0xf] %v4772
        %4901 = vst [vmem:[%s227 + $0xf0] sm:$0xf] %v4773
        %4902 = vst [vmem:[%s227 + $0xf4] sm:$0xf] %v4774
        %4903 = vst [vmem:[%s227 + $0xf8] sm:$0xf] %v4775
        %4904 = vst [vmem:[%s227 + $0xfc] sm:$0xf] %v4776
        %v4905 = vadd.f32 %v4521, %v4522
        %v4906 = vadd.f32 %v4905, %v4523
        %v4907 = vadd.f32 %v4906, %v4524
        %v4908 = vadd.f32 %v4907, %v4525
        %v4909 = vadd.f32 %v4908, %v4526
        %v4910 = vadd.f32 %v4909, %v4527
        %v4911 = vadd.f32 %v4910, %v4528
        %v4912 = vadd.f32 %v4911, %v4529
        %v4913 = vadd.f32 %v4912, %v4530
        %v4914 = vadd.f32 %v4913, %v4531
        %v4915 = vadd.f32 %v4914, %v4532
        %v4916 = vadd.f32 %v4915, %v4533
        %v4917 = vadd.f32 %v4916, %v4534
        %v4918 = vadd.f32 %v4917, %v4535
        %v4919 = vadd.f32 %v4918, %v4536
        %v4920 = vadd.f32 %v4919, %v4537
        %v4921 = vadd.f32 %v4920, %v4538
        %v4922 = vadd.f32 %v4921, %v4539
        %v4923 = vadd.f32 %v4922, %v4540
        %v4924 = vadd.f32 %v4923, %v4541
        %v4925 = vadd.f32 %v4924, %v4542
        %v4926 = vadd.f32 %v4925, %v4543
        %v4927 = vadd.f32 %v4926, %v4544
        %v4928 = vadd.f32 %v4927, %v4545
        %v4929 = vadd.f32 %v4928, %v4546
        %v4930 = vadd.f32 %v4929, %v4547
        %v4931 = vadd.f32 %v4930, %v4548
        %v4932 = vadd.f32 %v4931, %v4549
        %v4933 = vadd.f32 %v4932, %v4550
        %v4934 = vadd.f32 %v4933, %v4551
        %v4935 = vadd.f32 %v4934, %v4552
        %v4936 = vadd.f32 %v4935, %v4553
        %v4937 = vadd.f32 %v4936, %v4554
        %v4938 = vadd.f32 %v4937, %v4555
        %v4939 = vadd.f32 %v4938, %v4556
        %v4940 = vadd.f32 %v4939, %v4557
        %v4941 = vadd.f32 %v4940, %v4558
        %v4942 = vadd.f32 %v4941, %v4559
        %v4943 = vadd.f32 %v4942, %v4560
        %v4944 = vadd.f32 %v4943, %v4561
        %v4945 = vadd.f32 %v4944, %v4562
        %v4946 = vadd.f32 %v4945, %v4563
        %v4947 = vadd.f32 %v4946, %v4564
        %v4948 = vadd.f32 %v4947, %v4565
        %v4949 = vadd.f32 %v4948, %v4566
        %v4950 = vadd.f32 %v4949, %v4567
        %v4951 = vadd.f32 %v4950, %v4568
        %v4952 = vadd.f32 %v4951, %v4569
        %v4953 = vadd.f32 %v4952, %v4570
        %v4954 = vadd.f32 %v4953, %v4571
        %v4955 = vadd.f32 %v4954, %v4572
        %v4956 = vadd.f32 %v4955, %v4573
        %v4957 = vadd.f32 %v4956, %v4574
        %v4958 = vadd.f32 %v4957, %v4575
        %v4959 = vadd.f32 %v4958, %v4576
        %v4960 = vadd.f32 %v4959, %v4577
        %v4961 = vadd.f32 %v4960, %v4578
        %v4962 = vadd.f32 %v4961, %v4579
        %v4963 = vadd.f32 %v4962, %v4580
        %v4964 = vadd.f32 %v4963, %v4581
        %v4965 = vadd.f32 %v4964, %v4582
        %v4966 = vadd.f32 %v4965, %v4583
        %v4967 = vadd.f32 %v4966, %v4584
        %v4968 = vrot.slane %v4967, 4
        %v4969 = vadd.f32 %v4967, %v4968
        %v4970 = vrot.slane %v4969, 2
        %v4971 = vadd.f32 %v4969, %v4970
        %v4972 = vrot.slane %v4971, 1
        %v4973 = vadd.f32 %v4971, %v4972
        %v4974 = vmul.f32 %v4521, %v4521
        %v4975 = vmul.f32 %v4522, %v4522
        %v4976 = vmul.f32 %v4523, %v4523
        %v4977 = vmul.f32 %v4524, %v4524
        %v4978 = vmul.f32 %v4525, %v4525
        %v4979 = vmul.f32 %v4526, %v4526
        %v4980 = vmul.f32 %v4527, %v4527
        %v4981 = vmul.f32 %v4528, %v4528
        %v4982 = vmul.f32 %v4529, %v4529
        %v4983 = vmul.f32 %v4530, %v4530
        %v4984 = vmul.f32 %v4531, %v4531
        %v4985 = vmul.f32 %v4532, %v4532
        %v4986 = vmul.f32 %v4533, %v4533
        %v4987 = vmul.f32 %v4534, %v4534
        %v4988 = vmul.f32 %v4535, %v4535
        %v4989 = vmul.f32 %v4536, %v4536
        %v4990 = vmul.f32 %v4537, %v4537
        %v4991 = vmul.f32 %v4538, %v4538
        %v4992 = vmul.f32 %v4539, %v4539
        %v4993 = vmul.f32 %v4540, %v4540
        %v4994 = vmul.f32 %v4541, %v4541
        %v4995 = vmul.f32 %v4542, %v4542
        %v4996 = vmul.f32 %v4543, %v4543
        %v4997 = vmul.f32 %v4544, %v4544
        %v4998 = vmul.f32 %v4545, %v4545
        %v4999 = vmul.f32 %v4546, %v4546
        %v5000 = vmul.f32 %v4547, %v4547
        %v5001 = vmul.f32 %v4548, %v4548
        %v5002 = vmul.f32 %v4549, %v4549
        %v5003 = vmul.f32 %v4550, %v4550
        %v5004 = vmul.f32 %v4551, %v4551
        %v5005 = vmul.f32 %v4552, %v4552
        %v5006 = vmul.f32 %v4553, %v4553
        %v5007 = vmul.f32 %v4554, %v4554
        %v5008 = vmul.f32 %v4555, %v4555
        %v5009 = vmul.f32 %v4556, %v4556
        %v5010 = vmul.f32 %v4557, %v4557
        %v5011 = vmul.f32 %v4558, %v4558
        %v5012 = vmul.f32 %v4559, %v4559
        %v5013 = vmul.f32 %v4560, %v4560
        %v5014 = vmul.f32 %v4561, %v4561
        %v5015 = vmul.f32 %v4562, %v4562
        %v5016 = vmul.f32 %v4563, %v4563
        %v5017 = vmul.f32 %v4564, %v4564
        %v5018 = vmul.f32 %v4565, %v4565
        %v5019 = vmul.f32 %v4566, %v4566
        %v5020 = vmul.f32 %v4567, %v4567
        %v5021 = vmul.f32 %v4568, %v4568
        %v5022 = vmul.f32 %v4569, %v4569
        %v5023 = vmul.f32 %v4570, %v4570
        %v5024 = vmul.f32 %v4571, %v4571
        %v5025 = vmul.f32 %v4572, %v4572
        %v5026 = vmul.f32 %v4573, %v4573
        %v5027 = vmul.f32 %v4574, %v4574
        %v5028 = vmul.f32 %v4575, %v4575
        %v5029 = vmul.f32 %v4576, %v4576
        %v5030 = vmul.f32 %v4577, %v4577
        %v5031 = vmul.f32 %v4578, %v4578
        %v5032 = vmul.f32 %v4579, %v4579
        %v5033 = vmul.f32 %v4580, %v4580
        %v5034 = vmul.f32 %v4581, %v4581
        %v5035 = vmul.f32 %v4582, %v4582
        %v5036 = vmul.f32 %v4583, %v4583
        %v5037 = vmul.f32 %v4584, %v4584
        %v5038 = vadd.f32 %v4974, %v4975
        %v5039 = vadd.f32 %v5038, %v4976
        %v5040 = vadd.f32 %v5039, %v4977
        %v5041 = vadd.f32 %v5040, %v4978
        %v5042 = vadd.f32 %v5041, %v4979
        %v5043 = vadd.f32 %v5042, %v4980
        %v5044 = vadd.f32 %v5043, %v4981
        %v5045 = vadd.f32 %v5044, %v4982
        %v5046 = vadd.f32 %v5045, %v4983
        %v5047 = vadd.f32 %v5046, %v4984
        %v5048 = vadd.f32 %v5047, %v4985
        %v5049 = vadd.f32 %v5048, %v4986
        %v5050 = vadd.f32 %v5049, %v4987
        %v5051 = vadd.f32 %v5050, %v4988
        %v5052 = vadd.f32 %v5051, %v4989
        %v5053 = vadd.f32 %v5052, %v4990
        %v5054 = vadd.f32 %v5053, %v4991
        %v5055 = vadd.f32 %v5054, %v4992
        %v5056 = vadd.f32 %v5055, %v4993
        %v5057 = vadd.f32 %v5056, %v4994
        %v5058 = vadd.f32 %v5057, %v4995
        %v5059 = vadd.f32 %v5058, %v4996
        %v5060 = vadd.f32 %v5059, %v4997
        %v5061 = vadd.f32 %v5060, %v4998
        %v5062 = vadd.f32 %v5061, %v4999
        %v5063 = vadd.f32 %v5062, %v5000
        %v5064 = vadd.f32 %v5063, %v5001
        %v5065 = vadd.f32 %v5064, %v5002
        %v5066 = vadd.f32 %v5065, %v5003
        %v5067 = vadd.f32 %v5066, %v5004
        %v5068 = vadd.f32 %v5067, %v5005
        %v5069 = vadd.f32 %v5068, %v5006
        %v5070 = vadd.f32 %v5069, %v5007
        %v5071 = vadd.f32 %v5070, %v5008
        %v5072 = vadd.f32 %v5071, %v5009
        %v5073 = vadd.f32 %v5072, %v5010
        %v5074 = vadd.f32 %v5073, %v5011
        %v5075 = vadd.f32 %v5074, %v5012
        %v5076 = vadd.f32 %v5075, %v5013
        %v5077 = vadd.f32 %v5076, %v5014
        %v5078 = vadd.f32 %v5077, %v5015
        %v5079 = vadd.f32 %v5078, %v5016
        %v5080 = vadd.f32 %v5079, %v5017
        %v5081 = vadd.f32 %v5080, %v5018
        %v5082 = vadd.f32 %v5081, %v5019
        %v5083 = vadd.f32 %v5082, %v5020
        %v5084 = vadd.f32 %v5083, %v5021
        %v5085 = vadd.f32 %v5084, %v5022
        %v5086 = vadd.f32 %v5085, %v5023
        %v5087 = vadd.f32 %v5086, %v5024
        %v5088 = vadd.f32 %v5087, %v5025
        %v5089 = vadd.f32 %v5088, %v5026
        %v5090 = vadd.f32 %v5089, %v5027
        %v5091 = vadd.f32 %v5090, %v5028
        %v5092 = vadd.f32 %v5091, %v5029
        %v5093 = vadd.f32 %v5092, %v5030
        %v5094 = vadd.f32 %v5093, %v5031
        %v5095 = vadd.f32 %v5094, %v5032
        %v5096 = vadd.f32 %v5095, %v5033
        %v5097 = vadd.f32 %v5096, %v5034
        %v5098 = vadd.f32 %v5097, %v5035
        %v5099 = vadd.f32 %v5098, %v5036
        %v5100 = vadd.f32 %v5099, %v5037
        %v5101 = vrot.slane %v5100, 4
        %v5102 = vadd.f32 %v5100, %v5101
        %v5103 = vrot.slane %v5102, 2
        %v5104 = vadd.f32 %v5102, %v5103
        %v5105 = vrot.slane %v5104, 1
        %v5106 = vadd.f32 %v5104, %v5105
        %vm5107 = vcmask 1040384
        %v5108 = vsel %vm5107, %v4973, %v5106
        %5109 = vst [vmem:[%s234] sm:$0x3] %v5108
        %s5110 = sand.u32 %s96, 1
        %s5111 = scalar_lea.sflag [#allocation4], %s5110
        %s5112 = sand.u32 %s96, 1
        %s5113 = smul.addr %s5112, 256
        %s5114 = scalar_lea.vmem [#allocation7], %s5113
        %s5115 = sand.u32 %s124, 1
        %s5116 = scalar_lea.sflag [#allocation9], %s5115
        %s5117 = sand.u32 %s124, 1
        %s5118 = smul.addr %s5117, 2
        %s5119 = scalar_lea.vmem [#allocation8], %s5118
        // Predicated region
        $region37: #{tpu_custom_call.1} parent=27 // pred_check
          %p5120 = pneg %p106
        $region38: #{tpu_custom_call.1} parent=27 // pred_check_branch
          %5122 = sbr.rel (%p5120) target = $region40
        $region39: #{tpu_custom_call.1} parent=27 // pred_region
          %s5124 = ssub.s32 4096, 4096
          %5125 = vsyncadd %s5111, %s5124
          %s5126 = smul.addr %s30, 64
          %s5127 = smul.addr %s29, 128
          %s5128 = sadd.s32 %s5126, %s5127
          %s5129 = smul.addr %s5128, 64
          %s5130 = scalar_lea.hbm %s2, %s5129
          %s5131 = sshll.u32 %s5114, 4
          %s5132 = int_to_ptr.vmem [resolvable:$true] %s5131
          %5137 = dma.vmem_to_hbm [thread:$0]  %s5132, 4096, %s5130, %s5111, 64, 64, 4
        $region40: #{tpu_custom_call.1} parent=27 // pred_fallthru
          _
        // Predicated region
        $region41: #{tpu_custom_call.1} parent=27 // pred_check
          %p5138 = pneg %p134
        $region42: #{tpu_custom_call.1} parent=27 // pred_check_branch
          %5140 = sbr.rel (%p5138) target = $region44
        $region43: #{tpu_custom_call.1} parent=27 // pred_region
          %s5142 = ssub.s32 32, 32
          %5143 = vsyncadd %s5116, %s5142
          %s5144 = smul.addr %s29, 2
          %s5145 = sadd.s32 %s30, %s5144
          %s5146 = smul.addr %s5145, 32
          %s5147 = scalar_lea.hbm %s3, %s5146
          %s5149 = sshll.u32 %s5119, 4
          %s5150 = int_to_ptr.vmem [resolvable:$true] %s5149
          %5152 = dma.vmem_to_hbm [thread:$0]  %s5150, 32, %s5147, %s5116
        $region44: #{tpu_custom_call.1} parent=27 // pred_fallthru
          _
      $region28: #{tpu_custom_call.1} parent=5 // pred_fallthru
        _
      %p5153 = scmp.le.s32.totalorder 2, %s20
      // Predicated region
      $region45: #{tpu_custom_call.1} parent=5 // pred_check
        %p5154 = pneg %p5153
      $region46: #{tpu_custom_call.1} parent=5 // pred_check_branch
        %5156 = sbr.rel (%p5154) target = $region48
      $region47: #{tpu_custom_call.1} parent=5 // pred_region
        %s5157 = ssub.s32 %s20, 2
        // Predicated region
        $region49: #{tpu_custom_call.1} parent=47 // pred_check
          %p5158 = pneg %p112
        $region50: #{tpu_custom_call.1} parent=47 // pred_check_branch
          %5160 = sbr.rel (%p5158) target = $region52
        $region51: #{tpu_custom_call.1} parent=47 // pred_region
          %s5161 = sand.u32 %s97, 1
          %s5162 = scalar_lea.sflag [#allocation4], %s5161
          %s5163 = sand.u32 %s97, 1
          %s5164 = smul.addr %s5163, 256
          %s5165 = scalar_lea.vmem [#allocation7], %s5164
          %5166 = dma.done %s5162, 4096
        $region52: #{tpu_custom_call.1} parent=47 // pred_fallthru
          _
        // Predicated region
        $region53: #{tpu_custom_call.1} parent=47 // pred_check
          %p5167 = pneg %p140
        $region54: #{tpu_custom_call.1} parent=47 // pred_check_branch
          %5169 = sbr.rel (%p5167) target = $region56
        $region55: #{tpu_custom_call.1} parent=47 // pred_region
          %s5170 = sand.u32 %s125, 1
          %s5171 = scalar_lea.sflag [#allocation9], %s5170
          %s5172 = sand.u32 %s125, 1
          %s5173 = smul.addr %s5172, 2
          %s5174 = scalar_lea.vmem [#allocation8], %s5173
          %5175 = dma.done %s5171, 32
        $region56: #{tpu_custom_call.1} parent=47 // pred_fallthru
          _
      $region48: #{tpu_custom_call.1} parent=5 // pred_fallthru
        _
    $region6: #{tpu_custom_call.1} parent=1 // loop_footer
      %s24 = sadd.s32 1, %s20
    $region7: #{tpu_custom_call.1} parent=1 // loop_footer_branch
      %19 = sbr.rel target = $region3
    $region8: #{tpu_custom_call.1} parent=1 // loop_exit
      _
    %5176 = vsyncpa [#allocation3], 1
    %s5177 = scalar_lea.sflag [#allocation3], 1
    %5178 = vsyncpa %s5177, 1
    %5179 = vsyncpa [#allocation6], 1
    %5180 = vsyncpa [#allocation4], 1
    %s5181 = scalar_lea.sflag [#allocation4], 1
    %5182 = vsyncpa %s5181, 1
    %5183 = vsyncpa [#allocation9], 1
    %s5184 = scalar_lea.sflag [#allocation9], 1
    %5185 = vsyncpa %s5184, 1

</llo_original>
